<compile_context>
chip_gen: v7x
topology: tpu7x:2x2x1
jax: 0.10.0
libtpu: 0.0.40
codegen_flags: <defaults>
</compile_context>

<pallas_src>
import functools

import jax
import jax.numpy as jnp
from jax import lax
from jax.experimental import pallas as pl
from jax.experimental.pallas import tpu as pltpu

# -------------------- layer sizes (from the module __init__) --------------------
LAYER_DIMS = [6, 512, 256, 128, 64, 1]   # 5 Linear layers

# trans_b dot: out[m, n] = sum_k lhs[m, k] * rhs[n, k]
_TRANS_B_DIM_NUMBERS = (((1,), (1,)), ((), ()))


# -------------------- Pallas kernel: whole MLP fused ----------------------------
def mlp_kernel(x_ref,
               w1_ref, b1_ref,
               w2_ref, b2_ref,
               w3_ref, b3_ref,
               w4_ref, b4_ref,
               w5_ref, b5_ref,
               o_ref):
    """Full MLP forward for one (block_m, 6) batch tile.

    Matmuls run on the MXU in the weights' dtype (f32 or bf16) with f32
    accumulation; bias add + ReLU stay in f32 on the VPU.  The final layer is
    computed as w5 (1,64) contracted against h (block_m,64) on its last axis,
    producing a lane-dense (1, block_m) row (no masked partial stores).
    """
    cdt = w1_ref.dtype                         # compute dtype (f32 or bf16)
    h = x_ref[...].astype(cdt)

    # hidden layers: Linear + ReLU  (unrolled at trace time)
    for w_ref, b_ref in ((w1_ref, b1_ref), (w2_ref, b2_ref),
                         (w3_ref, b3_ref), (w4_ref, b4_ref)):
        z = jnp.dot(h, w_ref[...], preferred_element_type=jnp.float32) + b_ref[...]
        h = jnp.maximum(z, 0.0).astype(cdt)

    # final layer: (1, 64) x (block_m, 64)^T -> (1, block_m), lane-dense output
    out = lax.dot_general(w5_ref[...], h, _TRANS_B_DIM_NUMBERS,
                          preferred_element_type=jnp.float32) + b5_ref[...]
    o_ref[...] = out.astype(o_ref.dtype)


# -------------------- wrapper -----------------------------------------------------
@functools.partial(jax.jit, static_argnames=("block_m", "compute_dtype"))
def ann_model_forward(x, params, *, block_m=512, compute_dtype=jnp.float32):
    """x: (B, 6) float32.  params: list of (W (in,out), b (1,out)).  Returns (B,).

    block_m: batch tile (multiple of 128; 512-1024 is a good range on
             v5e/v6e/v7x).  Ragged batches are zero-padded and trimmed.
    compute_dtype: jnp.float32 (exact PyTorch semantics) or jnp.bfloat16
             (2x MXU rate / half the VMEM on v6e/v7x; f32 accumulation).
    """
    B, in_dim = x.shape
    assert in_dim == LAYER_DIMS[0]
    assert block_m % 128 == 0, "block_m must be a multiple of 128 (lane-dense out)"

    n_blocks = pl.cdiv(B, block_m)
    b_pad = n_blocks * block_m
    if b_pad != B:
        x = jnp.pad(x, ((0, b_pad - B), (0, 0)))

    # Kernel operand layout: hidden weights (in,out) in compute dtype, biases f32,
    # last weight kept as PyTorch (out=1, in=64) so the kernel emits a lane-dense row.
    flat_params = []
    n_layers = len(params)
    for li, (w, b) in enumerate(params):
        if li == n_layers - 1:
            w_k = w.T.astype(compute_dtype)          # (1, 64)
            b_k = b.astype(jnp.float32)              # (1, 1)
        else:
            w_k = w.astype(compute_dtype)            # (in, out)
            b_k = b.astype(jnp.float32)              # (1, out)
        flat_params.extend([w_k, b_k])

    # x is tiled along the batch axis; every weight/bias is a full (un-tiled)
    # block that stays VMEM-resident for all grid steps.
    x_spec = pl.BlockSpec((block_m, LAYER_DIMS[0]), lambda i: (i, 0))
    param_specs = [pl.BlockSpec(p.shape, lambda i: (0, 0)) for p in flat_params]
    out_spec = pl.BlockSpec((1, block_m), lambda i: (0, i))      # lane-dense row

    flops = 2 * b_pad * sum(LAYER_DIMS[k] * LAYER_DIMS[k + 1]
                            for k in range(len(LAYER_DIMS) - 1))
    bytes_accessed = (x.size * x.dtype.itemsize
                      + b_pad * 4
                      + sum(p.size * p.dtype.itemsize for p in flat_params))

    out = pl.pallas_call(
        mlp_kernel,
        out_shape=jax.ShapeDtypeStruct((1, b_pad), jnp.float32),
        grid_spec=pltpu.PrefetchScalarGridSpec(
            num_scalar_prefetch=0,
            grid=(n_blocks,),
            in_specs=[x_spec] + param_specs,
            out_specs=out_spec,
        ),
        compiler_params=pltpu.CompilerParams(
            dimension_semantics=("parallel",),      # batch tiles shard across cores
            vmem_limit_bytes=32 * 1024 * 1024,      # safe on v5e/v6e/v7x; ~4 MB used
        ),
        cost_estimate=pl.CostEstimate(
            flops=flops, transcendentals=0, bytes_accessed=bytes_accessed),
    )(x, *flat_params)

    # matches PyTorch `x.reshape(-1)` (and trims the batch padding)
    return out.reshape(-1)[:B]


# -------------------- deterministic parameter init --------------------------------
def init_params(key):
    """Deterministic init mimicking PyTorch's default Linear init:
       U(-1/sqrt(fan_in), 1/sqrt(fan_in)) for both weight and bias."""
    params = []
    for li in range(len(LAYER_DIMS) - 1):
        fan_in, fan_out = LAYER_DIMS[li], LAYER_DIMS[li + 1]
        key, kw, kb = jax.random.split(key, 3)
        bound = 1.0 / jnp.sqrt(fan_in)
        # stored as (in, out) so h @ W + b; wrapper re-lays-out the last layer
        w = jax.random.uniform(kw, (fan_in, fan_out), jnp.float32, -bound, bound)
        b = jax.random.uniform(kb, (1, fan_out), jnp.float32, -bound, bound)
        params.append((w, b))
    return params


# -------------------- pure-JAX reference (for sanity check) -----------------------
def reference_forward(x, params):
    h = x
    for (w, b) in params[:-1]:
        h = jnp.maximum(h @ w + b, 0.0)
    w, b = params[-1]
    return (h @ w + b).reshape(-1)


if __name__ == "__main__":
    key = jax.random.PRNGKey(0)
    key, kx = jax.random.split(key)

    B = 1000                    # not a multiple of block_m: exercises pad + trim
    x = jax.random.normal(kx, (B, LAYER_DIMS[0]), jnp.float32)
    params = init_params(key)

    ref = reference_forward(x, params)

    # f32 path: same semantics as the PyTorch module
    out_f32 = jax.block_until_ready(ann_model_forward(x, params, block_m=512))
    assert out_f32.shape == (B,), out_f32.shape
    assert jnp.allclose(out_f32, ref, atol=1e-4, rtol=1e-4), (
        float(jnp.max(jnp.abs(out_f32 - ref))))

    # bf16 matmul path (fast path on v6e/v7x): looser tolerance, f32 accumulation
    out_bf16 = jax.block_until_ready(
        ann_model_forward(x, params, block_m=512, compute_dtype=jnp.bfloat16))
    assert out_bf16.shape == (B,), out_bf16.shape
    assert jnp.allclose(out_bf16, ref, atol=1e-1, rtol=1e-1), (
        float(jnp.max(jnp.abs(out_bf16 - ref))))

    print("KERNEL_OK")
</pallas_src>

<mosaic_0001>
module attributes {stable_mosaic.version = 11 : i64} {
  func.func @mlp_kernel(%arg0: i32, %arg1: memref<512x6xf32, #tpu.memory_space<vmem>>, %arg2: memref<6x512xf32, #tpu.memory_space<vmem>>, %arg3: memref<1x512xf32, #tpu.memory_space<vmem>>, %arg4: memref<512x256xf32, #tpu.memory_space<vmem>>, %arg5: memref<1x256xf32, #tpu.memory_space<vmem>>, %arg6: memref<256x128xf32, #tpu.memory_space<vmem>>, %arg7: memref<1x128xf32, #tpu.memory_space<vmem>>, %arg8: memref<128x64xf32, #tpu.memory_space<vmem>>, %arg9: memref<1x64xf32, #tpu.memory_space<vmem>>, %arg10: memref<1x64xf32, #tpu.memory_space<vmem>>, %arg11: memref<1x1xf32, #tpu.memory_space<vmem>>, %arg12: memref<1x512xf32, #tpu.memory_space<vmem>>) attributes {dimension_semantics = [#tpu.dimension_semantics<parallel>], iteration_bounds = array<i64: 2>, scalar_prefetch = 0 : i64, scratch_operands = 0 : i64, tpu.core_type = #tpu.core_type<tc>, window_params = [{transform_indices = @transform_0, window_bounds = array<i64: 512, 6>}, {pipeline_mode = #tpu.pipeline_mode<synchronous>, transform_indices = @transform_1, window_bounds = array<i64: 6, 512>}, {pipeline_mode = #tpu.pipeline_mode<synchronous>, transform_indices = @transform_2, window_bounds = array<i64: 1, 512>}, {pipeline_mode = #tpu.pipeline_mode<synchronous>, transform_indices = @transform_3, window_bounds = array<i64: 512, 256>}, {pipeline_mode = #tpu.pipeline_mode<synchronous>, transform_indices = @transform_4, window_bounds = array<i64: 1, 256>}, {pipeline_mode = #tpu.pipeline_mode<synchronous>, transform_indices = @transform_5, window_bounds = array<i64: 256, 128>}, {pipeline_mode = #tpu.pipeline_mode<synchronous>, transform_indices = @transform_6, window_bounds = array<i64: 1, 128>}, {pipeline_mode = #tpu.pipeline_mode<synchronous>, transform_indices = @transform_7, window_bounds = array<i64: 128, 64>}, {pipeline_mode = #tpu.pipeline_mode<synchronous>, transform_indices = @transform_8, window_bounds = array<i64: 1, 64>}, {pipeline_mode = #tpu.pipeline_mode<synchronous>, transform_indices = @transform_9, window_bounds = array<i64: 1, 64>}, {pipeline_mode = #tpu.pipeline_mode<synchronous>, transform_indices = @transform_10, window_bounds = array<i64: 1, 1>}, {transform_indices = @transform_11, window_bounds = array<i64: 1, 512>}]} {
    %c0 = arith.constant 0 : index
    %c0_0 = arith.constant 0 : index
    %0 = vector.load %arg1[%c0, %c0_0] : memref<512x6xf32, #tpu.memory_space<vmem>>, vector<512x6xf32>
    %c0_1 = arith.constant 0 : index
    %c0_2 = arith.constant 0 : index
    %1 = vector.load %arg2[%c0_1, %c0_2] : memref<6x512xf32, #tpu.memory_space<vmem>>, vector<6x512xf32>
    %cst = arith.constant dense<0.000000e+00> : vector<512x512xf32>
    %2 = tpu.matmul %0, %1, %cst {dimension_numbers = #tpu.dot_dimension_numbers<[1], [0], [0], [1], [0, 0, 1, 1], [], []>} : vector<512x6xf32>, vector<6x512xf32>, vector<512x512xf32> -> vector<512x512xf32>
    %c0_3 = arith.constant 0 : index
    %c0_4 = arith.constant 0 : index
    %3 = vector.load %arg3[%c0_3, %c0_4] : memref<1x512xf32, #tpu.memory_space<vmem>>, vector<1x512xf32>
    %4 = vector.broadcast %3 : vector<1x512xf32> to vector<512x512xf32>
    %5 = arith.addf %2, %4 : vector<512x512xf32>
    %cst_5 = arith.constant 0.000000e+00 : f32
    %6 = vector.broadcast %cst_5 : f32 to vector<512x512xf32>
    %7 = arith.maximumf %5, %6 : vector<512x512xf32>
    %c0_6 = arith.constant 0 : index
    %c0_7 = arith.constant 0 : index
    %8 = vector.load %arg4[%c0_6, %c0_7] : memref<512x256xf32, #tpu.memory_space<vmem>>, vector<512x256xf32>
    %cst_8 = arith.constant dense<0.000000e+00> : vector<512x256xf32>
    %9 = tpu.matmul %7, %8, %cst_8 {dimension_numbers = #tpu.dot_dimension_numbers<[1], [0], [0], [1], [0, 0, 1, 1], [], []>} : vector<512x512xf32>, vector<512x256xf32>, vector<512x256xf32> -> vector<512x256xf32>
    %c0_9 = arith.constant 0 : index
    %c0_10 = arith.constant 0 : index
    %10 = vector.load %arg5[%c0_9, %c0_10] : memref<1x256xf32, #tpu.memory_space<vmem>>, vector<1x256xf32>
    %11 = vector.broadcast %10 : vector<1x256xf32> to vector<512x256xf32>
    %12 = arith.addf %9, %11 : vector<512x256xf32>
    %cst_11 = arith.constant 0.000000e+00 : f32
    %13 = vector.broadcast %cst_11 : f32 to vector<512x256xf32>
    %14 = arith.maximumf %12, %13 : vector<512x256xf32>
    %c0_12 = arith.constant 0 : index
    %c0_13 = arith.constant 0 : index
    %15 = vector.load %arg6[%c0_12, %c0_13] : memref<256x128xf32, #tpu.memory_space<vmem>>, vector<256x128xf32>
    %cst_14 = arith.constant dense<0.000000e+00> : vector<512x128xf32>
    %16 = tpu.matmul %14, %15, %cst_14 {dimension_numbers = #tpu.dot_dimension_numbers<[1], [0], [0], [1], [0, 0, 1, 1], [], []>} : vector<512x256xf32>, vector<256x128xf32>, vector<512x128xf32> -> vector<512x128xf32>
    %c0_15 = arith.constant 0 : index
    %c0_16 = arith.constant 0 : index
    %17 = vector.load %arg7[%c0_15, %c0_16] : memref<1x128xf32, #tpu.memory_space<vmem>>, vector<1x128xf32>
    %18 = vector.broadcast %17 : vector<1x128xf32> to vector<512x128xf32>
    %19 = arith.addf %16, %18 : vector<512x128xf32>
    %cst_17 = arith.constant 0.000000e+00 : f32
    %20 = vector.broadcast %cst_17 : f32 to vector<512x128xf32>
    %21 = arith.maximumf %19, %20 : vector<512x128xf32>
    %c0_18 = arith.constant 0 : index
    %c0_19 = arith.constant 0 : index
    %22 = vector.load %arg8[%c0_18, %c0_19] : memref<128x64xf32, #tpu.memory_space<vmem>>, vector<128x64xf32>
    %cst_20 = arith.constant dense<0.000000e+00> : vector<512x64xf32>
    %23 = tpu.matmul %21, %22, %cst_20 {dimension_numbers = #tpu.dot_dimension_numbers<[1], [0], [0], [1], [0, 0, 1, 1], [], []>} : vector<512x128xf32>, vector<128x64xf32>, vector<512x64xf32> -> vector<512x64xf32>
    %c0_21 = arith.constant 0 : index
    %c0_22 = arith.constant 0 : index
    %24 = vector.load %arg9[%c0_21, %c0_22] : memref<1x64xf32, #tpu.memory_space<vmem>>, vector<1x64xf32>
    %25 = vector.broadcast %24 : vector<1x64xf32> to vector<512x64xf32>
    %26 = arith.addf %23, %25 : vector<512x64xf32>
    %cst_23 = arith.constant 0.000000e+00 : f32
    %27 = vector.broadcast %cst_23 : f32 to vector<512x64xf32>
    %28 = arith.maximumf %26, %27 : vector<512x64xf32>
    %c0_24 = arith.constant 0 : index
    %c0_25 = arith.constant 0 : index
    %29 = vector.load %arg10[%c0_24, %c0_25] : memref<1x64xf32, #tpu.memory_space<vmem>>, vector<1x64xf32>
    %cst_26 = arith.constant dense<0.000000e+00> : vector<1x512xf32>
    %30 = tpu.matmul %29, %28, %cst_26 {dimension_numbers = #tpu.dot_dimension_numbers<[1], [1], [0], [0], [0, 0, 1, 0], [], []>} : vector<1x64xf32>, vector<512x64xf32>, vector<1x512xf32> -> vector<1x512xf32>
    %c0_27 = arith.constant 0 : index
    %c0_28 = arith.constant 0 : index
    %31 = vector.load %arg11[%c0_27, %c0_28] : memref<1x1xf32, #tpu.memory_space<vmem>>, vector<1x1xf32>
    %32 = vector.broadcast %31 : vector<1x1xf32> to vector<1x512xf32>
    %33 = arith.addf %30, %32 : vector<1x512xf32>
    %c0_29 = arith.constant 0 : index
    %c0_30 = arith.constant 0 : index
    %34 = vector.load %arg12[%c0_29, %c0_30] : memref<1x512xf32, #tpu.memory_space<vmem>>, vector<1x512xf32>
    tpu.vector_store %arg12[%c0_29, %c0_30], %33 {strides = array<i32>} : memref<1x512xf32, #tpu.memory_space<vmem>>, vector<1x512xf32>,
    return
  }
  func.func @transform_0(%arg0: i32) -> (i32, i32) {
    %c0_i32 = arith.constant 0 : i32
    %c0_i32_0 = arith.constant 0 : i32
    return %arg0, %c0_i32 : i32, i32
  }
  func.func @transform_1(%arg0: i32) -> (i32, i32) {
    %c0_i32 = arith.constant 0 : i32
    %c0_i32_0 = arith.constant 0 : i32
    %c0_i32_1 = arith.constant 0 : i32
    return %c0_i32, %c0_i32_0 : i32, i32
  }
  func.func @transform_2(%arg0: i32) -> (i32, i32) {
    %c0_i32 = arith.constant 0 : i32
    %c0_i32_0 = arith.constant 0 : i32
    %c0_i32_1 = arith.constant 0 : i32
    return %c0_i32, %c0_i32_0 : i32, i32
  }
  func.func @transform_3(%arg0: i32) -> (i32, i32) {
    %c0_i32 = arith.constant 0 : i32
    %c0_i32_0 = arith.constant 0 : i32
    %c0_i32_1 = arith.constant 0 : i32
    return %c0_i32, %c0_i32_0 : i32, i32
  }
  func.func @transform_4(%arg0: i32) -> (i32, i32) {
    %c0_i32 = arith.constant 0 : i32
    %c0_i32_0 = arith.constant 0 : i32
    %c0_i32_1 = arith.constant 0 : i32
    return %c0_i32, %c0_i32_0 : i32, i32
  }
  func.func @transform_5(%arg0: i32) -> (i32, i32) {
    %c0_i32 = arith.constant 0 : i32
    %c0_i32_0 = arith.constant 0 : i32
    %c0_i32_1 = arith.constant 0 : i32
    return %c0_i32, %c0_i32_0 : i32, i32
  }
  func.func @transform_6(%arg0: i32) -> (i32, i32) {
    %c0_i32 = arith.constant 0 : i32
    %c0_i32_0 = arith.constant 0 : i32
    %c0_i32_1 = arith.constant 0 : i32
    return %c0_i32, %c0_i32_0 : i32, i32
  }
  func.func @transform_7(%arg0: i32) -> (i32, i32) {
    %c0_i32 = arith.constant 0 : i32
    %c0_i32_0 = arith.constant 0 : i32
    %c0_i32_1 = arith.constant 0 : i32
    return %c0_i32, %c0_i32_0 : i32, i32
  }
  func.func @transform_8(%arg0: i32) -> (i32, i32) {
    %c0_i32 = arith.constant 0 : i32
    %c0_i32_0 = arith.constant 0 : i32
    %c0_i32_1 = arith.constant 0 : i32
    return %c0_i32, %c0_i32_0 : i32, i32
  }
  func.func @transform_9(%arg0: i32) -> (i32, i32) {
    %c0_i32 = arith.constant 0 : i32
    %c0_i32_0 = arith.constant 0 : i32
    %c0_i32_1 = arith.constant 0 : i32
    return %c0_i32, %c0_i32_0 : i32, i32
  }
  func.func @transform_10(%arg0: i32) -> (i32, i32) {
    %c0_i32 = arith.constant 0 : i32
    %c0_i32_0 = arith.constant 0 : i32
    %c0_i32_1 = arith.constant 0 : i32
    return %c0_i32, %c0_i32_0 : i32, i32
  }
  func.func @transform_11(%arg0: i32) -> (i32, i32) {
    %c0_i32 = arith.constant 0 : i32
    %c0_i32_0 = arith.constant 0 : i32
    return %c0_i32, %arg0 : i32, i32
  }
}

</mosaic_0001>

<llo_original>
// kernel: ann_model_forward.1
$region0: #{ann_model_forward.1}
  #allocation0 [shape = 'u32[]', space=smem, size = 0x4, offset = 0x4, fixed_abs, tag = 'smem constant byte address 0x4 - core index']
  #allocation1 [shape = 'u32[144,128]{1,0:T(1,128)}', space=vmem, size = 0x12000, scoped, tag = 'internal scratch']
  #allocation2 [shape = 'f32[1,1]{1,0:T(1,128)S(1)}', space=vmem, size = 0x200, scoped, tag = 'scoped memory for ann_model_forward.1']
  %s0 = inlined_call_operand.vmem [shape: f32[1024,6], index: 0, kind: input, shape index: {}]
  %s1 = inlined_call_operand.vmem [shape: f32[6,512], index: 1, kind: input, shape index: {}]
  %s2 = inlined_call_operand.vmem [shape: f32[1,512], index: 2, kind: input, shape index: {}]
  %s3 = inlined_call_operand.vmem [shape: f32[512,256], index: 3, kind: input, shape index: {}]
  %s4 = inlined_call_operand.vmem [shape: f32[1,256], index: 4, kind: input, shape index: {}]
  %s5 = inlined_call_operand.vmem [shape: f32[256,128], index: 5, kind: input, shape index: {}]
  %s6 = inlined_call_operand.vmem [shape: f32[1,128], index: 6, kind: input, shape index: {}]
  %s7 = inlined_call_operand.vmem [shape: f32[128,64], index: 7, kind: input, shape index: {}]
  %s8 = inlined_call_operand.vmem [shape: f32[1,64], index: 8, kind: input, shape index: {}]
  %s9 = inlined_call_operand.vmem [shape: f32[1,64], index: 9, kind: input, shape index: {}]
  %s10 = inlined_call_operand.<no memory space> [shape: f32[1,1], index: 10, kind: input, shape index: {}]
  %s11 = inlined_call_operand.hbm [shape: f32[1,1024], index: 11, kind: output, shape index: {}]
  %s12 = sld [smem:[#allocation0]]
  $region77: #{ann_model_forward.1} parent=0
    _
  %s14 = ssub.s32 1, %s12
  %s15 = scalar_select 0, %s14, %s12
  %v16 = vstv %s10
  %17 = vst [vmem:[#allocation2] sm:$0x1] %v16
  $region1: #{ann_model_forward.1} parent=0
    #allocation3 [shape = 'u8[4096]{0}', space=vmem, size = 0x1000, scoped, tag = 'output window, operand 0']
    #allocation4 [shape = 's32[2]{0}', space=sflag, size = 0x8, scoped, tag = 'scoped memory for ann_model_forward.1']
    %18 = vsyncpa [#allocation4], 0
    %s19 = scalar_lea.sflag [#allocation4], 1
    %20 = vsyncpa %s19, 0
    loop: start=0, step=1, limit=4
    $region2: #{ann_model_forward.1} parent=1 // loop_pre_header
      _
    $region3: #{ann_model_forward.1} parent=1 // loop_header
      %s22 = sphi 0, %s26
      %p23 = scmp.ge.s32.totalorder %s22, 4
      %s32 = sphi 0, %s34
      %s35 = sphi 0, %s32
      %s36 = sphi 0, %s35
      %s52 = sphi 0, %s36
      %s56 = sphi 0, %s56
      %s58 = sphi 0, %s56
      %s59 = sphi 0, %s58
      %s73 = sphi 0, %s59
      %s77 = sphi 0, %s77
      %s79 = sphi 0, %s77
      %s80 = sphi 0, %s79
      %s94 = sphi 0, %s80
      %s98 = sphi 0, %s98
      %s100 = sphi 0, %s98
      %s101 = sphi 0, %s100
      %s115 = sphi 0, %s101
      %s119 = sphi 0, %s119
      %s121 = sphi 0, %s119
      %s122 = sphi 0, %s121
      %s136 = sphi 0, %s122
      %s140 = sphi 0, %s140
      %s142 = sphi 0, %s140
      %s143 = sphi 0, %s142
      %s157 = sphi 0, %s143
      %s161 = sphi 0, %s161
      %s163 = sphi 0, %s161
      %s164 = sphi 0, %s163
      %s178 = sphi 0, %s164
      %s182 = sphi 0, %s182
      %s184 = sphi 0, %s182
      %s185 = sphi 0, %s184
      %s199 = sphi 0, %s185
      %s203 = sphi 0, %s203
      %s205 = sphi 0, %s203
      %s206 = sphi 0, %s205
      %s220 = sphi 0, %s206
      %s224 = sphi 0, %s224
      %s226 = sphi 0, %s224
      %s227 = sphi 0, %s226
      %s241 = sphi 0, %s227
      %s245 = sphi 0, %s245
      %s247 = sphi 0, %s245
      %s248 = sphi 0, %s247
      %s262 = sphi 0, %s248
      %s268 = sphi 0, %s270
      %s271 = sphi 0, %s268
      %s272 = sphi 0, %s271
      %s288 = sphi 0, %s272
    $region4: #{ann_model_forward.1} parent=1 // loop_header_branch
      %25 = sbr.rel (%p23) target = $region8
    $region5: #{ann_model_forward.1} parent=1 // loop_body
      %s27 = ssub.s32 %s22, 1
      %s28 = ssub.s32 %s22, 2
      %s29 = sadd.s32 %s22, 1
      %s30 = ssub.s32 %s22, %s29
      %p31 = scmp.eq.s32.totalorder %s30, 0
      %s33 = sadd.s32 %s32, 1
      %s34 = scalar_select %p31, %s32, %s33
      %p37 = pneg %p31
      %p38 = scmp.eq.s32.totalorder %s22, 1
      %p39 = por %p37, %p38
      %p40 = scmp.ne.s32.totalorder %s32, %s35
      %p41 = scmp.eq.s32.totalorder %s22, 0
      %p42 = por %p40, %p41
      %p43 = scmp.ne.s32.totalorder %s32, %s35
      %p44 = scmp.eq.s32.totalorder %s27, 1
      %p45 = por %p43, %p44
      %p46 = scmp.ne.s32.totalorder %s35, %s36
      %p47 = scmp.eq.s32.totalorder %s27, 0
      %p48 = por %p46, %p47
      %p49 = scmp.ne.s32.totalorder %s35, %s36
      %p50 = scmp.eq.s32.totalorder %s28, 1
      %p51 = por %p49, %p50
      %p53 = scmp.ne.s32.totalorder %s36, %s52
      %p54 = scmp.eq.s32.totalorder %s28, 0
      %p55 = por %p53, %p54
      %s57 = sadd.s32 %s56, 1
      %p60 = scmp.eq.s32.totalorder %s22, 1
      %p61 = scmp.ne.s32.totalorder %s56, %s58
      %p62 = scmp.eq.s32.totalorder %s22, 0
      %p63 = por %p61, %p62
      %p64 = scmp.ne.s32.totalorder %s56, %s58
      %p65 = scmp.eq.s32.totalorder %s27, 1
      %p66 = por %p64, %p65
      %p67 = scmp.ne.s32.totalorder %s58, %s59
      %p68 = scmp.eq.s32.totalorder %s27, 0
      %p69 = por %p67, %p68
      %p70 = scmp.ne.s32.totalorder %s58, %s59
      %p71 = scmp.eq.s32.totalorder %s28, 1
      %p72 = por %p70, %p71
      %p74 = scmp.ne.s32.totalorder %s59, %s73
      %p75 = scmp.eq.s32.totalorder %s28, 0
      %p76 = por %p74, %p75
      %s78 = sadd.s32 %s77, 1
      %p81 = scmp.eq.s32.totalorder %s22, 1
      %p82 = scmp.ne.s32.totalorder %s77, %s79
      %p83 = scmp.eq.s32.totalorder %s22, 0
      %p84 = por %p82, %p83
      %p85 = scmp.ne.s32.totalorder %s77, %s79
      %p86 = scmp.eq.s32.totalorder %s27, 1
      %p87 = por %p85, %p86
      %p88 = scmp.ne.s32.totalorder %s79, %s80
      %p89 = scmp.eq.s32.totalorder %s27, 0
      %p90 = por %p88, %p89
      %p91 = scmp.ne.s32.totalorder %s79, %s80
      %p92 = scmp.eq.s32.totalorder %s28, 1
      %p93 = por %p91, %p92
      %p95 = scmp.ne.s32.totalorder %s80, %s94
      %p96 = scmp.eq.s32.totalorder %s28, 0
      %p97 = por %p95, %p96
      %s99 = sadd.s32 %s98, 1
      %p102 = scmp.eq.s32.totalorder %s22, 1
      %p103 = scmp.ne.s32.totalorder %s98, %s100
      %p104 = scmp.eq.s32.totalorder %s22, 0
      %p105 = por %p103, %p104
      %p106 = scmp.ne.s32.totalorder %s98, %s100
      %p107 = scmp.eq.s32.totalorder %s27, 1
      %p108 = por %p106, %p107
      %p109 = scmp.ne.s32.totalorder %s100, %s101
      %p110 = scmp.eq.s32.totalorder %s27, 0
      %p111 = por %p109, %p110
      %p112 = scmp.ne.s32.totalorder %s100, %s101
      %p113 = scmp.eq.s32.totalorder %s28, 1
      %p114 = por %p112, %p113
      %p116 = scmp.ne.s32.totalorder %s101, %s115
      %p117 = scmp.eq.s32.totalorder %s28, 0
      %p118 = por %p116, %p117
      %s120 = sadd.s32 %s119, 1
      %p123 = scmp.eq.s32.totalorder %s22, 1
      %p124 = scmp.ne.s32.totalorder %s119, %s121
      %p125 = scmp.eq.s32.totalorder %s22, 0
      %p126 = por %p124, %p125
      %p127 = scmp.ne.s32.totalorder %s119, %s121
      %p128 = scmp.eq.s32.totalorder %s27, 1
      %p129 = por %p127, %p128
      %p130 = scmp.ne.s32.totalorder %s121, %s122
      %p131 = scmp.eq.s32.totalorder %s27, 0
      %p132 = por %p130, %p131
      %p133 = scmp.ne.s32.totalorder %s121, %s122
      %p134 = scmp.eq.s32.totalorder %s28, 1
      %p135 = por %p133, %p134
      %p137 = scmp.ne.s32.totalorder %s122, %s136
      %p138 = scmp.eq.s32.totalorder %s28, 0
      %p139 = por %p137, %p138
      %s141 = sadd.s32 %s140, 1
      %p144 = scmp.eq.s32.totalorder %s22, 1
      %p145 = scmp.ne.s32.totalorder %s140, %s142
      %p146 = scmp.eq.s32.totalorder %s22, 0
      %p147 = por %p145, %p146
      %p148 = scmp.ne.s32.totalorder %s140, %s142
      %p149 = scmp.eq.s32.totalorder %s27, 1
      %p150 = por %p148, %p149
      %p151 = scmp.ne.s32.totalorder %s142, %s143
      %p152 = scmp.eq.s32.totalorder %s27, 0
      %p153 = por %p151, %p152
      %p154 = scmp.ne.s32.totalorder %s142, %s143
      %p155 = scmp.eq.s32.totalorder %s28, 1
      %p156 = por %p154, %p155
      %p158 = scmp.ne.s32.totalorder %s143, %s157
      %p159 = scmp.eq.s32.totalorder %s28, 0
      %p160 = por %p158, %p159
      %s162 = sadd.s32 %s161, 1
      %p165 = scmp.eq.s32.totalorder %s22, 1
      %p166 = scmp.ne.s32.totalorder %s161, %s163
      %p167 = scmp.eq.s32.totalorder %s22, 0
      %p168 = por %p166, %p167
      %p169 = scmp.ne.s32.totalorder %s161, %s163
      %p170 = scmp.eq.s32.totalorder %s27, 1
      %p171 = por %p169, %p170
      %p172 = scmp.ne.s32.totalorder %s163, %s164
      %p173 = scmp.eq.s32.totalorder %s27, 0
      %p174 = por %p172, %p173
      %p175 = scmp.ne.s32.totalorder %s163, %s164
      %p176 = scmp.eq.s32.totalorder %s28, 1
      %p177 = por %p175, %p176
      %p179 = scmp.ne.s32.totalorder %s164, %s178
      %p180 = scmp.eq.s32.totalorder %s28, 0
      %p181 = por %p179, %p180
      %s183 = sadd.s32 %s182, 1
      %p186 = scmp.eq.s32.totalorder %s22, 1
      %p187 = scmp.ne.s32.totalorder %s182, %s184
      %p188 = scmp.eq.s32.totalorder %s22, 0
      %p189 = por %p187, %p188
      %p190 = scmp.ne.s32.totalorder %s182, %s184
      %p191 = scmp.eq.s32.totalorder %s27, 1
      %p192 = por %p190, %p191
      %p193 = scmp.ne.s32.totalorder %s184, %s185
      %p194 = scmp.eq.s32.totalorder %s27, 0
      %p195 = por %p193, %p194
      %p196 = scmp.ne.s32.totalorder %s184, %s185
      %p197 = scmp.eq.s32.totalorder %s28, 1
      %p198 = por %p196, %p197
      %p200 = scmp.ne.s32.totalorder %s185, %s199
      %p201 = scmp.eq.s32.totalorder %s28, 0
      %p202 = por %p200, %p201
      %s204 = sadd.s32 %s203, 1
      %p207 = scmp.eq.s32.totalorder %s22, 1
      %p208 = scmp.ne.s32.totalorder %s203, %s205
      %p209 = scmp.eq.s32.totalorder %s22, 0
      %p210 = por %p208, %p209
      %p211 = scmp.ne.s32.totalorder %s203, %s205
      %p212 = scmp.eq.s32.totalorder %s27, 1
      %p213 = por %p211, %p212
      %p214 = scmp.ne.s32.totalorder %s205, %s206
      %p215 = scmp.eq.s32.totalorder %s27, 0
      %p216 = por %p214, %p215
      %p217 = scmp.ne.s32.totalorder %s205, %s206
      %p218 = scmp.eq.s32.totalorder %s28, 1
      %p219 = por %p217, %p218
      %p221 = scmp.ne.s32.totalorder %s206, %s220
      %p222 = scmp.eq.s32.totalorder %s28, 0
      %p223 = por %p221, %p222
      %s225 = sadd.s32 %s224, 1
      %p228 = scmp.eq.s32.totalorder %s22, 1
      %p229 = scmp.ne.s32.totalorder %s224, %s226
      %p230 = scmp.eq.s32.totalorder %s22, 0
      %p231 = por %p229, %p230
      %p232 = scmp.ne.s32.totalorder %s224, %s226
      %p233 = scmp.eq.s32.totalorder %s27, 1
      %p234 = por %p232, %p233
      %p235 = scmp.ne.s32.totalorder %s226, %s227
      %p236 = scmp.eq.s32.totalorder %s27, 0
      %p237 = por %p235, %p236
      %p238 = scmp.ne.s32.totalorder %s226, %s227
      %p239 = scmp.eq.s32.totalorder %s28, 1
      %p240 = por %p238, %p239
      %p242 = scmp.ne.s32.totalorder %s227, %s241
      %p243 = scmp.eq.s32.totalorder %s28, 0
      %p244 = por %p242, %p243
      %s246 = sadd.s32 %s245, 1
      %p249 = scmp.eq.s32.totalorder %s22, 1
      %p250 = scmp.ne.s32.totalorder %s245, %s247
      %p251 = scmp.eq.s32.totalorder %s22, 0
      %p252 = por %p250, %p251
      %p253 = scmp.ne.s32.totalorder %s245, %s247
      %p254 = scmp.eq.s32.totalorder %s27, 1
      %p255 = por %p253, %p254
      %p256 = scmp.ne.s32.totalorder %s247, %s248
      %p257 = scmp.eq.s32.totalorder %s27, 0
      %p258 = por %p256, %p257
      %p259 = scmp.ne.s32.totalorder %s247, %s248
      %p260 = scmp.eq.s32.totalorder %s28, 1
      %p261 = por %p259, %p260
      %p263 = scmp.ne.s32.totalorder %s248, %s262
      %p264 = scmp.eq.s32.totalorder %s28, 0
      %p265 = por %p263, %p264
      %s266 = ssub.s32 %s22, %s29
      %p267 = scmp.eq.s32.totalorder %s266, 0
      %s269 = sadd.s32 %s268, 1
      %s270 = scalar_select %p267, %s268, %s269
      %p273 = pneg %p267
      %p274 = scmp.eq.s32.totalorder %s22, 1
      %p275 = por %p273, %p274
      %p276 = scmp.ne.s32.totalorder %s268, %s271
      %p277 = scmp.eq.s32.totalorder %s22, 0
      %p278 = por %p276, %p277
      %p279 = scmp.ne.s32.totalorder %s268, %s271
      %p280 = scmp.eq.s32.totalorder %s27, 1
      %p281 = por %p279, %p280
      %p282 = scmp.ne.s32.totalorder %s271, %s272
      %p283 = scmp.eq.s32.totalorder %s27, 0
      %p284 = por %p282, %p283
      %p285 = scmp.ne.s32.totalorder %s271, %s272
      %p286 = scmp.eq.s32.totalorder %s28, 1
      %p287 = por %p285, %p286
      %p289 = scmp.ne.s32.totalorder %s272, %s288
      %p290 = scmp.eq.s32.totalorder %s28, 0
      %p291 = por %p289, %p290
      %p292 = scmp.le.s32.totalorder 1, %s22
      %p293 = scmp.lt.s32.totalorder %s22, 3
      %p294 = pnand %p292, %p293
      %p295 = pneg %p294
      // Predicated region
      $region9: #{ann_model_forward.1} parent=5 // pred_check
        _
      $region10: #{ann_model_forward.1} parent=5 // pred_check_branch
        %297 = sbr.rel (%p294) target = $region12
      $region11: #{ann_model_forward.1} parent=5 // pred_region
        %s298 = ssub.s32 %s22, 1
        // Predicated region
        $region13: #{ann_model_forward.1} parent=11 // pred_check
          %p299 = pneg %p69
        $region14: #{ann_model_forward.1} parent=11 // pred_check_branch
          %301 = sbr.rel (%p299) target = $region16
        $region15: #{ann_model_forward.1} parent=11 // pred_region
          _
        $region16: #{ann_model_forward.1} parent=11 // pred_fallthru
          _
        // Predicated region
        $region17: #{ann_model_forward.1} parent=11 // pred_check
          %p302 = pneg %p90
        $region18: #{ann_model_forward.1} parent=11 // pred_check_branch
          %304 = sbr.rel (%p302) target = $region20
        $region19: #{ann_model_forward.1} parent=11 // pred_region
          _
        $region20: #{ann_model_forward.1} parent=11 // pred_fallthru
          _
        // Predicated region
        $region21: #{ann_model_forward.1} parent=11 // pred_check
          %p305 = pneg %p111
        $region22: #{ann_model_forward.1} parent=11 // pred_check_branch
          %307 = sbr.rel (%p305) target = $region24
        $region23: #{ann_model_forward.1} parent=11 // pred_region
          _
        $region24: #{ann_model_forward.1} parent=11 // pred_fallthru
          _
        // Predicated region
        $region25: #{ann_model_forward.1} parent=11 // pred_check
          %p308 = pneg %p132
        $region26: #{ann_model_forward.1} parent=11 // pred_check_branch
          %310 = sbr.rel (%p308) target = $region28
        $region27: #{ann_model_forward.1} parent=11 // pred_region
          _
        $region28: #{ann_model_forward.1} parent=11 // pred_fallthru
          _
        // Predicated region
        $region29: #{ann_model_forward.1} parent=11 // pred_check
          %p311 = pneg %p153
        $region30: #{ann_model_forward.1} parent=11 // pred_check_branch
          %313 = sbr.rel (%p311) target = $region32
        $region31: #{ann_model_forward.1} parent=11 // pred_region
          _
        $region32: #{ann_model_forward.1} parent=11 // pred_fallthru
          _
        // Predicated region
        $region33: #{ann_model_forward.1} parent=11 // pred_check
          %p314 = pneg %p174
        $region34: #{ann_model_forward.1} parent=11 // pred_check_branch
          %316 = sbr.rel (%p314) target = $region36
        $region35: #{ann_model_forward.1} parent=11 // pred_region
          _
        $region36: #{ann_model_forward.1} parent=11 // pred_fallthru
          _
        // Predicated region
        $region37: #{ann_model_forward.1} parent=11 // pred_check
          %p317 = pneg %p195
        $region38: #{ann_model_forward.1} parent=11 // pred_check_branch
          %319 = sbr.rel (%p317) target = $region40
        $region39: #{ann_model_forward.1} parent=11 // pred_region
          _
        $region40: #{ann_model_forward.1} parent=11 // pred_fallthru
          _
        // Predicated region
        $region41: #{ann_model_forward.1} parent=11 // pred_check
          %p320 = pneg %p216
        $region42: #{ann_model_forward.1} parent=11 // pred_check_branch
          %322 = sbr.rel (%p320) target = $region44
        $region43: #{ann_model_forward.1} parent=11 // pred_region
          _
        $region44: #{ann_model_forward.1} parent=11 // pred_fallthru
          _
        // Predicated region
        $region45: #{ann_model_forward.1} parent=11 // pred_check
          %p323 = pneg %p237
        $region46: #{ann_model_forward.1} parent=11 // pred_check_branch
          %325 = sbr.rel (%p323) target = $region48
        $region47: #{ann_model_forward.1} parent=11 // pred_region
          _
        $region48: #{ann_model_forward.1} parent=11 // pred_fallthru
          _
        // Predicated region
        $region49: #{ann_model_forward.1} parent=11 // pred_check
          %p326 = pneg %p258
        $region50: #{ann_model_forward.1} parent=11 // pred_check_branch
          %328 = sbr.rel (%p326) target = $region52
        $region51: #{ann_model_forward.1} parent=11 // pred_region
          _
        $region52: #{ann_model_forward.1} parent=11 // pred_fallthru
          _
      $region12: #{ann_model_forward.1} parent=5 // pred_fallthru
        _
      %p329 = scmp.lt.s32.totalorder %s22, 2
      // Predicated region
      $region53: #{ann_model_forward.1} parent=5 // pred_check
        %p330 = pneg %p329
      $region54: #{ann_model_forward.1} parent=5 // pred_check_branch
        %332 = sbr.rel (%p330) target = $region56
      $region55: #{ann_model_forward.1} parent=5 // pred_region
        // Predicated region
        $region57: #{ann_model_forward.1} parent=55 // pred_check
          %p333 = pneg %p42
        $region58: #{ann_model_forward.1} parent=55 // pred_check_branch
          %335 = sbr.rel (%p333) target = $region60
        $region59: #{ann_model_forward.1} parent=55 // pred_region
          %s336 = smul.u32 64, %s22
          %p337 = scmp.lt.s32.totalorder %s336, 127
          %s338 = scalar_select %p337, %s336, 127
          %s339 = smul.addr %s338, 8
          %s340 = scalar_lea.vmem %s0, %s339
          %s341 = smul.u32 64, %s22
        $region60: #{ann_model_forward.1} parent=55 // pred_fallthru
          _
      $region56: #{ann_model_forward.1} parent=5 // pred_fallthru
        _
      %p342 = scmp.le.s32.totalorder 1, %s22
      %p343 = scmp.lt.s32.totalorder %s22, 3
      %p344 = pnand %p342, %p343
      %p345 = pneg %p344
      // Predicated region
      $region61: #{ann_model_forward.1} parent=5 // pred_check
        _
      $region62: #{ann_model_forward.1} parent=5 // pred_check_branch
        %347 = sbr.rel (%p344) target = $region64
      $region63: #{ann_model_forward.1} parent=5 // pred_region
        %s348 = ssub.s32 %s22, 1
        %s349 = smul.u32 64, %s27
        %p350 = scmp.lt.s32.totalorder %s349, 127
        %s351 = scalar_select %p350, %s349, 127
        %s352 = smul.addr %s351, 8
        %s353 = scalar_lea.vmem %s0, %s352
        %p354 = pneg %p48
        %p355 = pneg %p45
        %p356 = pneg %p69
        %p357 = pneg %p66
        %p358 = pneg %p90
        %p359 = pneg %p87
        %p360 = pneg %p111
        %p361 = pneg %p108
        %p362 = pneg %p132
        %p363 = pneg %p129
        %p364 = pneg %p153
        %p365 = pneg %p150
        %p366 = pneg %p174
        %p367 = pneg %p171
        %p368 = pneg %p195
        %p369 = pneg %p192
        %p370 = pneg %p216
        %p371 = pneg %p213
        %p372 = pneg %p237
        %p373 = pneg %p234
        %p374 = pneg %p258
        %p375 = pneg %p255
        %p376 = pneg %p284
        %p377 = pneg %p281
        %s378 = sand.u32 %s271, 1
        %s379 = scalar_lea.sflag [#allocation4], %s378
        %s380 = sand.u32 %s271, 1
        %s381 = smul.addr %s380, 4
        %s382 = scalar_lea.vmem [#allocation3], %s381
        %s383 = smul.u32 64, %s27
        %p384 = scmp.lt.s32.totalorder %s383, 127
        %s385 = scalar_select %p384, %s383, 127
        %s386 = smul.addr %s385, 8
        %s387 = scalar_lea.vmem %s0, %s386
        %s388 = smul.u32 64, %s27
        %s389 = smul.u32 4, %s27
        %v390 = vld [vmem:[%s387] sm:$0xff]
        %v391 = vld [vmem:[%s387 + $0x8] sm:$0xff]
        %v392 = vld [vmem:[%s387 + $0x10] sm:$0xff]
        %v393 = vld [vmem:[%s387 + $0x18] sm:$0xff]
        %v394 = vld [vmem:[%s387 + $0x20] sm:$0xff]
        %v395 = vld [vmem:[%s387 + $0x28] sm:$0xff]
        %v396 = vld [vmem:[%s387 + $0x30] sm:$0xff]
        %v397 = vld [vmem:[%s387 + $0x38] sm:$0xff]
        %v398 = vld [vmem:[%s387 + $0x40] sm:$0xff]
        %v399 = vld [vmem:[%s387 + $0x48] sm:$0xff]
        %v400 = vld [vmem:[%s387 + $0x50] sm:$0xff]
        %v401 = vld [vmem:[%s387 + $0x58] sm:$0xff]
        %v402 = vld [vmem:[%s387 + $0x60] sm:$0xff]
        %v403 = vld [vmem:[%s387 + $0x68] sm:$0xff]
        %v404 = vld [vmem:[%s387 + $0x70] sm:$0xff]
        %v405 = vld [vmem:[%s387 + $0x78] sm:$0xff]
        %v406 = vld [vmem:[%s387 + $0x80] sm:$0xff]
        %v407 = vld [vmem:[%s387 + $0x88] sm:$0xff]
        %v408 = vld [vmem:[%s387 + $0x90] sm:$0xff]
        %v409 = vld [vmem:[%s387 + $0x98] sm:$0xff]
        %v410 = vld [vmem:[%s387 + $0xa0] sm:$0xff]
        %v411 = vld [vmem:[%s387 + $0xa8] sm:$0xff]
        %v412 = vld [vmem:[%s387 + $0xb0] sm:$0xff]
        %v413 = vld [vmem:[%s387 + $0xb8] sm:$0xff]
        %v414 = vld [vmem:[%s387 + $0xc0] sm:$0xff]
        %v415 = vld [vmem:[%s387 + $0xc8] sm:$0xff]
        %v416 = vld [vmem:[%s387 + $0xd0] sm:$0xff]
        %v417 = vld [vmem:[%s387 + $0xd8] sm:$0xff]
        %v418 = vld [vmem:[%s387 + $0xe0] sm:$0xff]
        %v419 = vld [vmem:[%s387 + $0xe8] sm:$0xff]
        %v420 = vld [vmem:[%s387 + $0xf0] sm:$0xff]
        %v421 = vld [vmem:[%s387 + $0xf8] sm:$0xff]
        %v422 = vld [vmem:[%s387 + $0x100] sm:$0xff]
        %v423 = vld [vmem:[%s387 + $0x108] sm:$0xff]
        %v424 = vld [vmem:[%s387 + $0x110] sm:$0xff]
        %v425 = vld [vmem:[%s387 + $0x118] sm:$0xff]
        %v426 = vld [vmem:[%s387 + $0x120] sm:$0xff]
        %v427 = vld [vmem:[%s387 + $0x128] sm:$0xff]
        %v428 = vld [vmem:[%s387 + $0x130] sm:$0xff]
        %v429 = vld [vmem:[%s387 + $0x138] sm:$0xff]
        %v430 = vld [vmem:[%s387 + $0x140] sm:$0xff]
        %v431 = vld [vmem:[%s387 + $0x148] sm:$0xff]
        %v432 = vld [vmem:[%s387 + $0x150] sm:$0xff]
        %v433 = vld [vmem:[%s387 + $0x158] sm:$0xff]
        %v434 = vld [vmem:[%s387 + $0x160] sm:$0xff]
        %v435 = vld [vmem:[%s387 + $0x168] sm:$0xff]
        %v436 = vld [vmem:[%s387 + $0x170] sm:$0xff]
        %v437 = vld [vmem:[%s387 + $0x178] sm:$0xff]
        %v438 = vld [vmem:[%s387 + $0x180] sm:$0xff]
        %v439 = vld [vmem:[%s387 + $0x188] sm:$0xff]
        %v440 = vld [vmem:[%s387 + $0x190] sm:$0xff]
        %v441 = vld [vmem:[%s387 + $0x198] sm:$0xff]
        %v442 = vld [vmem:[%s387 + $0x1a0] sm:$0xff]
        %v443 = vld [vmem:[%s387 + $0x1a8] sm:$0xff]
        %v444 = vld [vmem:[%s387 + $0x1b0] sm:$0xff]
        %v445 = vld [vmem:[%s387 + $0x1b8] sm:$0xff]
        %v446 = vld [vmem:[%s387 + $0x1c0] sm:$0xff]
        %v447 = vld [vmem:[%s387 + $0x1c8] sm:$0xff]
        %v448 = vld [vmem:[%s387 + $0x1d0] sm:$0xff]
        %v449 = vld [vmem:[%s387 + $0x1d8] sm:$0xff]
        %v450 = vld [vmem:[%s387 + $0x1e0] sm:$0xff]
        %v451 = vld [vmem:[%s387 + $0x1e8] sm:$0xff]
        %v452 = vld [vmem:[%s387 + $0x1f0] sm:$0xff]
        %v453 = vld [vmem:[%s387 + $0x1f8] sm:$0xff]
        %v454 = vld [vmem:[%s1] sm:$0x3f]
        %v455 = vld [vmem:[%s1 + $0x8] sm:$0x3f]
        %v456 = vld [vmem:[%s1 + $0x10] sm:$0x3f]
        %v457 = vld [vmem:[%s1 + $0x18] sm:$0x3f]
        %v458 = vld [vmem:[%s2] sm:$0xf]
        %v460 = vlaneseq
        %v461 = vshrl.u32 %v460, 7
        %v462 = vsub.s32 0, %v461
        %v463 = vrot.slane %v458, %v462
        %v464 = vlaneseq
        %v465 = vshrl.u32 %v464, 7
        %v466 = vsub.s32 1, %v465
        %v467 = vrot.slane %v458, %v466
        %v468 = vlaneseq
        %v469 = vshrl.u32 %v468, 7
        %v470 = vsub.s32 2, %v469
        %v471 = vrot.slane %v458, %v470
        %v472 = vlaneseq
        %v473 = vshrl.u32 %v472, 7
        %v474 = vsub.s32 3, %v473
        %v475 = vrot.slane %v458, %v474
        %vm480 = vcmask 48128
        %v482 = vsel %vm480, %v390, 0
        %v485 = vsel %vm480, %v391, 0
        %v488 = vsel %vm480, %v392, 0
        %v491 = vsel %vm480, %v393, 0
        %v494 = vsel %vm480, %v394, 0
        %v497 = vsel %vm480, %v395, 0
        %v500 = vsel %vm480, %v396, 0
        %v503 = vsel %vm480, %v397, 0
        %v506 = vsel %vm480, %v398, 0
        %v509 = vsel %vm480, %v399, 0
        %v512 = vsel %vm480, %v400, 0
        %v515 = vsel %vm480, %v401, 0
        %v518 = vsel %vm480, %v402, 0
        %v521 = vsel %vm480, %v403, 0
        %v524 = vsel %vm480, %v404, 0
        %v527 = vsel %vm480, %v405, 0
        %v530 = vsel %vm480, %v406, 0
        %v533 = vsel %vm480, %v407, 0
        %v536 = vsel %vm480, %v408, 0
        %v539 = vsel %vm480, %v409, 0
        %v542 = vsel %vm480, %v410, 0
        %v545 = vsel %vm480, %v411, 0
        %v548 = vsel %vm480, %v412, 0
        %v551 = vsel %vm480, %v413, 0
        %v554 = vsel %vm480, %v414, 0
        %v557 = vsel %vm480, %v415, 0
        %v560 = vsel %vm480, %v416, 0
        %v563 = vsel %vm480, %v417, 0
        %v566 = vsel %vm480, %v418, 0
        %v569 = vsel %vm480, %v419, 0
        %v572 = vsel %vm480, %v420, 0
        %v575 = vsel %vm480, %v421, 0
        %v578 = vsel %vm480, %v422, 0
        %v581 = vsel %vm480, %v423, 0
        %v584 = vsel %vm480, %v424, 0
        %v587 = vsel %vm480, %v425, 0
        %v590 = vsel %vm480, %v426, 0
        %v593 = vsel %vm480, %v427, 0
        %v596 = vsel %vm480, %v428, 0
        %v599 = vsel %vm480, %v429, 0
        %v602 = vsel %vm480, %v430, 0
        %v605 = vsel %vm480, %v431, 0
        %v608 = vsel %vm480, %v432, 0
        %v611 = vsel %vm480, %v433, 0
        %v614 = vsel %vm480, %v434, 0
        %v617 = vsel %vm480, %v435, 0
        %v620 = vsel %vm480, %v436, 0
        %v623 = vsel %vm480, %v437, 0
        %v626 = vsel %vm480, %v438, 0
        %v629 = vsel %vm480, %v439, 0
        %v632 = vsel %vm480, %v440, 0
        %v635 = vsel %vm480, %v441, 0
        %v638 = vsel %vm480, %v442, 0
        %v641 = vsel %vm480, %v443, 0
        %v644 = vsel %vm480, %v444, 0
        %v647 = vsel %vm480, %v445, 0
        %v650 = vsel %vm480, %v446, 0
        %v653 = vsel %vm480, %v447, 0
        %v656 = vsel %vm480, %v448, 0
        %v659 = vsel %vm480, %v449, 0
        %v662 = vsel %vm480, %v450, 0
        %v665 = vsel %vm480, %v451, 0
        %v668 = vsel %vm480, %v452, 0
        %v671 = vsel %vm480, %v453, 0
        %vm673 = vcmask 1045504
        %v675 = vsel %vm673, %v454, 0
        %v678 = vsel %vm673, %v455, 0
        %v681 = vsel %vm673, %v456, 0
        %v684 = vsel %vm673, %v457, 0
        %686 = vmatprep.subr.mxu0 %v678
        %687 = vmatpush1.msra.mxu0 %v675
        %688 = vmatprep.subr.mxu0 0.0
        %689 = vmatpush1.msra.mxu0 0.0
        %690 = vmatprep.subr.mxu0 0.0
        %691 = vmatpush1.msra.mxu0 0.0
        %692 = vmatprep.subr.mxu0 0.0
        %693 = vmatpush1.msra.mxu0 0.0
        %694 = vmatprep.subr.mxu0 0.0
        %695 = vmatpush1.msra.mxu0 0.0
        %696 = vmatprep.subr.mxu0 0.0
        %697 = vmatpush1.msra.mxu0 0.0
        %698 = vmatprep.subr.mxu0 0.0
        %699 = vmatpush1.msra.mxu0 0.0
        %700 = vmatprep.subr.mxu0 0.0
        %701 = vmatpush1.msra.mxu0 0.0
        %702 = vmatprep.subr.mxu0 0.0
        %703 = vmatpush1.msra.mxu0 0.0
        %704 = vmatprep.subr.mxu0 0.0
        %705 = vmatpush1.msra.mxu0 0.0
        %706 = vmatprep.subr.mxu0 0.0
        %707 = vmatpush1.msra.mxu0 0.0
        %708 = vmatprep.subr.mxu0 0.0
        %709 = vmatpush1.msra.mxu0 0.0
        %710 = vmatprep.subr.mxu0 0.0
        %711 = vmatpush1.msra.mxu0 0.0
        %712 = vmatprep.subr.mxu0 0.0
        %713 = vmatpush1.msra.mxu0 0.0
        %714 = vmatprep.subr.mxu0 0.0
        %715 = vmatpush1.msra.mxu0 0.0
        %716 = vmatprep.subr.mxu0 0.0
        %717 = vmatpush1.msra.mxu0 0.0
        %718 = vmatprep.subr.mxu0 0.0
        %719 = vmatpush1.msra.mxu0 0.0
        %720 = vmatprep.subr.mxu0 0.0
        %721 = vmatpush1.msra.mxu0 0.0
        %722 = vmatprep.subr.mxu0 0.0
        %723 = vmatpush1.msra.mxu0 0.0
        %724 = vmatprep.subr.mxu0 0.0
        %725 = vmatpush1.msra.mxu0 0.0
        %726 = vmatprep.subr.mxu0 0.0
        %727 = vmatpush1.msra.mxu0 0.0
        %728 = vmatprep.subr.mxu0 0.0
        %729 = vmatpush1.msra.mxu0 0.0
        %730 = vmatprep.subr.mxu0 0.0
        %731 = vmatpush1.msra.mxu0 0.0
        %732 = vmatprep.subr.mxu0 0.0
        %733 = vmatpush1.msra.mxu0 0.0
        %734 = vmatprep.subr.mxu0 0.0
        %735 = vmatpush1.msra.mxu0 0.0
        %736 = vmatprep.subr.mxu0 0.0
        %737 = vmatpush1.msra.mxu0 0.0
        %738 = vmatprep.subr.mxu0 0.0
        %739 = vmatpush1.msra.mxu0 0.0
        %740 = vmatprep.subr.mxu0 0.0
        %741 = vmatpush1.msra.mxu0 0.0
        %742 = vmatprep.subr.mxu0 0.0
        %743 = vmatpush1.msra.mxu0 0.0
        %744 = vmatprep.subr.mxu0 0.0
        %745 = vmatpush1.msra.mxu0 0.0
        %746 = vmatprep.subr.mxu0 0.0
        %747 = vmatpush1.msra.mxu0 0.0
        %748 = vmatprep.subr.mxu0 0.0
        %749 = vmatpush1.msra.mxu0 0.0
        %750 = vmatprep.mubr.f32.mxu0 0.0
        %751 = vmatmul.mubr.f32.gmra.mrb[0].mxu0 %v482
        %v752 = vpop.f32.mrb[0].mxu0
        %v753 = vadd.f32 %v463, %v752
        %v754 = vpop.f32.mrb[0].mxu0
        %v755 = vadd.f32 %v467, %v754
        %756 = vmatprep.mubr.f32.mxu0 0.0
        %757 = vmatmul.mubr.f32.gmra.mrb[0].mxu0 %v485
        %v758 = vpop.f32.mrb[0].mxu0
        %v759 = vadd.f32 %v463, %v758
        %v760 = vpop.f32.mrb[0].mxu0
        %v761 = vadd.f32 %v467, %v760
        %762 = vmatprep.mubr.f32.mxu0 0.0
        %763 = vmatmul.mubr.f32.gmra.mrb[0].mxu0 %v488
        %v764 = vpop.f32.mrb[0].mxu0
        %v765 = vadd.f32 %v463, %v764
        %v766 = vpop.f32.mrb[0].mxu0
        %v767 = vadd.f32 %v467, %v766
        %768 = vmatprep.mubr.f32.mxu0 0.0
        %769 = vmatmul.mubr.f32.gmra.mrb[0].mxu0 %v491
        %v770 = vpop.f32.mrb[0].mxu0
        %v771 = vadd.f32 %v463, %v770
        %v772 = vpop.f32.mrb[0].mxu0
        %v773 = vadd.f32 %v467, %v772
        %774 = vmatprep.mubr.f32.mxu0 0.0
        %775 = vmatmul.mubr.f32.gmra.mrb[0].mxu0 %v494
        %v776 = vpop.f32.mrb[0].mxu0
        %v777 = vadd.f32 %v463, %v776
        %v778 = vpop.f32.mrb[0].mxu0
        %v779 = vadd.f32 %v467, %v778
        %780 = vmatprep.mubr.f32.mxu0 0.0
        %781 = vmatmul.mubr.f32.gmra.mrb[0].mxu0 %v497
        %v782 = vpop.f32.mrb[0].mxu0
        %v783 = vadd.f32 %v463, %v782
        %v784 = vpop.f32.mrb[0].mxu0
        %v785 = vadd.f32 %v467, %v784
        %786 = vmatprep.mubr.f32.mxu0 0.0
        %787 = vmatmul.mubr.f32.gmra.mrb[0].mxu0 %v500
        %v788 = vpop.f32.mrb[0].mxu0
        %v789 = vadd.f32 %v463, %v788
        %v790 = vpop.f32.mrb[0].mxu0
        %v791 = vadd.f32 %v467, %v790
        %792 = vmatprep.mubr.f32.mxu0 0.0
        %793 = vmatmul.mubr.f32.gmra.mrb[0].mxu0 %v503
        %v794 = vpop.f32.mrb[0].mxu0
        %v795 = vadd.f32 %v463, %v794
        %v796 = vpop.f32.mrb[0].mxu0
        %v797 = vadd.f32 %v467, %v796
        %798 = vmatprep.mubr.f32.mxu0 0.0
        %799 = vmatmul.mubr.f32.gmra.mrb[0].mxu0 %v506
        %v800 = vpop.f32.mrb[0].mxu0
        %v801 = vadd.f32 %v463, %v800
        %v802 = vpop.f32.mrb[0].mxu0
        %v803 = vadd.f32 %v467, %v802
        %804 = vmatprep.mubr.f32.mxu0 0.0
        %805 = vmatmul.mubr.f32.gmra.mrb[0].mxu0 %v509
        %v806 = vpop.f32.mrb[0].mxu0
        %v807 = vadd.f32 %v463, %v806
        %v808 = vpop.f32.mrb[0].mxu0
        %v809 = vadd.f32 %v467, %v808
        %810 = vmatprep.mubr.f32.mxu0 0.0
        %811 = vmatmul.mubr.f32.gmra.mrb[0].mxu0 %v512
        %v812 = vpop.f32.mrb[0].mxu0
        %v813 = vadd.f32 %v463, %v812
        %v814 = vpop.f32.mrb[0].mxu0
        %v815 = vadd.f32 %v467, %v814
        %816 = vmatprep.mubr.f32.mxu0 0.0
        %817 = vmatmul.mubr.f32.gmra.mrb[0].mxu0 %v515
        %v818 = vpop.f32.mrb[0].mxu0
        %v819 = vadd.f32 %v463, %v818
        %v820 = vpop.f32.mrb[0].mxu0
        %v821 = vadd.f32 %v467, %v820
        %822 = vmatprep.mubr.f32.mxu0 0.0
        %823 = vmatmul.mubr.f32.gmra.mrb[0].mxu0 %v518
        %v824 = vpop.f32.mrb[0].mxu0
        %v825 = vadd.f32 %v463, %v824
        %v826 = vpop.f32.mrb[0].mxu0
        %v827 = vadd.f32 %v467, %v826
        %828 = vmatprep.mubr.f32.mxu0 0.0
        %829 = vmatmul.mubr.f32.gmra.mrb[0].mxu0 %v521
        %v830 = vpop.f32.mrb[0].mxu0
        %v831 = vadd.f32 %v463, %v830
        %v832 = vpop.f32.mrb[0].mxu0
        %v833 = vadd.f32 %v467, %v832
        %834 = vmatprep.mubr.f32.mxu0 0.0
        %835 = vmatmul.mubr.f32.gmra.mrb[0].mxu0 %v524
        %v836 = vpop.f32.mrb[0].mxu0
        %v837 = vadd.f32 %v463, %v836
        %v838 = vpop.f32.mrb[0].mxu0
        %v839 = vadd.f32 %v467, %v838
        %840 = vmatprep.mubr.f32.mxu0 0.0
        %841 = vmatmul.mubr.f32.gmra.mrb[0].mxu0 %v527
        %v842 = vpop.f32.mrb[0].mxu0
        %v843 = vadd.f32 %v463, %v842
        %v844 = vpop.f32.mrb[0].mxu0
        %v845 = vadd.f32 %v467, %v844
        %846 = vmatprep.mubr.f32.mxu0 0.0
        %847 = vmatmul.mubr.f32.gmra.mrb[0].mxu0 %v530
        %v848 = vpop.f32.mrb[0].mxu0
        %v849 = vadd.f32 %v463, %v848
        %v850 = vpop.f32.mrb[0].mxu0
        %v851 = vadd.f32 %v467, %v850
        %852 = vmatprep.mubr.f32.mxu0 0.0
        %853 = vmatmul.mubr.f32.gmra.mrb[0].mxu0 %v533
        %v854 = vpop.f32.mrb[0].mxu0
        %v855 = vadd.f32 %v463, %v854
        %v856 = vpop.f32.mrb[0].mxu0
        %v857 = vadd.f32 %v467, %v856
        %858 = vmatprep.mubr.f32.mxu0 0.0
        %859 = vmatmul.mubr.f32.gmra.mrb[0].mxu0 %v536
        %v860 = vpop.f32.mrb[0].mxu0
        %v861 = vadd.f32 %v463, %v860
        %v862 = vpop.f32.mrb[0].mxu0
        %v863 = vadd.f32 %v467, %v862
        %864 = vmatprep.mubr.f32.mxu0 0.0
        %865 = vmatmul.mubr.f32.gmra.mrb[0].mxu0 %v539
        %v866 = vpop.f32.mrb[0].mxu0
        %v867 = vadd.f32 %v463, %v866
        %v868 = vpop.f32.mrb[0].mxu0
        %v869 = vadd.f32 %v467, %v868
        %870 = vmatprep.mubr.f32.mxu0 0.0
        %871 = vmatmul.mubr.f32.gmra.mrb[0].mxu0 %v542
        %v872 = vpop.f32.mrb[0].mxu0
        %v873 = vadd.f32 %v463, %v872
        %v874 = vpop.f32.mrb[0].mxu0
        %v875 = vadd.f32 %v467, %v874
        %876 = vmatprep.mubr.f32.mxu0 0.0
        %877 = vmatmul.mubr.f32.gmra.mrb[0].mxu0 %v545
        %v878 = vpop.f32.mrb[0].mxu0
        %v879 = vadd.f32 %v463, %v878
        %v880 = vpop.f32.mrb[0].mxu0
        %v881 = vadd.f32 %v467, %v880
        %882 = vmatprep.mubr.f32.mxu0 0.0
        %883 = vmatmul.mubr.f32.gmra.mrb[0].mxu0 %v548
        %v884 = vpop.f32.mrb[0].mxu0
        %v885 = vadd.f32 %v463, %v884
        %v886 = vpop.f32.mrb[0].mxu0
        %v887 = vadd.f32 %v467, %v886
        %888 = vmatprep.mubr.f32.mxu0 0.0
        %889 = vmatmul.mubr.f32.gmra.mrb[0].mxu0 %v551
        %v890 = vpop.f32.mrb[0].mxu0
        %v891 = vadd.f32 %v463, %v890
        %v892 = vpop.f32.mrb[0].mxu0
        %v893 = vadd.f32 %v467, %v892
        %894 = vmatprep.mubr.f32.mxu0 0.0
        %895 = vmatmul.mubr.f32.gmra.mrb[0].mxu0 %v554
        %v896 = vpop.f32.mrb[0].mxu0
        %v897 = vadd.f32 %v463, %v896
        %v898 = vpop.f32.mrb[0].mxu0
        %v899 = vadd.f32 %v467, %v898
        %900 = vmatprep.mubr.f32.mxu0 0.0
        %901 = vmatmul.mubr.f32.gmra.mrb[0].mxu0 %v557
        %v902 = vpop.f32.mrb[0].mxu0
        %v903 = vadd.f32 %v463, %v902
        %v904 = vpop.f32.mrb[0].mxu0
        %v905 = vadd.f32 %v467, %v904
        %906 = vmatprep.mubr.f32.mxu0 0.0
        %907 = vmatmul.mubr.f32.gmra.mrb[0].mxu0 %v560
        %v908 = vpop.f32.mrb[0].mxu0
        %v909 = vadd.f32 %v463, %v908
        %v910 = vpop.f32.mrb[0].mxu0
        %v911 = vadd.f32 %v467, %v910
        %912 = vmatprep.mubr.f32.mxu0 0.0
        %913 = vmatmul.mubr.f32.gmra.mrb[0].mxu0 %v563
        %v914 = vpop.f32.mrb[0].mxu0
        %v915 = vadd.f32 %v463, %v914
        %v916 = vpop.f32.mrb[0].mxu0
        %v917 = vadd.f32 %v467, %v916
        %918 = vmatprep.mubr.f32.mxu0 0.0
        %919 = vmatmul.mubr.f32.gmra.mrb[0].mxu0 %v566
        %v920 = vpop.f32.mrb[0].mxu0
        %v921 = vadd.f32 %v463, %v920
        %v922 = vpop.f32.mrb[0].mxu0
        %v923 = vadd.f32 %v467, %v922
        %924 = vmatprep.mubr.f32.mxu0 0.0
        %925 = vmatmul.mubr.f32.gmra.mrb[0].mxu0 %v569
        %v926 = vpop.f32.mrb[0].mxu0
        %v927 = vadd.f32 %v463, %v926
        %v928 = vpop.f32.mrb[0].mxu0
        %v929 = vadd.f32 %v467, %v928
        %930 = vmatprep.mubr.f32.mxu0 0.0
        %931 = vmatmul.mubr.f32.gmra.mrb[0].mxu0 %v572
        %v932 = vpop.f32.mrb[0].mxu0
        %v933 = vadd.f32 %v463, %v932
        %v934 = vpop.f32.mrb[0].mxu0
        %v935 = vadd.f32 %v467, %v934
        %936 = vmatprep.mubr.f32.mxu0 0.0
        %937 = vmatmul.mubr.f32.gmra.mrb[0].mxu0 %v575
        %v938 = vpop.f32.mrb[0].mxu0
        %v939 = vadd.f32 %v463, %v938
        %v940 = vpop.f32.mrb[0].mxu0
        %v941 = vadd.f32 %v467, %v940
        %942 = vmatprep.mubr.f32.mxu0 0.0
        %943 = vmatmul.mubr.f32.gmra.mrb[0].mxu0 %v578
        %v944 = vpop.f32.mrb[0].mxu0
        %v945 = vadd.f32 %v463, %v944
        %v946 = vpop.f32.mrb[0].mxu0
        %v947 = vadd.f32 %v467, %v946
        %948 = vmatprep.mubr.f32.mxu0 0.0
        %949 = vmatmul.mubr.f32.gmra.mrb[0].mxu0 %v581
        %v950 = vpop.f32.mrb[0].mxu0
        %v951 = vadd.f32 %v463, %v950
        %v952 = vpop.f32.mrb[0].mxu0
        %v953 = vadd.f32 %v467, %v952
        %954 = vmatprep.mubr.f32.mxu0 0.0
        %955 = vmatmul.mubr.f32.gmra.mrb[0].mxu0 %v584
        %v956 = vpop.f32.mrb[0].mxu0
        %v957 = vadd.f32 %v463, %v956
        %v958 = vpop.f32.mrb[0].mxu0
        %v959 = vadd.f32 %v467, %v958
        %960 = vmatprep.mubr.f32.mxu0 0.0
        %961 = vmatmul.mubr.f32.gmra.mrb[0].mxu0 %v587
        %v962 = vpop.f32.mrb[0].mxu0
        %v963 = vadd.f32 %v463, %v962
        %v964 = vpop.f32.mrb[0].mxu0
        %v965 = vadd.f32 %v467, %v964
        %966 = vmatprep.mubr.f32.mxu0 0.0
        %967 = vmatmul.mubr.f32.gmra.mrb[0].mxu0 %v590
        %v968 = vpop.f32.mrb[0].mxu0
        %v969 = vadd.f32 %v463, %v968
        %v970 = vpop.f32.mrb[0].mxu0
        %v971 = vadd.f32 %v467, %v970
        %972 = vmatprep.mubr.f32.mxu0 0.0
        %973 = vmatmul.mubr.f32.gmra.mrb[0].mxu0 %v593
        %v974 = vpop.f32.mrb[0].mxu0
        %v975 = vadd.f32 %v463, %v974
        %v976 = vpop.f32.mrb[0].mxu0
        %v977 = vadd.f32 %v467, %v976
        %978 = vmatprep.mubr.f32.mxu0 0.0
        %979 = vmatmul.mubr.f32.gmra.mrb[0].mxu0 %v596
        %v980 = vpop.f32.mrb[0].mxu0
        %v981 = vadd.f32 %v463, %v980
        %v982 = vpop.f32.mrb[0].mxu0
        %v983 = vadd.f32 %v467, %v982
        %984 = vmatprep.mubr.f32.mxu0 0.0
        %985 = vmatmul.mubr.f32.gmra.mrb[0].mxu0 %v599
        %v986 = vpop.f32.mrb[0].mxu0
        %v987 = vadd.f32 %v463, %v986
        %v988 = vpop.f32.mrb[0].mxu0
        %v989 = vadd.f32 %v467, %v988
        %990 = vmatprep.mubr.f32.mxu0 0.0
        %991 = vmatmul.mubr.f32.gmra.mrb[0].mxu0 %v602
        %v992 = vpop.f32.mrb[0].mxu0
        %v993 = vadd.f32 %v463, %v992
        %v994 = vpop.f32.mrb[0].mxu0
        %v995 = vadd.f32 %v467, %v994
        %996 = vmatprep.mubr.f32.mxu0 0.0
        %997 = vmatmul.mubr.f32.gmra.mrb[0].mxu0 %v605
        %v998 = vpop.f32.mrb[0].mxu0
        %v999 = vadd.f32 %v463, %v998
        %v1000 = vpop.f32.mrb[0].mxu0
        %v1001 = vadd.f32 %v467, %v1000
        %1002 = vmatprep.mubr.f32.mxu0 0.0
        %1003 = vmatmul.mubr.f32.gmra.mrb[0].mxu0 %v608
        %v1004 = vpop.f32.mrb[0].mxu0
        %v1005 = vadd.f32 %v463, %v1004
        %v1006 = vpop.f32.mrb[0].mxu0
        %v1007 = vadd.f32 %v467, %v1006
        %1008 = vmatprep.mubr.f32.mxu0 0.0
        %1009 = vmatmul.mubr.f32.gmra.mrb[0].mxu0 %v611
        %v1010 = vpop.f32.mrb[0].mxu0
        %v1011 = vadd.f32 %v463, %v1010
        %v1012 = vpop.f32.mrb[0].mxu0
        %v1013 = vadd.f32 %v467, %v1012
        %1014 = vmatprep.mubr.f32.mxu0 0.0
        %1015 = vmatmul.mubr.f32.gmra.mrb[0].mxu0 %v614
        %v1016 = vpop.f32.mrb[0].mxu0
        %v1017 = vadd.f32 %v463, %v1016
        %v1018 = vpop.f32.mrb[0].mxu0
        %v1019 = vadd.f32 %v467, %v1018
        %1020 = vmatprep.mubr.f32.mxu0 0.0
        %1021 = vmatmul.mubr.f32.gmra.mrb[0].mxu0 %v617
        %v1022 = vpop.f32.mrb[0].mxu0
        %v1023 = vadd.f32 %v463, %v1022
        %v1024 = vpop.f32.mrb[0].mxu0
        %v1025 = vadd.f32 %v467, %v1024
        %1026 = vmatprep.mubr.f32.mxu0 0.0
        %1027 = vmatmul.mubr.f32.gmra.mrb[0].mxu0 %v620
        %v1028 = vpop.f32.mrb[0].mxu0
        %v1029 = vadd.f32 %v463, %v1028
        %v1030 = vpop.f32.mrb[0].mxu0
        %v1031 = vadd.f32 %v467, %v1030
        %1032 = vmatprep.mubr.f32.mxu0 0.0
        %1033 = vmatmul.mubr.f32.gmra.mrb[0].mxu0 %v623
        %v1034 = vpop.f32.mrb[0].mxu0
        %v1035 = vadd.f32 %v463, %v1034
        %v1036 = vpop.f32.mrb[0].mxu0
        %v1037 = vadd.f32 %v467, %v1036
        %1038 = vmatprep.mubr.f32.mxu0 0.0
        %1039 = vmatmul.mubr.f32.gmra.mrb[0].mxu0 %v626
        %v1040 = vpop.f32.mrb[0].mxu0
        %v1041 = vadd.f32 %v463, %v1040
        %v1042 = vpop.f32.mrb[0].mxu0
        %v1043 = vadd.f32 %v467, %v1042
        %1044 = vmatprep.mubr.f32.mxu0 0.0
        %1045 = vmatmul.mubr.f32.gmra.mrb[0].mxu0 %v629
        %v1046 = vpop.f32.mrb[0].mxu0
        %v1047 = vadd.f32 %v463, %v1046
        %v1048 = vpop.f32.mrb[0].mxu0
        %v1049 = vadd.f32 %v467, %v1048
        %1050 = vmatprep.mubr.f32.mxu0 0.0
        %1051 = vmatmul.mubr.f32.gmra.mrb[0].mxu0 %v632
        %v1052 = vpop.f32.mrb[0].mxu0
        %v1053 = vadd.f32 %v463, %v1052
        %v1054 = vpop.f32.mrb[0].mxu0
        %v1055 = vadd.f32 %v467, %v1054
        %1056 = vmatprep.mubr.f32.mxu0 0.0
        %1057 = vmatmul.mubr.f32.gmra.mrb[0].mxu0 %v635
        %v1058 = vpop.f32.mrb[0].mxu0
        %v1059 = vadd.f32 %v463, %v1058
        %v1060 = vpop.f32.mrb[0].mxu0
        %v1061 = vadd.f32 %v467, %v1060
        %1062 = vmatprep.mubr.f32.mxu0 0.0
        %1063 = vmatmul.mubr.f32.gmra.mrb[0].mxu0 %v638
        %v1064 = vpop.f32.mrb[0].mxu0
        %v1065 = vadd.f32 %v463, %v1064
        %v1066 = vpop.f32.mrb[0].mxu0
        %v1067 = vadd.f32 %v467, %v1066
        %1068 = vmatprep.mubr.f32.mxu0 0.0
        %1069 = vmatmul.mubr.f32.gmra.mrb[0].mxu0 %v641
        %v1070 = vpop.f32.mrb[0].mxu0
        %v1071 = vadd.f32 %v463, %v1070
        %v1072 = vpop.f32.mrb[0].mxu0
        %v1073 = vadd.f32 %v467, %v1072
        %1074 = vmatprep.mubr.f32.mxu0 0.0
        %1075 = vmatmul.mubr.f32.gmra.mrb[0].mxu0 %v644
        %v1076 = vpop.f32.mrb[0].mxu0
        %v1077 = vadd.f32 %v463, %v1076
        %v1078 = vpop.f32.mrb[0].mxu0
        %v1079 = vadd.f32 %v467, %v1078
        %1080 = vmatprep.mubr.f32.mxu0 0.0
        %1081 = vmatmul.mubr.f32.gmra.mrb[0].mxu0 %v647
        %v1082 = vpop.f32.mrb[0].mxu0
        %v1083 = vadd.f32 %v463, %v1082
        %v1084 = vpop.f32.mrb[0].mxu0
        %v1085 = vadd.f32 %v467, %v1084
        %1086 = vmatprep.mubr.f32.mxu0 0.0
        %1087 = vmatmul.mubr.f32.gmra.mrb[0].mxu0 %v650
        %v1088 = vpop.f32.mrb[0].mxu0
        %v1089 = vadd.f32 %v463, %v1088
        %v1090 = vpop.f32.mrb[0].mxu0
        %v1091 = vadd.f32 %v467, %v1090
        %1092 = vmatprep.mubr.f32.mxu0 0.0
        %1093 = vmatmul.mubr.f32.gmra.mrb[0].mxu0 %v653
        %v1094 = vpop.f32.mrb[0].mxu0
        %v1095 = vadd.f32 %v463, %v1094
        %v1096 = vpop.f32.mrb[0].mxu0
        %v1097 = vadd.f32 %v467, %v1096
        %1098 = vmatprep.mubr.f32.mxu0 0.0
        %1099 = vmatmul.mubr.f32.gmra.mrb[0].mxu0 %v656
        %v1100 = vpop.f32.mrb[0].mxu0
        %v1101 = vadd.f32 %v463, %v1100
        %v1102 = vpop.f32.mrb[0].mxu0
        %v1103 = vadd.f32 %v467, %v1102
        %1104 = vmatprep.mubr.f32.mxu0 0.0
        %1105 = vmatmul.mubr.f32.gmra.mrb[0].mxu0 %v659
        %v1106 = vpop.f32.mrb[0].mxu0
        %v1107 = vadd.f32 %v463, %v1106
        %v1108 = vpop.f32.mrb[0].mxu0
        %v1109 = vadd.f32 %v467, %v1108
        %1110 = vmatprep.mubr.f32.mxu0 0.0
        %1111 = vmatmul.mubr.f32.gmra.mrb[0].mxu0 %v662
        %v1112 = vpop.f32.mrb[0].mxu0
        %v1113 = vadd.f32 %v463, %v1112
        %v1114 = vpop.f32.mrb[0].mxu0
        %v1115 = vadd.f32 %v467, %v1114
        %1116 = vmatprep.mubr.f32.mxu0 0.0
        %1117 = vmatmul.mubr.f32.gmra.mrb[0].mxu0 %v665
        %v1118 = vpop.f32.mrb[0].mxu0
        %v1119 = vadd.f32 %v463, %v1118
        %v1120 = vpop.f32.mrb[0].mxu0
        %v1121 = vadd.f32 %v467, %v1120
        %1122 = vmatprep.mubr.f32.mxu0 0.0
        %1123 = vmatmul.mubr.f32.gmra.mrb[0].mxu0 %v668
        %v1124 = vpop.f32.mrb[0].mxu0
        %v1125 = vadd.f32 %v463, %v1124
        %v1126 = vpop.f32.mrb[0].mxu0
        %v1127 = vadd.f32 %v467, %v1126
        %1128 = vmatprep.mubr.f32.mxu0 0.0
        %1129 = vmatmul.mubr.f32.gmra.mrb[0].mxu0 %v671
        %v1130 = vpop.f32.mrb[0].mxu0
        %v1131 = vadd.f32 %v463, %v1130
        %v1132 = vpop.f32.mrb[0].mxu0
        %v1133 = vadd.f32 %v467, %v1132
        %1134 = vdwg.mxu0
        %1135 = vmatprep.subr.mxu0 %v684
        %1136 = vmatpush1.msra.mxu0 %v681
        %1137 = vmatprep.subr.mxu0 0.0
        %1138 = vmatpush1.msra.mxu0 0.0
        %1139 = vmatprep.subr.mxu0 0.0
        %1140 = vmatpush1.msra.mxu0 0.0
        %1141 = vmatprep.subr.mxu0 0.0
        %1142 = vmatpush1.msra.mxu0 0.0
        %1143 = vmatprep.subr.mxu0 0.0
        %1144 = vmatpush1.msra.mxu0 0.0
        %1145 = vmatprep.subr.mxu0 0.0
        %1146 = vmatpush1.msra.mxu0 0.0
        %1147 = vmatprep.subr.mxu0 0.0
        %1148 = vmatpush1.msra.mxu0 0.0
        %1149 = vmatprep.subr.mxu0 0.0
        %1150 = vmatpush1.msra.mxu0 0.0
        %1151 = vmatprep.subr.mxu0 0.0
        %1152 = vmatpush1.msra.mxu0 0.0
        %1153 = vmatprep.subr.mxu0 0.0
        %1154 = vmatpush1.msra.mxu0 0.0
        %1155 = vmatprep.subr.mxu0 0.0
        %1156 = vmatpush1.msra.mxu0 0.0
        %1157 = vmatprep.subr.mxu0 0.0
        %1158 = vmatpush1.msra.mxu0 0.0
        %1159 = vmatprep.subr.mxu0 0.0
        %1160 = vmatpush1.msra.mxu0 0.0
        %1161 = vmatprep.subr.mxu0 0.0
        %1162 = vmatpush1.msra.mxu0 0.0
        %1163 = vmatprep.subr.mxu0 0.0
        %1164 = vmatpush1.msra.mxu0 0.0
        %1165 = vmatprep.subr.mxu0 0.0
        %1166 = vmatpush1.msra.mxu0 0.0
        %1167 = vmatprep.subr.mxu0 0.0
        %1168 = vmatpush1.msra.mxu0 0.0
        %1169 = vmatprep.subr.mxu0 0.0
        %1170 = vmatpush1.msra.mxu0 0.0
        %1171 = vmatprep.subr.mxu0 0.0
        %1172 = vmatpush1.msra.mxu0 0.0
        %1173 = vmatprep.subr.mxu0 0.0
        %1174 = vmatpush1.msra.mxu0 0.0
        %1175 = vmatprep.subr.mxu0 0.0
        %1176 = vmatpush1.msra.mxu0 0.0
        %1177 = vmatprep.subr.mxu0 0.0
        %1178 = vmatpush1.msra.mxu0 0.0
        %1179 = vmatprep.subr.mxu0 0.0
        %1180 = vmatpush1.msra.mxu0 0.0
        %1181 = vmatprep.subr.mxu0 0.0
        %1182 = vmatpush1.msra.mxu0 0.0
        %1183 = vmatprep.subr.mxu0 0.0
        %1184 = vmatpush1.msra.mxu0 0.0
        %1185 = vmatprep.subr.mxu0 0.0
        %1186 = vmatpush1.msra.mxu0 0.0
        %1187 = vmatprep.subr.mxu0 0.0
        %1188 = vmatpush1.msra.mxu0 0.0
        %1189 = vmatprep.subr.mxu0 0.0
        %1190 = vmatpush1.msra.mxu0 0.0
        %1191 = vmatprep.subr.mxu0 0.0
        %1192 = vmatpush1.msra.mxu0 0.0
        %1193 = vmatprep.subr.mxu0 0.0
        %1194 = vmatpush1.msra.mxu0 0.0
        %1195 = vmatprep.subr.mxu0 0.0
        %1196 = vmatpush1.msra.mxu0 0.0
        %1197 = vmatprep.subr.mxu0 0.0
        %1198 = vmatpush1.msra.mxu0 0.0
        %1199 = vmatprep.mubr.f32.mxu0 0.0
        %1200 = vmatmul.mubr.f32.gmra.mrb[0].mxu0 %v482
        %v1201 = vpop.f32.mrb[0].mxu0
        %v1202 = vadd.f32 %v471, %v1201
        %v1203 = vpop.f32.mrb[0].mxu0
        %v1204 = vadd.f32 %v475, %v1203
        %1205 = vmatprep.mubr.f32.mxu0 0.0
        %1206 = vmatmul.mubr.f32.gmra.mrb[0].mxu0 %v485
        %v1207 = vpop.f32.mrb[0].mxu0
        %v1208 = vadd.f32 %v471, %v1207
        %v1209 = vpop.f32.mrb[0].mxu0
        %v1210 = vadd.f32 %v475, %v1209
        %1211 = vmatprep.mubr.f32.mxu0 0.0
        %1212 = vmatmul.mubr.f32.gmra.mrb[0].mxu0 %v488
        %v1213 = vpop.f32.mrb[0].mxu0
        %v1214 = vadd.f32 %v471, %v1213
        %v1215 = vpop.f32.mrb[0].mxu0
        %v1216 = vadd.f32 %v475, %v1215
        %1217 = vmatprep.mubr.f32.mxu0 0.0
        %1218 = vmatmul.mubr.f32.gmra.mrb[0].mxu0 %v491
        %v1219 = vpop.f32.mrb[0].mxu0
        %v1220 = vadd.f32 %v471, %v1219
        %v1221 = vpop.f32.mrb[0].mxu0
        %v1222 = vadd.f32 %v475, %v1221
        %1223 = vmatprep.mubr.f32.mxu0 0.0
        %1224 = vmatmul.mubr.f32.gmra.mrb[0].mxu0 %v494
        %v1225 = vpop.f32.mrb[0].mxu0
        %v1226 = vadd.f32 %v471, %v1225
        %v1227 = vpop.f32.mrb[0].mxu0
        %v1228 = vadd.f32 %v475, %v1227
        %1229 = vmatprep.mubr.f32.mxu0 0.0
        %1230 = vmatmul.mubr.f32.gmra.mrb[0].mxu0 %v497
        %v1231 = vpop.f32.mrb[0].mxu0
        %v1232 = vadd.f32 %v471, %v1231
        %v1233 = vpop.f32.mrb[0].mxu0
        %v1234 = vadd.f32 %v475, %v1233
        %1235 = vmatprep.mubr.f32.mxu0 0.0
        %1236 = vmatmul.mubr.f32.gmra.mrb[0].mxu0 %v500
        %v1237 = vpop.f32.mrb[0].mxu0
        %v1238 = vadd.f32 %v471, %v1237
        %v1239 = vpop.f32.mrb[0].mxu0
        %v1240 = vadd.f32 %v475, %v1239
        %1241 = vmatprep.mubr.f32.mxu0 0.0
        %1242 = vmatmul.mubr.f32.gmra.mrb[0].mxu0 %v503
        %v1243 = vpop.f32.mrb[0].mxu0
        %v1244 = vadd.f32 %v471, %v1243
        %v1245 = vpop.f32.mrb[0].mxu0
        %v1246 = vadd.f32 %v475, %v1245
        %1247 = vmatprep.mubr.f32.mxu0 0.0
        %1248 = vmatmul.mubr.f32.gmra.mrb[0].mxu0 %v506
        %v1249 = vpop.f32.mrb[0].mxu0
        %v1250 = vadd.f32 %v471, %v1249
        %v1251 = vpop.f32.mrb[0].mxu0
        %v1252 = vadd.f32 %v475, %v1251
        %1253 = vmatprep.mubr.f32.mxu0 0.0
        %1254 = vmatmul.mubr.f32.gmra.mrb[0].mxu0 %v509
        %v1255 = vpop.f32.mrb[0].mxu0
        %v1256 = vadd.f32 %v471, %v1255
        %v1257 = vpop.f32.mrb[0].mxu0
        %v1258 = vadd.f32 %v475, %v1257
        %1259 = vmatprep.mubr.f32.mxu0 0.0
        %1260 = vmatmul.mubr.f32.gmra.mrb[0].mxu0 %v512
        %v1261 = vpop.f32.mrb[0].mxu0
        %v1262 = vadd.f32 %v471, %v1261
        %v1263 = vpop.f32.mrb[0].mxu0
        %v1264 = vadd.f32 %v475, %v1263
        %1265 = vmatprep.mubr.f32.mxu0 0.0
        %1266 = vmatmul.mubr.f32.gmra.mrb[0].mxu0 %v515
        %v1267 = vpop.f32.mrb[0].mxu0
        %v1268 = vadd.f32 %v471, %v1267
        %v1269 = vpop.f32.mrb[0].mxu0
        %v1270 = vadd.f32 %v475, %v1269
        %1271 = vmatprep.mubr.f32.mxu0 0.0
        %1272 = vmatmul.mubr.f32.gmra.mrb[0].mxu0 %v518
        %v1273 = vpop.f32.mrb[0].mxu0
        %v1274 = vadd.f32 %v471, %v1273
        %v1275 = vpop.f32.mrb[0].mxu0
        %v1276 = vadd.f32 %v475, %v1275
        %1277 = vmatprep.mubr.f32.mxu0 0.0
        %1278 = vmatmul.mubr.f32.gmra.mrb[0].mxu0 %v521
        %v1279 = vpop.f32.mrb[0].mxu0
        %v1280 = vadd.f32 %v471, %v1279
        %v1281 = vpop.f32.mrb[0].mxu0
        %v1282 = vadd.f32 %v475, %v1281
        %1283 = vmatprep.mubr.f32.mxu0 0.0
        %1284 = vmatmul.mubr.f32.gmra.mrb[0].mxu0 %v524
        %v1285 = vpop.f32.mrb[0].mxu0
        %v1286 = vadd.f32 %v471, %v1285
        %v1287 = vpop.f32.mrb[0].mxu0
        %v1288 = vadd.f32 %v475, %v1287
        %1289 = vmatprep.mubr.f32.mxu0 0.0
        %1290 = vmatmul.mubr.f32.gmra.mrb[0].mxu0 %v527
        %v1291 = vpop.f32.mrb[0].mxu0
        %v1292 = vadd.f32 %v471, %v1291
        %v1293 = vpop.f32.mrb[0].mxu0
        %v1294 = vadd.f32 %v475, %v1293
        %1295 = vmatprep.mubr.f32.mxu0 0.0
        %1296 = vmatmul.mubr.f32.gmra.mrb[0].mxu0 %v530
        %v1297 = vpop.f32.mrb[0].mxu0
        %v1298 = vadd.f32 %v471, %v1297
        %v1299 = vpop.f32.mrb[0].mxu0
        %v1300 = vadd.f32 %v475, %v1299
        %1301 = vmatprep.mubr.f32.mxu0 0.0
        %1302 = vmatmul.mubr.f32.gmra.mrb[0].mxu0 %v533
        %v1303 = vpop.f32.mrb[0].mxu0
        %v1304 = vadd.f32 %v471, %v1303
        %v1305 = vpop.f32.mrb[0].mxu0
        %v1306 = vadd.f32 %v475, %v1305
        %1307 = vmatprep.mubr.f32.mxu0 0.0
        %1308 = vmatmul.mubr.f32.gmra.mrb[0].mxu0 %v536
        %v1309 = vpop.f32.mrb[0].mxu0
        %v1310 = vadd.f32 %v471, %v1309
        %v1311 = vpop.f32.mrb[0].mxu0
        %v1312 = vadd.f32 %v475, %v1311
        %1313 = vmatprep.mubr.f32.mxu0 0.0
        %1314 = vmatmul.mubr.f32.gmra.mrb[0].mxu0 %v539
        %v1315 = vpop.f32.mrb[0].mxu0
        %v1316 = vadd.f32 %v471, %v1315
        %v1317 = vpop.f32.mrb[0].mxu0
        %v1318 = vadd.f32 %v475, %v1317
        %1319 = vmatprep.mubr.f32.mxu0 0.0
        %1320 = vmatmul.mubr.f32.gmra.mrb[0].mxu0 %v542
        %v1321 = vpop.f32.mrb[0].mxu0
        %v1322 = vadd.f32 %v471, %v1321
        %v1323 = vpop.f32.mrb[0].mxu0
        %v1324 = vadd.f32 %v475, %v1323
        %1325 = vmatprep.mubr.f32.mxu0 0.0
        %1326 = vmatmul.mubr.f32.gmra.mrb[0].mxu0 %v545
        %v1327 = vpop.f32.mrb[0].mxu0
        %v1328 = vadd.f32 %v471, %v1327
        %v1329 = vpop.f32.mrb[0].mxu0
        %v1330 = vadd.f32 %v475, %v1329
        %1331 = vmatprep.mubr.f32.mxu0 0.0
        %1332 = vmatmul.mubr.f32.gmra.mrb[0].mxu0 %v548
        %v1333 = vpop.f32.mrb[0].mxu0
        %v1334 = vadd.f32 %v471, %v1333
        %v1335 = vpop.f32.mrb[0].mxu0
        %v1336 = vadd.f32 %v475, %v1335
        %1337 = vmatprep.mubr.f32.mxu0 0.0
        %1338 = vmatmul.mubr.f32.gmra.mrb[0].mxu0 %v551
        %v1339 = vpop.f32.mrb[0].mxu0
        %v1340 = vadd.f32 %v471, %v1339
        %v1341 = vpop.f32.mrb[0].mxu0
        %v1342 = vadd.f32 %v475, %v1341
        %1343 = vmatprep.mubr.f32.mxu0 0.0
        %1344 = vmatmul.mubr.f32.gmra.mrb[0].mxu0 %v554
        %v1345 = vpop.f32.mrb[0].mxu0
        %v1346 = vadd.f32 %v471, %v1345
        %v1347 = vpop.f32.mrb[0].mxu0
        %v1348 = vadd.f32 %v475, %v1347
        %1349 = vmatprep.mubr.f32.mxu0 0.0
        %1350 = vmatmul.mubr.f32.gmra.mrb[0].mxu0 %v557
        %v1351 = vpop.f32.mrb[0].mxu0
        %v1352 = vadd.f32 %v471, %v1351
        %v1353 = vpop.f32.mrb[0].mxu0
        %v1354 = vadd.f32 %v475, %v1353
        %1355 = vmatprep.mubr.f32.mxu0 0.0
        %1356 = vmatmul.mubr.f32.gmra.mrb[0].mxu0 %v560
        %v1357 = vpop.f32.mrb[0].mxu0
        %v1358 = vadd.f32 %v471, %v1357
        %v1359 = vpop.f32.mrb[0].mxu0
        %v1360 = vadd.f32 %v475, %v1359
        %1361 = vmatprep.mubr.f32.mxu0 0.0
        %1362 = vmatmul.mubr.f32.gmra.mrb[0].mxu0 %v563
        %v1363 = vpop.f32.mrb[0].mxu0
        %v1364 = vadd.f32 %v471, %v1363
        %v1365 = vpop.f32.mrb[0].mxu0
        %v1366 = vadd.f32 %v475, %v1365
        %1367 = vmatprep.mubr.f32.mxu0 0.0
        %1368 = vmatmul.mubr.f32.gmra.mrb[0].mxu0 %v566
        %v1369 = vpop.f32.mrb[0].mxu0
        %v1370 = vadd.f32 %v471, %v1369
        %v1371 = vpop.f32.mrb[0].mxu0
        %v1372 = vadd.f32 %v475, %v1371
        %1373 = vmatprep.mubr.f32.mxu0 0.0
        %1374 = vmatmul.mubr.f32.gmra.mrb[0].mxu0 %v569
        %v1375 = vpop.f32.mrb[0].mxu0
        %v1376 = vadd.f32 %v471, %v1375
        %v1377 = vpop.f32.mrb[0].mxu0
        %v1378 = vadd.f32 %v475, %v1377
        %1379 = vmatprep.mubr.f32.mxu0 0.0
        %1380 = vmatmul.mubr.f32.gmra.mrb[0].mxu0 %v572
        %v1381 = vpop.f32.mrb[0].mxu0
        %v1382 = vadd.f32 %v471, %v1381
        %v1383 = vpop.f32.mrb[0].mxu0
        %v1384 = vadd.f32 %v475, %v1383
        %1385 = vmatprep.mubr.f32.mxu0 0.0
        %1386 = vmatmul.mubr.f32.gmra.mrb[0].mxu0 %v575
        %v1387 = vpop.f32.mrb[0].mxu0
        %v1388 = vadd.f32 %v471, %v1387
        %v1389 = vpop.f32.mrb[0].mxu0
        %v1390 = vadd.f32 %v475, %v1389
        %1391 = vmatprep.mubr.f32.mxu0 0.0
        %1392 = vmatmul.mubr.f32.gmra.mrb[0].mxu0 %v578
        %v1393 = vpop.f32.mrb[0].mxu0
        %v1394 = vadd.f32 %v471, %v1393
        %v1395 = vpop.f32.mrb[0].mxu0
        %v1396 = vadd.f32 %v475, %v1395
        %1397 = vmatprep.mubr.f32.mxu0 0.0
        %1398 = vmatmul.mubr.f32.gmra.mrb[0].mxu0 %v581
        %v1399 = vpop.f32.mrb[0].mxu0
        %v1400 = vadd.f32 %v471, %v1399
        %v1401 = vpop.f32.mrb[0].mxu0
        %v1402 = vadd.f32 %v475, %v1401
        %1403 = vmatprep.mubr.f32.mxu0 0.0
        %1404 = vmatmul.mubr.f32.gmra.mrb[0].mxu0 %v584
        %v1405 = vpop.f32.mrb[0].mxu0
        %v1406 = vadd.f32 %v471, %v1405
        %v1407 = vpop.f32.mrb[0].mxu0
        %v1408 = vadd.f32 %v475, %v1407
        %1409 = vmatprep.mubr.f32.mxu0 0.0
        %1410 = vmatmul.mubr.f32.gmra.mrb[0].mxu0 %v587
        %v1411 = vpop.f32.mrb[0].mxu0
        %v1412 = vadd.f32 %v471, %v1411
        %v1413 = vpop.f32.mrb[0].mxu0
        %v1414 = vadd.f32 %v475, %v1413
        %1415 = vmatprep.mubr.f32.mxu0 0.0
        %1416 = vmatmul.mubr.f32.gmra.mrb[0].mxu0 %v590
        %v1417 = vpop.f32.mrb[0].mxu0
        %v1418 = vadd.f32 %v471, %v1417
        %v1419 = vpop.f32.mrb[0].mxu0
        %v1420 = vadd.f32 %v475, %v1419
        %1421 = vmatprep.mubr.f32.mxu0 0.0
        %1422 = vmatmul.mubr.f32.gmra.mrb[0].mxu0 %v593
        %v1423 = vpop.f32.mrb[0].mxu0
        %v1424 = vadd.f32 %v471, %v1423
        %v1425 = vpop.f32.mrb[0].mxu0
        %v1426 = vadd.f32 %v475, %v1425
        %1427 = vmatprep.mubr.f32.mxu0 0.0
        %1428 = vmatmul.mubr.f32.gmra.mrb[0].mxu0 %v596
        %v1429 = vpop.f32.mrb[0].mxu0
        %v1430 = vadd.f32 %v471, %v1429
        %v1431 = vpop.f32.mrb[0].mxu0
        %v1432 = vadd.f32 %v475, %v1431
        %1433 = vmatprep.mubr.f32.mxu0 0.0
        %1434 = vmatmul.mubr.f32.gmra.mrb[0].mxu0 %v599
        %v1435 = vpop.f32.mrb[0].mxu0
        %v1436 = vadd.f32 %v471, %v1435
        %v1437 = vpop.f32.mrb[0].mxu0
        %v1438 = vadd.f32 %v475, %v1437
        %1439 = vmatprep.mubr.f32.mxu0 0.0
        %1440 = vmatmul.mubr.f32.gmra.mrb[0].mxu0 %v602
        %v1441 = vpop.f32.mrb[0].mxu0
        %v1442 = vadd.f32 %v471, %v1441
        %v1443 = vpop.f32.mrb[0].mxu0
        %v1444 = vadd.f32 %v475, %v1443
        %1445 = vmatprep.mubr.f32.mxu0 0.0
        %1446 = vmatmul.mubr.f32.gmra.mrb[0].mxu0 %v605
        %v1447 = vpop.f32.mrb[0].mxu0
        %v1448 = vadd.f32 %v471, %v1447
        %v1449 = vpop.f32.mrb[0].mxu0
        %v1450 = vadd.f32 %v475, %v1449
        %1451 = vmatprep.mubr.f32.mxu0 0.0
        %1452 = vmatmul.mubr.f32.gmra.mrb[0].mxu0 %v608
        %v1453 = vpop.f32.mrb[0].mxu0
        %v1454 = vadd.f32 %v471, %v1453
        %v1455 = vpop.f32.mrb[0].mxu0
        %v1456 = vadd.f32 %v475, %v1455
        %1457 = vmatprep.mubr.f32.mxu0 0.0
        %1458 = vmatmul.mubr.f32.gmra.mrb[0].mxu0 %v611
        %v1459 = vpop.f32.mrb[0].mxu0
        %v1460 = vadd.f32 %v471, %v1459
        %v1461 = vpop.f32.mrb[0].mxu0
        %v1462 = vadd.f32 %v475, %v1461
        %1463 = vmatprep.mubr.f32.mxu0 0.0
        %1464 = vmatmul.mubr.f32.gmra.mrb[0].mxu0 %v614
        %v1465 = vpop.f32.mrb[0].mxu0
        %v1466 = vadd.f32 %v471, %v1465
        %v1467 = vpop.f32.mrb[0].mxu0
        %v1468 = vadd.f32 %v475, %v1467
        %1469 = vmatprep.mubr.f32.mxu0 0.0
        %1470 = vmatmul.mubr.f32.gmra.mrb[0].mxu0 %v617
        %v1471 = vpop.f32.mrb[0].mxu0
        %v1472 = vadd.f32 %v471, %v1471
        %v1473 = vpop.f32.mrb[0].mxu0
        %v1474 = vadd.f32 %v475, %v1473
        %1475 = vmatprep.mubr.f32.mxu0 0.0
        %1476 = vmatmul.mubr.f32.gmra.mrb[0].mxu0 %v620
        %v1477 = vpop.f32.mrb[0].mxu0
        %v1478 = vadd.f32 %v471, %v1477
        %v1479 = vpop.f32.mrb[0].mxu0
        %v1480 = vadd.f32 %v475, %v1479
        %1481 = vmatprep.mubr.f32.mxu0 0.0
        %1482 = vmatmul.mubr.f32.gmra.mrb[0].mxu0 %v623
        %v1483 = vpop.f32.mrb[0].mxu0
        %v1484 = vadd.f32 %v471, %v1483
        %v1485 = vpop.f32.mrb[0].mxu0
        %v1486 = vadd.f32 %v475, %v1485
        %1487 = vmatprep.mubr.f32.mxu0 0.0
        %1488 = vmatmul.mubr.f32.gmra.mrb[0].mxu0 %v626
        %v1489 = vpop.f32.mrb[0].mxu0
        %v1490 = vadd.f32 %v471, %v1489
        %v1491 = vpop.f32.mrb[0].mxu0
        %v1492 = vadd.f32 %v475, %v1491
        %1493 = vmatprep.mubr.f32.mxu0 0.0
        %1494 = vmatmul.mubr.f32.gmra.mrb[0].mxu0 %v629
        %v1495 = vpop.f32.mrb[0].mxu0
        %v1496 = vadd.f32 %v471, %v1495
        %v1497 = vpop.f32.mrb[0].mxu0
        %v1498 = vadd.f32 %v475, %v1497
        %1499 = vmatprep.mubr.f32.mxu0 0.0
        %1500 = vmatmul.mubr.f32.gmra.mrb[0].mxu0 %v632
        %v1501 = vpop.f32.mrb[0].mxu0
        %v1502 = vadd.f32 %v471, %v1501
        %v1503 = vpop.f32.mrb[0].mxu0
        %v1504 = vadd.f32 %v475, %v1503
        %1505 = vmatprep.mubr.f32.mxu0 0.0
        %1506 = vmatmul.mubr.f32.gmra.mrb[0].mxu0 %v635
        %v1507 = vpop.f32.mrb[0].mxu0
        %v1508 = vadd.f32 %v471, %v1507
        %v1509 = vpop.f32.mrb[0].mxu0
        %v1510 = vadd.f32 %v475, %v1509
        %1511 = vmatprep.mubr.f32.mxu0 0.0
        %1512 = vmatmul.mubr.f32.gmra.mrb[0].mxu0 %v638
        %v1513 = vpop.f32.mrb[0].mxu0
        %v1514 = vadd.f32 %v471, %v1513
        %v1515 = vpop.f32.mrb[0].mxu0
        %v1516 = vadd.f32 %v475, %v1515
        %1517 = vmatprep.mubr.f32.mxu0 0.0
        %1518 = vmatmul.mubr.f32.gmra.mrb[0].mxu0 %v641
        %v1519 = vpop.f32.mrb[0].mxu0
        %v1520 = vadd.f32 %v471, %v1519
        %v1521 = vpop.f32.mrb[0].mxu0
        %v1522 = vadd.f32 %v475, %v1521
        %1523 = vmatprep.mubr.f32.mxu0 0.0
        %1524 = vmatmul.mubr.f32.gmra.mrb[0].mxu0 %v644
        %v1525 = vpop.f32.mrb[0].mxu0
        %v1526 = vadd.f32 %v471, %v1525
        %v1527 = vpop.f32.mrb[0].mxu0
        %v1528 = vadd.f32 %v475, %v1527
        %1529 = vmatprep.mubr.f32.mxu0 0.0
        %1530 = vmatmul.mubr.f32.gmra.mrb[0].mxu0 %v647
        %v1531 = vpop.f32.mrb[0].mxu0
        %v1532 = vadd.f32 %v471, %v1531
        %v1533 = vpop.f32.mrb[0].mxu0
        %v1534 = vadd.f32 %v475, %v1533
        %1535 = vmatprep.mubr.f32.mxu0 0.0
        %1536 = vmatmul.mubr.f32.gmra.mrb[0].mxu0 %v650
        %v1537 = vpop.f32.mrb[0].mxu0
        %v1538 = vadd.f32 %v471, %v1537
        %v1539 = vpop.f32.mrb[0].mxu0
        %v1540 = vadd.f32 %v475, %v1539
        %1541 = vmatprep.mubr.f32.mxu0 0.0
        %1542 = vmatmul.mubr.f32.gmra.mrb[0].mxu0 %v653
        %v1543 = vpop.f32.mrb[0].mxu0
        %v1544 = vadd.f32 %v471, %v1543
        %v1545 = vpop.f32.mrb[0].mxu0
        %v1546 = vadd.f32 %v475, %v1545
        %1547 = vmatprep.mubr.f32.mxu0 0.0
        %1548 = vmatmul.mubr.f32.gmra.mrb[0].mxu0 %v656
        %v1549 = vpop.f32.mrb[0].mxu0
        %v1550 = vadd.f32 %v471, %v1549
        %v1551 = vpop.f32.mrb[0].mxu0
        %v1552 = vadd.f32 %v475, %v1551
        %1553 = vmatprep.mubr.f32.mxu0 0.0
        %1554 = vmatmul.mubr.f32.gmra.mrb[0].mxu0 %v659
        %v1555 = vpop.f32.mrb[0].mxu0
        %v1556 = vadd.f32 %v471, %v1555
        %v1557 = vpop.f32.mrb[0].mxu0
        %v1558 = vadd.f32 %v475, %v1557
        %1559 = vmatprep.mubr.f32.mxu0 0.0
        %1560 = vmatmul.mubr.f32.gmra.mrb[0].mxu0 %v662
        %v1561 = vpop.f32.mrb[0].mxu0
        %v1562 = vadd.f32 %v471, %v1561
        %v1563 = vpop.f32.mrb[0].mxu0
        %v1564 = vadd.f32 %v475, %v1563
        %1565 = vmatprep.mubr.f32.mxu0 0.0
        %1566 = vmatmul.mubr.f32.gmra.mrb[0].mxu0 %v665
        %v1567 = vpop.f32.mrb[0].mxu0
        %v1568 = vadd.f32 %v471, %v1567
        %v1569 = vpop.f32.mrb[0].mxu0
        %v1570 = vadd.f32 %v475, %v1569
        %1571 = vmatprep.mubr.f32.mxu0 0.0
        %1572 = vmatmul.mubr.f32.gmra.mrb[0].mxu0 %v668
        %v1573 = vpop.f32.mrb[0].mxu0
        %v1574 = vadd.f32 %v471, %v1573
        %v1575 = vpop.f32.mrb[0].mxu0
        %v1576 = vadd.f32 %v475, %v1575
        %1577 = vmatprep.mubr.f32.mxu0 0.0
        %1578 = vmatmul.mubr.f32.gmra.mrb[0].mxu0 %v671
        %v1579 = vpop.f32.mrb[0].mxu0
        %v1580 = vadd.f32 %v471, %v1579
        %v1581 = vpop.f32.mrb[0].mxu0
        %v1582 = vadd.f32 %v475, %v1581
        %1583 = vdwg.mxu0
        %v1584 = vmax.f32 %v753, 0.0
        %v1585 = vmax.f32 %v755, 0.0
        %v1586 = vmax.f32 %v1202, 0.0
        %v1587 = vmax.f32 %v1204, 0.0
        %v1588 = vmax.f32 %v759, 0.0
        %v1589 = vmax.f32 %v761, 0.0
        %v1590 = vmax.f32 %v1208, 0.0
        %v1591 = vmax.f32 %v1210, 0.0
        %v1592 = vmax.f32 %v765, 0.0
        %v1593 = vmax.f32 %v767, 0.0
        %v1594 = vmax.f32 %v1214, 0.0
        %v1595 = vmax.f32 %v1216, 0.0
        %v1596 = vmax.f32 %v771, 0.0
        %v1597 = vmax.f32 %v773, 0.0
        %v1598 = vmax.f32 %v1220, 0.0
        %v1599 = vmax.f32 %v1222, 0.0
        %v1600 = vmax.f32 %v777, 0.0
        %v1601 = vmax.f32 %v779, 0.0
        %v1602 = vmax.f32 %v1226, 0.0
        %v1603 = vmax.f32 %v1228, 0.0
        %v1604 = vmax.f32 %v783, 0.0
        %v1605 = vmax.f32 %v785, 0.0
        %v1606 = vmax.f32 %v1232, 0.0
        %v1607 = vmax.f32 %v1234, 0.0
        %v1608 = vmax.f32 %v789, 0.0
        %v1609 = vmax.f32 %v791, 0.0
        %v1610 = vmax.f32 %v1238, 0.0
        %v1611 = vmax.f32 %v1240, 0.0
        %v1612 = vmax.f32 %v795, 0.0
        %v1613 = vmax.f32 %v797, 0.0
        %v1614 = vmax.f32 %v1244, 0.0
        %v1615 = vmax.f32 %v1246, 0.0
        %v1616 = vmax.f32 %v801, 0.0
        %v1617 = vmax.f32 %v803, 0.0
        %v1618 = vmax.f32 %v1250, 0.0
        %v1619 = vmax.f32 %v1252, 0.0
        %v1620 = vmax.f32 %v807, 0.0
        %v1621 = vmax.f32 %v809, 0.0
        %v1622 = vmax.f32 %v1256, 0.0
        %v1623 = vmax.f32 %v1258, 0.0
        %v1624 = vmax.f32 %v813, 0.0
        %v1625 = vmax.f32 %v815, 0.0
        %v1626 = vmax.f32 %v1262, 0.0
        %v1627 = vmax.f32 %v1264, 0.0
        %v1628 = vmax.f32 %v819, 0.0
        %v1629 = vmax.f32 %v821, 0.0
        %v1630 = vmax.f32 %v1268, 0.0
        %v1631 = vmax.f32 %v1270, 0.0
        %v1632 = vmax.f32 %v825, 0.0
        %v1633 = vmax.f32 %v827, 0.0
        %v1634 = vmax.f32 %v1274, 0.0
        %v1635 = vmax.f32 %v1276, 0.0
        %v1636 = vmax.f32 %v831, 0.0
        %v1637 = vmax.f32 %v833, 0.0
        %v1638 = vmax.f32 %v1280, 0.0
        %v1639 = vmax.f32 %v1282, 0.0
        %v1640 = vmax.f32 %v837, 0.0
        %v1641 = vmax.f32 %v839, 0.0
        %v1642 = vmax.f32 %v1286, 0.0
        %v1643 = vmax.f32 %v1288, 0.0
        %v1644 = vmax.f32 %v843, 0.0
        %v1645 = vmax.f32 %v845, 0.0
        %v1646 = vmax.f32 %v1292, 0.0
        %v1647 = vmax.f32 %v1294, 0.0
        %v1648 = vmax.f32 %v849, 0.0
        %v1649 = vmax.f32 %v851, 0.0
        %v1650 = vmax.f32 %v1298, 0.0
        %v1651 = vmax.f32 %v1300, 0.0
        %v1652 = vmax.f32 %v855, 0.0
        %v1653 = vmax.f32 %v857, 0.0
        %v1654 = vmax.f32 %v1304, 0.0
        %v1655 = vmax.f32 %v1306, 0.0
        %v1656 = vmax.f32 %v861, 0.0
        %v1657 = vmax.f32 %v863, 0.0
        %v1658 = vmax.f32 %v1310, 0.0
        %v1659 = vmax.f32 %v1312, 0.0
        %v1660 = vmax.f32 %v867, 0.0
        %v1661 = vmax.f32 %v869, 0.0
        %v1662 = vmax.f32 %v1316, 0.0
        %v1663 = vmax.f32 %v1318, 0.0
        %v1664 = vmax.f32 %v873, 0.0
        %v1665 = vmax.f32 %v875, 0.0
        %v1666 = vmax.f32 %v1322, 0.0
        %v1667 = vmax.f32 %v1324, 0.0
        %v1668 = vmax.f32 %v879, 0.0
        %v1669 = vmax.f32 %v881, 0.0
        %v1670 = vmax.f32 %v1328, 0.0
        %v1671 = vmax.f32 %v1330, 0.0
        %v1672 = vmax.f32 %v885, 0.0
        %v1673 = vmax.f32 %v887, 0.0
        %v1674 = vmax.f32 %v1334, 0.0
        %v1675 = vmax.f32 %v1336, 0.0
        %v1676 = vmax.f32 %v891, 0.0
        %v1677 = vmax.f32 %v893, 0.0
        %v1678 = vmax.f32 %v1340, 0.0
        %v1679 = vmax.f32 %v1342, 0.0
        %v1680 = vmax.f32 %v897, 0.0
        %v1681 = vmax.f32 %v899, 0.0
        %v1682 = vmax.f32 %v1346, 0.0
        %v1683 = vmax.f32 %v1348, 0.0
        %v1684 = vmax.f32 %v903, 0.0
        %v1685 = vmax.f32 %v905, 0.0
        %v1686 = vmax.f32 %v1352, 0.0
        %v1687 = vmax.f32 %v1354, 0.0
        %v1688 = vmax.f32 %v909, 0.0
        %v1689 = vmax.f32 %v911, 0.0
        %v1690 = vmax.f32 %v1358, 0.0
        %v1691 = vmax.f32 %v1360, 0.0
        %v1692 = vmax.f32 %v915, 0.0
        %v1693 = vmax.f32 %v917, 0.0
        %v1694 = vmax.f32 %v1364, 0.0
        %v1695 = vmax.f32 %v1366, 0.0
        %v1696 = vmax.f32 %v921, 0.0
        %v1697 = vmax.f32 %v923, 0.0
        %v1698 = vmax.f32 %v1370, 0.0
        %v1699 = vmax.f32 %v1372, 0.0
        %v1700 = vmax.f32 %v927, 0.0
        %v1701 = vmax.f32 %v929, 0.0
        %v1702 = vmax.f32 %v1376, 0.0
        %v1703 = vmax.f32 %v1378, 0.0
        %v1704 = vmax.f32 %v933, 0.0
        %v1705 = vmax.f32 %v935, 0.0
        %v1706 = vmax.f32 %v1382, 0.0
        %v1707 = vmax.f32 %v1384, 0.0
        %v1708 = vmax.f32 %v939, 0.0
        %v1709 = vmax.f32 %v941, 0.0
        %v1710 = vmax.f32 %v1388, 0.0
        %v1711 = vmax.f32 %v1390, 0.0
        %v1712 = vmax.f32 %v945, 0.0
        %v1713 = vmax.f32 %v947, 0.0
        %v1714 = vmax.f32 %v1394, 0.0
        %v1715 = vmax.f32 %v1396, 0.0
        %v1716 = vmax.f32 %v951, 0.0
        %v1717 = vmax.f32 %v953, 0.0
        %v1718 = vmax.f32 %v1400, 0.0
        %v1719 = vmax.f32 %v1402, 0.0
        %v1720 = vmax.f32 %v957, 0.0
        %v1721 = vmax.f32 %v959, 0.0
        %v1722 = vmax.f32 %v1406, 0.0
        %v1723 = vmax.f32 %v1408, 0.0
        %v1724 = vmax.f32 %v963, 0.0
        %v1725 = vmax.f32 %v965, 0.0
        %v1726 = vmax.f32 %v1412, 0.0
        %v1727 = vmax.f32 %v1414, 0.0
        %v1728 = vmax.f32 %v969, 0.0
        %v1729 = vmax.f32 %v971, 0.0
        %v1730 = vmax.f32 %v1418, 0.0
        %v1731 = vmax.f32 %v1420, 0.0
        %v1732 = vmax.f32 %v975, 0.0
        %v1733 = vmax.f32 %v977, 0.0
        %v1734 = vmax.f32 %v1424, 0.0
        %v1735 = vmax.f32 %v1426, 0.0
        %v1736 = vmax.f32 %v981, 0.0
        %v1737 = vmax.f32 %v983, 0.0
        %v1738 = vmax.f32 %v1430, 0.0
        %v1739 = vmax.f32 %v1432, 0.0
        %v1740 = vmax.f32 %v987, 0.0
        %v1741 = vmax.f32 %v989, 0.0
        %v1742 = vmax.f32 %v1436, 0.0
        %v1743 = vmax.f32 %v1438, 0.0
        %v1744 = vmax.f32 %v993, 0.0
        %v1745 = vmax.f32 %v995, 0.0
        %v1746 = vmax.f32 %v1442, 0.0
        %v1747 = vmax.f32 %v1444, 0.0
        %v1748 = vmax.f32 %v999, 0.0
        %v1749 = vmax.f32 %v1001, 0.0
        %v1750 = vmax.f32 %v1448, 0.0
        %v1751 = vmax.f32 %v1450, 0.0
        %v1752 = vmax.f32 %v1005, 0.0
        %v1753 = vmax.f32 %v1007, 0.0
        %v1754 = vmax.f32 %v1454, 0.0
        %v1755 = vmax.f32 %v1456, 0.0
        %v1756 = vmax.f32 %v1011, 0.0
        %v1757 = vmax.f32 %v1013, 0.0
        %v1758 = vmax.f32 %v1460, 0.0
        %v1759 = vmax.f32 %v1462, 0.0
        %v1760 = vmax.f32 %v1017, 0.0
        %v1761 = vmax.f32 %v1019, 0.0
        %v1762 = vmax.f32 %v1466, 0.0
        %v1763 = vmax.f32 %v1468, 0.0
        %v1764 = vmax.f32 %v1023, 0.0
        %v1765 = vmax.f32 %v1025, 0.0
        %v1766 = vmax.f32 %v1472, 0.0
        %v1767 = vmax.f32 %v1474, 0.0
        %v1768 = vmax.f32 %v1029, 0.0
        %v1769 = vmax.f32 %v1031, 0.0
        %v1770 = vmax.f32 %v1478, 0.0
        %v1771 = vmax.f32 %v1480, 0.0
        %v1772 = vmax.f32 %v1035, 0.0
        %v1773 = vmax.f32 %v1037, 0.0
        %v1774 = vmax.f32 %v1484, 0.0
        %v1775 = vmax.f32 %v1486, 0.0
        %v1776 = vmax.f32 %v1041, 0.0
        %v1777 = vmax.f32 %v1043, 0.0
        %v1778 = vmax.f32 %v1490, 0.0
        %v1779 = vmax.f32 %v1492, 0.0
        %v1780 = vmax.f32 %v1047, 0.0
        %v1781 = vmax.f32 %v1049, 0.0
        %v1782 = vmax.f32 %v1496, 0.0
        %v1783 = vmax.f32 %v1498, 0.0
        %v1784 = vmax.f32 %v1053, 0.0
        %v1785 = vmax.f32 %v1055, 0.0
        %v1786 = vmax.f32 %v1502, 0.0
        %v1787 = vmax.f32 %v1504, 0.0
        %v1788 = vmax.f32 %v1059, 0.0
        %v1789 = vmax.f32 %v1061, 0.0
        %v1790 = vmax.f32 %v1508, 0.0
        %v1791 = vmax.f32 %v1510, 0.0
        %v1792 = vmax.f32 %v1065, 0.0
        %v1793 = vmax.f32 %v1067, 0.0
        %v1794 = vmax.f32 %v1514, 0.0
        %v1795 = vmax.f32 %v1516, 0.0
        %v1796 = vmax.f32 %v1071, 0.0
        %v1797 = vmax.f32 %v1073, 0.0
        %v1798 = vmax.f32 %v1520, 0.0
        %v1799 = vmax.f32 %v1522, 0.0
        %v1800 = vmax.f32 %v1077, 0.0
        %v1801 = vmax.f32 %v1079, 0.0
        %v1802 = vmax.f32 %v1526, 0.0
        %v1803 = vmax.f32 %v1528, 0.0
        %v1804 = vmax.f32 %v1083, 0.0
        %v1805 = vmax.f32 %v1085, 0.0
        %v1806 = vmax.f32 %v1532, 0.0
        %v1807 = vmax.f32 %v1534, 0.0
        %v1808 = vmax.f32 %v1089, 0.0
        %v1809 = vmax.f32 %v1091, 0.0
        %v1810 = vmax.f32 %v1538, 0.0
        %v1811 = vmax.f32 %v1540, 0.0
        %v1812 = vmax.f32 %v1095, 0.0
        %v1813 = vmax.f32 %v1097, 0.0
        %v1814 = vmax.f32 %v1544, 0.0
        %v1815 = vmax.f32 %v1546, 0.0
        %v1816 = vmax.f32 %v1101, 0.0
        %v1817 = vmax.f32 %v1103, 0.0
        %v1818 = vmax.f32 %v1550, 0.0
        %v1819 = vmax.f32 %v1552, 0.0
        %v1820 = vmax.f32 %v1107, 0.0
        %v1821 = vmax.f32 %v1109, 0.0
        %v1822 = vmax.f32 %v1556, 0.0
        %v1823 = vmax.f32 %v1558, 0.0
        %v1824 = vmax.f32 %v1113, 0.0
        %v1825 = vmax.f32 %v1115, 0.0
        %v1826 = vmax.f32 %v1562, 0.0
        %v1827 = vmax.f32 %v1564, 0.0
        %v1828 = vmax.f32 %v1119, 0.0
        %v1829 = vmax.f32 %v1121, 0.0
        %v1830 = vmax.f32 %v1568, 0.0
        %v1831 = vmax.f32 %v1570, 0.0
        %v1832 = vmax.f32 %v1125, 0.0
        %v1833 = vmax.f32 %v1127, 0.0
        %v1834 = vmax.f32 %v1574, 0.0
        %v1835 = vmax.f32 %v1576, 0.0
        %v1836 = vmax.f32 %v1131, 0.0
        %v1837 = vmax.f32 %v1133, 0.0
        %v1838 = vmax.f32 %v1580, 0.0
        %v1839 = vmax.f32 %v1582, 0.0
        %v1840 = vld [vmem:[%s3] sm:$0xff]
        %v1841 = vld [vmem:[%s3 + $0x8] sm:$0xff]
        %v1842 = vld [vmem:[%s3 + $0x10] sm:$0xff]
        %v1843 = vld [vmem:[%s3 + $0x18] sm:$0xff]
        %v1844 = vld [vmem:[%s3 + $0x20] sm:$0xff]
        %v1845 = vld [vmem:[%s3 + $0x28] sm:$0xff]
        %v1846 = vld [vmem:[%s3 + $0x30] sm:$0xff]
        %v1847 = vld [vmem:[%s3 + $0x38] sm:$0xff]
        %v1848 = vld [vmem:[%s3 + $0x40] sm:$0xff]
        %v1849 = vld [vmem:[%s3 + $0x48] sm:$0xff]
        %v1850 = vld [vmem:[%s3 + $0x50] sm:$0xff]
        %v1851 = vld [vmem:[%s3 + $0x58] sm:$0xff]
        %v1852 = vld [vmem:[%s3 + $0x60] sm:$0xff]
        %v1853 = vld [vmem:[%s3 + $0x68] sm:$0xff]
        %v1854 = vld [vmem:[%s3 + $0x70] sm:$0xff]
        %v1855 = vld [vmem:[%s3 + $0x78] sm:$0xff]
        %v1856 = vld [vmem:[%s3 + $0x80] sm:$0xff]
        %v1857 = vld [vmem:[%s3 + $0x88] sm:$0xff]
        %v1858 = vld [vmem:[%s3 + $0x90] sm:$0xff]
        %v1859 = vld [vmem:[%s3 + $0x98] sm:$0xff]
        %v1860 = vld [vmem:[%s3 + $0xa0] sm:$0xff]
        %v1861 = vld [vmem:[%s3 + $0xa8] sm:$0xff]
        %v1862 = vld [vmem:[%s3 + $0xb0] sm:$0xff]
        %v1863 = vld [vmem:[%s3 + $0xb8] sm:$0xff]
        %v1864 = vld [vmem:[%s3 + $0xc0] sm:$0xff]
        %v1865 = vld [vmem:[%s3 + $0xc8] sm:$0xff]
        %v1866 = vld [vmem:[%s3 + $0xd0] sm:$0xff]
        %v1867 = vld [vmem:[%s3 + $0xd8] sm:$0xff]
        %v1868 = vld [vmem:[%s3 + $0xe0] sm:$0xff]
        %v1869 = vld [vmem:[%s3 + $0xe8] sm:$0xff]
        %v1870 = vld [vmem:[%s3 + $0xf0] sm:$0xff]
        %v1871 = vld [vmem:[%s3 + $0xf8] sm:$0xff]
        %v1872 = vld [vmem:[%s3 + $0x100] sm:$0xff]
        %v1873 = vld [vmem:[%s3 + $0x108] sm:$0xff]
        %v1874 = vld [vmem:[%s3 + $0x110] sm:$0xff]
        %v1875 = vld [vmem:[%s3 + $0x118] sm:$0xff]
        %v1876 = vld [vmem:[%s3 + $0x120] sm:$0xff]
        %v1877 = vld [vmem:[%s3 + $0x128] sm:$0xff]
        %v1878 = vld [vmem:[%s3 + $0x130] sm:$0xff]
        %v1879 = vld [vmem:[%s3 + $0x138] sm:$0xff]
        %v1880 = vld [vmem:[%s3 + $0x140] sm:$0xff]
        %v1881 = vld [vmem:[%s3 + $0x148] sm:$0xff]
        %v1882 = vld [vmem:[%s3 + $0x150] sm:$0xff]
        %v1883 = vld [vmem:[%s3 + $0x158] sm:$0xff]
        %v1884 = vld [vmem:[%s3 + $0x160] sm:$0xff]
        %v1885 = vld [vmem:[%s3 + $0x168] sm:$0xff]
        %v1886 = vld [vmem:[%s3 + $0x170] sm:$0xff]
        %v1887 = vld [vmem:[%s3 + $0x178] sm:$0xff]
        %v1888 = vld [vmem:[%s3 + $0x180] sm:$0xff]
        %v1889 = vld [vmem:[%s3 + $0x188] sm:$0xff]
        %v1890 = vld [vmem:[%s3 + $0x190] sm:$0xff]
        %v1891 = vld [vmem:[%s3 + $0x198] sm:$0xff]
        %v1892 = vld [vmem:[%s3 + $0x1a0] sm:$0xff]
        %v1893 = vld [vmem:[%s3 + $0x1a8] sm:$0xff]
        %v1894 = vld [vmem:[%s3 + $0x1b0] sm:$0xff]
        %v1895 = vld [vmem:[%s3 + $0x1b8] sm:$0xff]
        %v1896 = vld [vmem:[%s3 + $0x1c0] sm:$0xff]
        %v1897 = vld [vmem:[%s3 + $0x1c8] sm:$0xff]
        %v1898 = vld [vmem:[%s3 + $0x1d0] sm:$0xff]
        %v1899 = vld [vmem:[%s3 + $0x1d8] sm:$0xff]
        %v1900 = vld [vmem:[%s3 + $0x1e0] sm:$0xff]
        %v1901 = vld [vmem:[%s3 + $0x1e8] sm:$0xff]
        %v1902 = vld [vmem:[%s3 + $0x1f0] sm:$0xff]
        %v1903 = vld [vmem:[%s3 + $0x1f8] sm:$0xff]
        %v1904 = vld [vmem:[%s3 + $0x200] sm:$0xff]
        %v1905 = vld [vmem:[%s3 + $0x208] sm:$0xff]
        %v1906 = vld [vmem:[%s3 + $0x210] sm:$0xff]
        %v1907 = vld [vmem:[%s3 + $0x218] sm:$0xff]
        %v1908 = vld [vmem:[%s3 + $0x220] sm:$0xff]
        %v1909 = vld [vmem:[%s3 + $0x228] sm:$0xff]
        %v1910 = vld [vmem:[%s3 + $0x230] sm:$0xff]
        %v1911 = vld [vmem:[%s3 + $0x238] sm:$0xff]
        %v1912 = vld [vmem:[%s3 + $0x240] sm:$0xff]
        %v1913 = vld [vmem:[%s3 + $0x248] sm:$0xff]
        %v1914 = vld [vmem:[%s3 + $0x250] sm:$0xff]
        %v1915 = vld [vmem:[%s3 + $0x258] sm:$0xff]
        %v1916 = vld [vmem:[%s3 + $0x260] sm:$0xff]
        %v1917 = vld [vmem:[%s3 + $0x268] sm:$0xff]
        %v1918 = vld [vmem:[%s3 + $0x270] sm:$0xff]
        %v1919 = vld [vmem:[%s3 + $0x278] sm:$0xff]
        %v1920 = vld [vmem:[%s3 + $0x280] sm:$0xff]
        %v1921 = vld [vmem:[%s3 + $0x288] sm:$0xff]
        %v1922 = vld [vmem:[%s3 + $0x290] sm:$0xff]
        %v1923 = vld [vmem:[%s3 + $0x298] sm:$0xff]
        %v1924 = vld [vmem:[%s3 + $0x2a0] sm:$0xff]
        %v1925 = vld [vmem:[%s3 + $0x2a8] sm:$0xff]
        %v1926 = vld [vmem:[%s3 + $0x2b0] sm:$0xff]
        %v1927 = vld [vmem:[%s3 + $0x2b8] sm:$0xff]
        %v1928 = vld [vmem:[%s3 + $0x2c0] sm:$0xff]
        %v1929 = vld [vmem:[%s3 + $0x2c8] sm:$0xff]
        %v1930 = vld [vmem:[%s3 + $0x2d0] sm:$0xff]
        %v1931 = vld [vmem:[%s3 + $0x2d8] sm:$0xff]
        %v1932 = vld [vmem:[%s3 + $0x2e0] sm:$0xff]
        %v1933 = vld [vmem:[%s3 + $0x2e8] sm:$0xff]
        %v1934 = vld [vmem:[%s3 + $0x2f0] sm:$0xff]
        %v1935 = vld [vmem:[%s3 + $0x2f8] sm:$0xff]
        %v1936 = vld [vmem:[%s3 + $0x300] sm:$0xff]
        %v1937 = vld [vmem:[%s3 + $0x308] sm:$0xff]
        %v1938 = vld [vmem:[%s3 + $0x310] sm:$0xff]
        %v1939 = vld [vmem:[%s3 + $0x318] sm:$0xff]
        %v1940 = vld [vmem:[%s3 + $0x320] sm:$0xff]
        %v1941 = vld [vmem:[%s3 + $0x328] sm:$0xff]
        %v1942 = vld [vmem:[%s3 + $0x330] sm:$0xff]
        %v1943 = vld [vmem:[%s3 + $0x338] sm:$0xff]
        %v1944 = vld [vmem:[%s3 + $0x340] sm:$0xff]
        %v1945 = vld [vmem:[%s3 + $0x348] sm:$0xff]
        %v1946 = vld [vmem:[%s3 + $0x350] sm:$0xff]
        %v1947 = vld [vmem:[%s3 + $0x358] sm:$0xff]
        %v1948 = vld [vmem:[%s3 + $0x360] sm:$0xff]
        %v1949 = vld [vmem:[%s3 + $0x368] sm:$0xff]
        %v1950 = vld [vmem:[%s3 + $0x370] sm:$0xff]
        %v1951 = vld [vmem:[%s3 + $0x378] sm:$0xff]
        %v1952 = vld [vmem:[%s3 + $0x380] sm:$0xff]
        %v1953 = vld [vmem:[%s3 + $0x388] sm:$0xff]
        %v1954 = vld [vmem:[%s3 + $0x390] sm:$0xff]
        %v1955 = vld [vmem:[%s3 + $0x398] sm:$0xff]
        %v1956 = vld [vmem:[%s3 + $0x3a0] sm:$0xff]
        %v1957 = vld [vmem:[%s3 + $0x3a8] sm:$0xff]
        %v1958 = vld [vmem:[%s3 + $0x3b0] sm:$0xff]
        %v1959 = vld [vmem:[%s3 + $0x3b8] sm:$0xff]
        %v1960 = vld [vmem:[%s3 + $0x3c0] sm:$0xff]
        %v1961 = vld [vmem:[%s3 + $0x3c8] sm:$0xff]
        %v1962 = vld [vmem:[%s3 + $0x3d0] sm:$0xff]
        %v1963 = vld [vmem:[%s3 + $0x3d8] sm:$0xff]
        %v1964 = vld [vmem:[%s3 + $0x3e0] sm:$0xff]
        %v1965 = vld [vmem:[%s3 + $0x3e8] sm:$0xff]
        %v1966 = vld [vmem:[%s3 + $0x3f0] sm:$0xff]
        %v1967 = vld [vmem:[%s3 + $0x3f8] sm:$0xff]
        %v1968 = vld [vmem:[%s4] sm:$0x3]
        %v1970 = vlaneseq
        %v1971 = vshrl.u32 %v1970, 7
        %v1972 = vsub.s32 0, %v1971
        %v1973 = vrot.slane %v1968, %v1972
        %v1974 = vlaneseq
        %v1975 = vshrl.u32 %v1974, 7
        %v1976 = vsub.s32 1, %v1975
        %v1977 = vrot.slane %v1968, %v1976
        %1980 = vmatprep.subr.mxu0 %v1841
        %1981 = vmatpush1.msra.mxu0 %v1840
        %1982 = vmatprep.subr.mxu0 %v1843
        %1983 = vmatpush1.msra.mxu0 %v1842
        %1984 = vmatprep.subr.mxu0 %v1845
        %1985 = vmatpush1.msra.mxu0 %v1844
        %1986 = vmatprep.subr.mxu0 %v1847
        %1987 = vmatpush1.msra.mxu0 %v1846
        %1988 = vmatprep.subr.mxu0 %v1849
        %1989 = vmatpush1.msra.mxu0 %v1848
        %1990 = vmatprep.subr.mxu0 %v1851
        %1991 = vmatpush1.msra.mxu0 %v1850
        %1992 = vmatprep.subr.mxu0 %v1853
        %1993 = vmatpush1.msra.mxu0 %v1852
        %1994 = vmatprep.subr.mxu0 %v1855
        %1995 = vmatpush1.msra.mxu0 %v1854
        %1996 = vmatprep.subr.mxu0 %v1857
        %1997 = vmatpush1.msra.mxu0 %v1856
        %1998 = vmatprep.subr.mxu0 %v1859
        %1999 = vmatpush1.msra.mxu0 %v1858
        %2000 = vmatprep.subr.mxu0 %v1861
        %2001 = vmatpush1.msra.mxu0 %v1860
        %2002 = vmatprep.subr.mxu0 %v1863
        %2003 = vmatpush1.msra.mxu0 %v1862
        %2004 = vmatprep.subr.mxu0 %v1865
        %2005 = vmatpush1.msra.mxu0 %v1864
        %2006 = vmatprep.subr.mxu0 %v1867
        %2007 = vmatpush1.msra.mxu0 %v1866
        %2008 = vmatprep.subr.mxu0 %v1869
        %2009 = vmatpush1.msra.mxu0 %v1868
        %2010 = vmatprep.subr.mxu0 %v1871
        %2011 = vmatpush1.msra.mxu0 %v1870
        %2012 = vmatprep.subr.mxu0 %v1873
        %2013 = vmatpush1.msra.mxu0 %v1872
        %2014 = vmatprep.subr.mxu0 %v1875
        %2015 = vmatpush1.msra.mxu0 %v1874
        %2016 = vmatprep.subr.mxu0 %v1877
        %2017 = vmatpush1.msra.mxu0 %v1876
        %2018 = vmatprep.subr.mxu0 %v1879
        %2019 = vmatpush1.msra.mxu0 %v1878
        %2020 = vmatprep.subr.mxu0 %v1881
        %2021 = vmatpush1.msra.mxu0 %v1880
        %2022 = vmatprep.subr.mxu0 %v1883
        %2023 = vmatpush1.msra.mxu0 %v1882
        %2024 = vmatprep.subr.mxu0 %v1885
        %2025 = vmatpush1.msra.mxu0 %v1884
        %2026 = vmatprep.subr.mxu0 %v1887
        %2027 = vmatpush1.msra.mxu0 %v1886
        %2028 = vmatprep.subr.mxu0 %v1889
        %2029 = vmatpush1.msra.mxu0 %v1888
        %2030 = vmatprep.subr.mxu0 %v1891
        %2031 = vmatpush1.msra.mxu0 %v1890
        %2032 = vmatprep.subr.mxu0 %v1893
        %2033 = vmatpush1.msra.mxu0 %v1892
        %2034 = vmatprep.subr.mxu0 %v1895
        %2035 = vmatpush1.msra.mxu0 %v1894
        %2036 = vmatprep.subr.mxu0 %v1897
        %2037 = vmatpush1.msra.mxu0 %v1896
        %2038 = vmatprep.subr.mxu0 %v1899
        %2039 = vmatpush1.msra.mxu0 %v1898
        %2040 = vmatprep.subr.mxu0 %v1901
        %2041 = vmatpush1.msra.mxu0 %v1900
        %2042 = vmatprep.subr.mxu0 %v1903
        %2043 = vmatpush1.msra.mxu0 %v1902
        %2044 = vmatprep.mubr.f32.mxu0 %v1585
        %2045 = vmatmul.mubr.f32.gmra.mrb[0].mxu0 %v1584
        %v2046 = vpop.f32.mrb[0].mxu0
        %v2047 = vadd.f32 %v1973, %v2046
        %v2048 = vpop.f32.mrb[0].mxu0
        %v2049 = vadd.f32 %v1977, %v2048
        %2050 = vmatprep.mubr.f32.mxu0 %v1589
        %2051 = vmatmul.mubr.f32.gmra.mrb[0].mxu0 %v1588
        %v2052 = vpop.f32.mrb[0].mxu0
        %v2053 = vadd.f32 %v1973, %v2052
        %v2054 = vpop.f32.mrb[0].mxu0
        %v2055 = vadd.f32 %v1977, %v2054
        %2056 = vmatprep.mubr.f32.mxu0 %v1593
        %2057 = vmatmul.mubr.f32.gmra.mrb[0].mxu0 %v1592
        %v2058 = vpop.f32.mrb[0].mxu0
        %v2059 = vadd.f32 %v1973, %v2058
        %v2060 = vpop.f32.mrb[0].mxu0
        %v2061 = vadd.f32 %v1977, %v2060
        %2062 = vmatprep.mubr.f32.mxu0 %v1597
        %2063 = vmatmul.mubr.f32.gmra.mrb[0].mxu0 %v1596
        %v2064 = vpop.f32.mrb[0].mxu0
        %v2065 = vadd.f32 %v1973, %v2064
        %v2066 = vpop.f32.mrb[0].mxu0
        %v2067 = vadd.f32 %v1977, %v2066
        %2068 = vmatprep.mubr.f32.mxu0 %v1601
        %2069 = vmatmul.mubr.f32.gmra.mrb[0].mxu0 %v1600
        %v2070 = vpop.f32.mrb[0].mxu0
        %v2071 = vadd.f32 %v1973, %v2070
        %v2072 = vpop.f32.mrb[0].mxu0
        %v2073 = vadd.f32 %v1977, %v2072
        %2074 = vmatprep.mubr.f32.mxu0 %v1605
        %2075 = vmatmul.mubr.f32.gmra.mrb[0].mxu0 %v1604
        %v2076 = vpop.f32.mrb[0].mxu0
        %v2077 = vadd.f32 %v1973, %v2076
        %v2078 = vpop.f32.mrb[0].mxu0
        %v2079 = vadd.f32 %v1977, %v2078
        %2080 = vmatprep.mubr.f32.mxu0 %v1609
        %2081 = vmatmul.mubr.f32.gmra.mrb[0].mxu0 %v1608
        %v2082 = vpop.f32.mrb[0].mxu0
        %v2083 = vadd.f32 %v1973, %v2082
        %v2084 = vpop.f32.mrb[0].mxu0
        %v2085 = vadd.f32 %v1977, %v2084
        %2086 = vmatprep.mubr.f32.mxu0 %v1613
        %2087 = vmatmul.mubr.f32.gmra.mrb[0].mxu0 %v1612
        %v2088 = vpop.f32.mrb[0].mxu0
        %v2089 = vadd.f32 %v1973, %v2088
        %v2090 = vpop.f32.mrb[0].mxu0
        %v2091 = vadd.f32 %v1977, %v2090
        %2092 = vmatprep.mubr.f32.mxu0 %v1617
        %2093 = vmatmul.mubr.f32.gmra.mrb[0].mxu0 %v1616
        %v2094 = vpop.f32.mrb[0].mxu0
        %v2095 = vadd.f32 %v1973, %v2094
        %v2096 = vpop.f32.mrb[0].mxu0
        %v2097 = vadd.f32 %v1977, %v2096
        %2098 = vmatprep.mubr.f32.mxu0 %v1621
        %2099 = vmatmul.mubr.f32.gmra.mrb[0].mxu0 %v1620
        %v2100 = vpop.f32.mrb[0].mxu0
        %v2101 = vadd.f32 %v1973, %v2100
        %v2102 = vpop.f32.mrb[0].mxu0
        %v2103 = vadd.f32 %v1977, %v2102
        %2104 = vmatprep.mubr.f32.mxu0 %v1625
        %2105 = vmatmul.mubr.f32.gmra.mrb[0].mxu0 %v1624
        %v2106 = vpop.f32.mrb[0].mxu0
        %v2107 = vadd.f32 %v1973, %v2106
        %v2108 = vpop.f32.mrb[0].mxu0
        %v2109 = vadd.f32 %v1977, %v2108
        %2110 = vmatprep.mubr.f32.mxu0 %v1629
        %2111 = vmatmul.mubr.f32.gmra.mrb[0].mxu0 %v1628
        %v2112 = vpop.f32.mrb[0].mxu0
        %v2113 = vadd.f32 %v1973, %v2112
        %v2114 = vpop.f32.mrb[0].mxu0
        %v2115 = vadd.f32 %v1977, %v2114
        %2116 = vmatprep.mubr.f32.mxu0 %v1633
        %2117 = vmatmul.mubr.f32.gmra.mrb[0].mxu0 %v1632
        %v2118 = vpop.f32.mrb[0].mxu0
        %v2119 = vadd.f32 %v1973, %v2118
        %v2120 = vpop.f32.mrb[0].mxu0
        %v2121 = vadd.f32 %v1977, %v2120
        %2122 = vmatprep.mubr.f32.mxu0 %v1637
        %2123 = vmatmul.mubr.f32.gmra.mrb[0].mxu0 %v1636
        %v2124 = vpop.f32.mrb[0].mxu0
        %v2125 = vadd.f32 %v1973, %v2124
        %v2126 = vpop.f32.mrb[0].mxu0
        %v2127 = vadd.f32 %v1977, %v2126
        %2128 = vmatprep.mubr.f32.mxu0 %v1641
        %2129 = vmatmul.mubr.f32.gmra.mrb[0].mxu0 %v1640
        %v2130 = vpop.f32.mrb[0].mxu0
        %v2131 = vadd.f32 %v1973, %v2130
        %v2132 = vpop.f32.mrb[0].mxu0
        %v2133 = vadd.f32 %v1977, %v2132
        %2134 = vmatprep.mubr.f32.mxu0 %v1645
        %2135 = vmatmul.mubr.f32.gmra.mrb[0].mxu0 %v1644
        %v2136 = vpop.f32.mrb[0].mxu0
        %v2137 = vadd.f32 %v1973, %v2136
        %v2138 = vpop.f32.mrb[0].mxu0
        %v2139 = vadd.f32 %v1977, %v2138
        %2140 = vmatprep.mubr.f32.mxu0 %v1649
        %2141 = vmatmul.mubr.f32.gmra.mrb[0].mxu0 %v1648
        %v2142 = vpop.f32.mrb[0].mxu0
        %v2143 = vadd.f32 %v1973, %v2142
        %v2144 = vpop.f32.mrb[0].mxu0
        %v2145 = vadd.f32 %v1977, %v2144
        %2146 = vmatprep.mubr.f32.mxu0 %v1653
        %2147 = vmatmul.mubr.f32.gmra.mrb[0].mxu0 %v1652
        %v2148 = vpop.f32.mrb[0].mxu0
        %v2149 = vadd.f32 %v1973, %v2148
        %v2150 = vpop.f32.mrb[0].mxu0
        %v2151 = vadd.f32 %v1977, %v2150
        %2152 = vmatprep.mubr.f32.mxu0 %v1657
        %2153 = vmatmul.mubr.f32.gmra.mrb[0].mxu0 %v1656
        %v2154 = vpop.f32.mrb[0].mxu0
        %v2155 = vadd.f32 %v1973, %v2154
        %v2156 = vpop.f32.mrb[0].mxu0
        %v2157 = vadd.f32 %v1977, %v2156
        %2158 = vmatprep.mubr.f32.mxu0 %v1661
        %2159 = vmatmul.mubr.f32.gmra.mrb[0].mxu0 %v1660
        %v2160 = vpop.f32.mrb[0].mxu0
        %v2161 = vadd.f32 %v1973, %v2160
        %v2162 = vpop.f32.mrb[0].mxu0
        %v2163 = vadd.f32 %v1977, %v2162
        %2164 = vmatprep.mubr.f32.mxu0 %v1665
        %2165 = vmatmul.mubr.f32.gmra.mrb[0].mxu0 %v1664
        %v2166 = vpop.f32.mrb[0].mxu0
        %v2167 = vadd.f32 %v1973, %v2166
        %v2168 = vpop.f32.mrb[0].mxu0
        %v2169 = vadd.f32 %v1977, %v2168
        %2170 = vmatprep.mubr.f32.mxu0 %v1669
        %2171 = vmatmul.mubr.f32.gmra.mrb[0].mxu0 %v1668
        %v2172 = vpop.f32.mrb[0].mxu0
        %v2173 = vadd.f32 %v1973, %v2172
        %v2174 = vpop.f32.mrb[0].mxu0
        %v2175 = vadd.f32 %v1977, %v2174
        %2176 = vmatprep.mubr.f32.mxu0 %v1673
        %2177 = vmatmul.mubr.f32.gmra.mrb[0].mxu0 %v1672
        %v2178 = vpop.f32.mrb[0].mxu0
        %v2179 = vadd.f32 %v1973, %v2178
        %v2180 = vpop.f32.mrb[0].mxu0
        %v2181 = vadd.f32 %v1977, %v2180
        %2182 = vmatprep.mubr.f32.mxu0 %v1677
        %2183 = vmatmul.mubr.f32.gmra.mrb[0].mxu0 %v1676
        %v2184 = vpop.f32.mrb[0].mxu0
        %v2185 = vadd.f32 %v1973, %v2184
        %v2186 = vpop.f32.mrb[0].mxu0
        %v2187 = vadd.f32 %v1977, %v2186
        %2188 = vmatprep.mubr.f32.mxu0 %v1681
        %2189 = vmatmul.mubr.f32.gmra.mrb[0].mxu0 %v1680
        %v2190 = vpop.f32.mrb[0].mxu0
        %v2191 = vadd.f32 %v1973, %v2190
        %v2192 = vpop.f32.mrb[0].mxu0
        %v2193 = vadd.f32 %v1977, %v2192
        %2194 = vmatprep.mubr.f32.mxu0 %v1685
        %2195 = vmatmul.mubr.f32.gmra.mrb[0].mxu0 %v1684
        %v2196 = vpop.f32.mrb[0].mxu0
        %v2197 = vadd.f32 %v1973, %v2196
        %v2198 = vpop.f32.mrb[0].mxu0
        %v2199 = vadd.f32 %v1977, %v2198
        %2200 = vmatprep.mubr.f32.mxu0 %v1689
        %2201 = vmatmul.mubr.f32.gmra.mrb[0].mxu0 %v1688
        %v2202 = vpop.f32.mrb[0].mxu0
        %v2203 = vadd.f32 %v1973, %v2202
        %v2204 = vpop.f32.mrb[0].mxu0
        %v2205 = vadd.f32 %v1977, %v2204
        %2206 = vmatprep.mubr.f32.mxu0 %v1693
        %2207 = vmatmul.mubr.f32.gmra.mrb[0].mxu0 %v1692
        %v2208 = vpop.f32.mrb[0].mxu0
        %v2209 = vadd.f32 %v1973, %v2208
        %v2210 = vpop.f32.mrb[0].mxu0
        %v2211 = vadd.f32 %v1977, %v2210
        %2212 = vmatprep.mubr.f32.mxu0 %v1697
        %2213 = vmatmul.mubr.f32.gmra.mrb[0].mxu0 %v1696
        %v2214 = vpop.f32.mrb[0].mxu0
        %v2215 = vadd.f32 %v1973, %v2214
        %v2216 = vpop.f32.mrb[0].mxu0
        %v2217 = vadd.f32 %v1977, %v2216
        %2218 = vmatprep.mubr.f32.mxu0 %v1701
        %2219 = vmatmul.mubr.f32.gmra.mrb[0].mxu0 %v1700
        %v2220 = vpop.f32.mrb[0].mxu0
        %v2221 = vadd.f32 %v1973, %v2220
        %v2222 = vpop.f32.mrb[0].mxu0
        %v2223 = vadd.f32 %v1977, %v2222
        %2224 = vmatprep.mubr.f32.mxu0 %v1705
        %2225 = vmatmul.mubr.f32.gmra.mrb[0].mxu0 %v1704
        %v2226 = vpop.f32.mrb[0].mxu0
        %v2227 = vadd.f32 %v1973, %v2226
        %v2228 = vpop.f32.mrb[0].mxu0
        %v2229 = vadd.f32 %v1977, %v2228
        %2230 = vmatprep.mubr.f32.mxu0 %v1709
        %2231 = vmatmul.mubr.f32.gmra.mrb[0].mxu0 %v1708
        %v2232 = vpop.f32.mrb[0].mxu0
        %v2233 = vadd.f32 %v1973, %v2232
        %v2234 = vpop.f32.mrb[0].mxu0
        %v2235 = vadd.f32 %v1977, %v2234
        %2236 = vmatprep.mubr.f32.mxu0 %v1713
        %2237 = vmatmul.mubr.f32.gmra.mrb[0].mxu0 %v1712
        %v2238 = vpop.f32.mrb[0].mxu0
        %v2239 = vadd.f32 %v1973, %v2238
        %v2240 = vpop.f32.mrb[0].mxu0
        %v2241 = vadd.f32 %v1977, %v2240
        %2242 = vmatprep.mubr.f32.mxu0 %v1717
        %2243 = vmatmul.mubr.f32.gmra.mrb[0].mxu0 %v1716
        %v2244 = vpop.f32.mrb[0].mxu0
        %v2245 = vadd.f32 %v1973, %v2244
        %v2246 = vpop.f32.mrb[0].mxu0
        %v2247 = vadd.f32 %v1977, %v2246
        %2248 = vmatprep.mubr.f32.mxu0 %v1721
        %2249 = vmatmul.mubr.f32.gmra.mrb[0].mxu0 %v1720
        %v2250 = vpop.f32.mrb[0].mxu0
        %v2251 = vadd.f32 %v1973, %v2250
        %v2252 = vpop.f32.mrb[0].mxu0
        %v2253 = vadd.f32 %v1977, %v2252
        %2254 = vmatprep.mubr.f32.mxu0 %v1725
        %2255 = vmatmul.mubr.f32.gmra.mrb[0].mxu0 %v1724
        %v2256 = vpop.f32.mrb[0].mxu0
        %v2257 = vadd.f32 %v1973, %v2256
        %v2258 = vpop.f32.mrb[0].mxu0
        %v2259 = vadd.f32 %v1977, %v2258
        %2260 = vmatprep.mubr.f32.mxu0 %v1729
        %2261 = vmatmul.mubr.f32.gmra.mrb[0].mxu0 %v1728
        %v2262 = vpop.f32.mrb[0].mxu0
        %v2263 = vadd.f32 %v1973, %v2262
        %v2264 = vpop.f32.mrb[0].mxu0
        %v2265 = vadd.f32 %v1977, %v2264
        %2266 = vmatprep.mubr.f32.mxu0 %v1733
        %2267 = vmatmul.mubr.f32.gmra.mrb[0].mxu0 %v1732
        %v2268 = vpop.f32.mrb[0].mxu0
        %v2269 = vadd.f32 %v1973, %v2268
        %v2270 = vpop.f32.mrb[0].mxu0
        %v2271 = vadd.f32 %v1977, %v2270
        %2272 = vmatprep.mubr.f32.mxu0 %v1737
        %2273 = vmatmul.mubr.f32.gmra.mrb[0].mxu0 %v1736
        %v2274 = vpop.f32.mrb[0].mxu0
        %v2275 = vadd.f32 %v1973, %v2274
        %v2276 = vpop.f32.mrb[0].mxu0
        %v2277 = vadd.f32 %v1977, %v2276
        %2278 = vmatprep.mubr.f32.mxu0 %v1741
        %2279 = vmatmul.mubr.f32.gmra.mrb[0].mxu0 %v1740
        %v2280 = vpop.f32.mrb[0].mxu0
        %v2281 = vadd.f32 %v1973, %v2280
        %v2282 = vpop.f32.mrb[0].mxu0
        %v2283 = vadd.f32 %v1977, %v2282
        %2284 = vmatprep.mubr.f32.mxu0 %v1745
        %2285 = vmatmul.mubr.f32.gmra.mrb[0].mxu0 %v1744
        %v2286 = vpop.f32.mrb[0].mxu0
        %v2287 = vadd.f32 %v1973, %v2286
        %v2288 = vpop.f32.mrb[0].mxu0
        %v2289 = vadd.f32 %v1977, %v2288
        %2290 = vmatprep.mubr.f32.mxu0 %v1749
        %2291 = vmatmul.mubr.f32.gmra.mrb[0].mxu0 %v1748
        %v2292 = vpop.f32.mrb[0].mxu0
        %v2293 = vadd.f32 %v1973, %v2292
        %v2294 = vpop.f32.mrb[0].mxu0
        %v2295 = vadd.f32 %v1977, %v2294
        %2296 = vmatprep.mubr.f32.mxu0 %v1753
        %2297 = vmatmul.mubr.f32.gmra.mrb[0].mxu0 %v1752
        %v2298 = vpop.f32.mrb[0].mxu0
        %v2299 = vadd.f32 %v1973, %v2298
        %v2300 = vpop.f32.mrb[0].mxu0
        %v2301 = vadd.f32 %v1977, %v2300
        %2302 = vmatprep.mubr.f32.mxu0 %v1757
        %2303 = vmatmul.mubr.f32.gmra.mrb[0].mxu0 %v1756
        %v2304 = vpop.f32.mrb[0].mxu0
        %v2305 = vadd.f32 %v1973, %v2304
        %v2306 = vpop.f32.mrb[0].mxu0
        %v2307 = vadd.f32 %v1977, %v2306
        %2308 = vmatprep.mubr.f32.mxu0 %v1761
        %2309 = vmatmul.mubr.f32.gmra.mrb[0].mxu0 %v1760
        %v2310 = vpop.f32.mrb[0].mxu0
        %v2311 = vadd.f32 %v1973, %v2310
        %v2312 = vpop.f32.mrb[0].mxu0
        %v2313 = vadd.f32 %v1977, %v2312
        %2314 = vmatprep.mubr.f32.mxu0 %v1765
        %2315 = vmatmul.mubr.f32.gmra.mrb[0].mxu0 %v1764
        %v2316 = vpop.f32.mrb[0].mxu0
        %v2317 = vadd.f32 %v1973, %v2316
        %v2318 = vpop.f32.mrb[0].mxu0
        %v2319 = vadd.f32 %v1977, %v2318
        %2320 = vmatprep.mubr.f32.mxu0 %v1769
        %2321 = vmatmul.mubr.f32.gmra.mrb[0].mxu0 %v1768
        %v2322 = vpop.f32.mrb[0].mxu0
        %v2323 = vadd.f32 %v1973, %v2322
        %v2324 = vpop.f32.mrb[0].mxu0
        %v2325 = vadd.f32 %v1977, %v2324
        %2326 = vmatprep.mubr.f32.mxu0 %v1773
        %2327 = vmatmul.mubr.f32.gmra.mrb[0].mxu0 %v1772
        %v2328 = vpop.f32.mrb[0].mxu0
        %v2329 = vadd.f32 %v1973, %v2328
        %v2330 = vpop.f32.mrb[0].mxu0
        %v2331 = vadd.f32 %v1977, %v2330
        %2332 = vmatprep.mubr.f32.mxu0 %v1777
        %2333 = vmatmul.mubr.f32.gmra.mrb[0].mxu0 %v1776
        %v2334 = vpop.f32.mrb[0].mxu0
        %v2335 = vadd.f32 %v1973, %v2334
        %v2336 = vpop.f32.mrb[0].mxu0
        %v2337 = vadd.f32 %v1977, %v2336
        %2338 = vmatprep.mubr.f32.mxu0 %v1781
        %2339 = vmatmul.mubr.f32.gmra.mrb[0].mxu0 %v1780
        %v2340 = vpop.f32.mrb[0].mxu0
        %v2341 = vadd.f32 %v1973, %v2340
        %v2342 = vpop.f32.mrb[0].mxu0
        %v2343 = vadd.f32 %v1977, %v2342
        %2344 = vmatprep.mubr.f32.mxu0 %v1785
        %2345 = vmatmul.mubr.f32.gmra.mrb[0].mxu0 %v1784
        %v2346 = vpop.f32.mrb[0].mxu0
        %v2347 = vadd.f32 %v1973, %v2346
        %v2348 = vpop.f32.mrb[0].mxu0
        %v2349 = vadd.f32 %v1977, %v2348
        %2350 = vmatprep.mubr.f32.mxu0 %v1789
        %2351 = vmatmul.mubr.f32.gmra.mrb[0].mxu0 %v1788
        %v2352 = vpop.f32.mrb[0].mxu0
        %v2353 = vadd.f32 %v1973, %v2352
        %v2354 = vpop.f32.mrb[0].mxu0
        %v2355 = vadd.f32 %v1977, %v2354
        %2356 = vmatprep.mubr.f32.mxu0 %v1793
        %2357 = vmatmul.mubr.f32.gmra.mrb[0].mxu0 %v1792
        %v2358 = vpop.f32.mrb[0].mxu0
        %v2359 = vadd.f32 %v1973, %v2358
        %v2360 = vpop.f32.mrb[0].mxu0
        %v2361 = vadd.f32 %v1977, %v2360
        %2362 = vmatprep.mubr.f32.mxu0 %v1797
        %2363 = vmatmul.mubr.f32.gmra.mrb[0].mxu0 %v1796
        %v2364 = vpop.f32.mrb[0].mxu0
        %v2365 = vadd.f32 %v1973, %v2364
        %v2366 = vpop.f32.mrb[0].mxu0
        %v2367 = vadd.f32 %v1977, %v2366
        %2368 = vmatprep.mubr.f32.mxu0 %v1801
        %2369 = vmatmul.mubr.f32.gmra.mrb[0].mxu0 %v1800
        %v2370 = vpop.f32.mrb[0].mxu0
        %v2371 = vadd.f32 %v1973, %v2370
        %v2372 = vpop.f32.mrb[0].mxu0
        %v2373 = vadd.f32 %v1977, %v2372
        %2374 = vmatprep.mubr.f32.mxu0 %v1805
        %2375 = vmatmul.mubr.f32.gmra.mrb[0].mxu0 %v1804
        %v2376 = vpop.f32.mrb[0].mxu0
        %v2377 = vadd.f32 %v1973, %v2376
        %v2378 = vpop.f32.mrb[0].mxu0
        %v2379 = vadd.f32 %v1977, %v2378
        %2380 = vmatprep.mubr.f32.mxu0 %v1809
        %2381 = vmatmul.mubr.f32.gmra.mrb[0].mxu0 %v1808
        %v2382 = vpop.f32.mrb[0].mxu0
        %v2383 = vadd.f32 %v1973, %v2382
        %v2384 = vpop.f32.mrb[0].mxu0
        %v2385 = vadd.f32 %v1977, %v2384
        %2386 = vmatprep.mubr.f32.mxu0 %v1813
        %2387 = vmatmul.mubr.f32.gmra.mrb[0].mxu0 %v1812
        %v2388 = vpop.f32.mrb[0].mxu0
        %v2389 = vadd.f32 %v1973, %v2388
        %v2390 = vpop.f32.mrb[0].mxu0
        %v2391 = vadd.f32 %v1977, %v2390
        %2392 = vmatprep.mubr.f32.mxu0 %v1817
        %2393 = vmatmul.mubr.f32.gmra.mrb[0].mxu0 %v1816
        %v2394 = vpop.f32.mrb[0].mxu0
        %v2395 = vadd.f32 %v1973, %v2394
        %v2396 = vpop.f32.mrb[0].mxu0
        %v2397 = vadd.f32 %v1977, %v2396
        %2398 = vmatprep.mubr.f32.mxu0 %v1821
        %2399 = vmatmul.mubr.f32.gmra.mrb[0].mxu0 %v1820
        %v2400 = vpop.f32.mrb[0].mxu0
        %v2401 = vadd.f32 %v1973, %v2400
        %v2402 = vpop.f32.mrb[0].mxu0
        %v2403 = vadd.f32 %v1977, %v2402
        %2404 = vmatprep.mubr.f32.mxu0 %v1825
        %2405 = vmatmul.mubr.f32.gmra.mrb[0].mxu0 %v1824
        %v2406 = vpop.f32.mrb[0].mxu0
        %v2407 = vadd.f32 %v1973, %v2406
        %v2408 = vpop.f32.mrb[0].mxu0
        %v2409 = vadd.f32 %v1977, %v2408
        %2410 = vmatprep.mubr.f32.mxu0 %v1829
        %2411 = vmatmul.mubr.f32.gmra.mrb[0].mxu0 %v1828
        %v2412 = vpop.f32.mrb[0].mxu0
        %v2413 = vadd.f32 %v1973, %v2412
        %v2414 = vpop.f32.mrb[0].mxu0
        %v2415 = vadd.f32 %v1977, %v2414
        %2416 = vmatprep.mubr.f32.mxu0 %v1833
        %2417 = vmatmul.mubr.f32.gmra.mrb[0].mxu0 %v1832
        %v2418 = vpop.f32.mrb[0].mxu0
        %v2419 = vadd.f32 %v1973, %v2418
        %v2420 = vpop.f32.mrb[0].mxu0
        %v2421 = vadd.f32 %v1977, %v2420
        %2422 = vmatprep.mubr.f32.mxu0 %v1837
        %2423 = vmatmul.mubr.f32.gmra.mrb[0].mxu0 %v1836
        %v2424 = vpop.f32.mrb[0].mxu0
        %v2425 = vadd.f32 %v1973, %v2424
        %v2426 = vpop.f32.mrb[0].mxu0
        %v2427 = vadd.f32 %v1977, %v2426
        %2428 = vdwg.mxu0
        %2429 = vmatprep.subr.mxu0 %v1905
        %2430 = vmatpush1.msra.mxu0 %v1904
        %2431 = vmatprep.subr.mxu0 %v1907
        %2432 = vmatpush1.msra.mxu0 %v1906
        %2433 = vmatprep.subr.mxu0 %v1909
        %2434 = vmatpush1.msra.mxu0 %v1908
        %2435 = vmatprep.subr.mxu0 %v1911
        %2436 = vmatpush1.msra.mxu0 %v1910
        %2437 = vmatprep.subr.mxu0 %v1913
        %2438 = vmatpush1.msra.mxu0 %v1912
        %2439 = vmatprep.subr.mxu0 %v1915
        %2440 = vmatpush1.msra.mxu0 %v1914
        %2441 = vmatprep.subr.mxu0 %v1917
        %2442 = vmatpush1.msra.mxu0 %v1916
        %2443 = vmatprep.subr.mxu0 %v1919
        %2444 = vmatpush1.msra.mxu0 %v1918
        %2445 = vmatprep.subr.mxu0 %v1921
        %2446 = vmatpush1.msra.mxu0 %v1920
        %2447 = vmatprep.subr.mxu0 %v1923
        %2448 = vmatpush1.msra.mxu0 %v1922
        %2449 = vmatprep.subr.mxu0 %v1925
        %2450 = vmatpush1.msra.mxu0 %v1924
        %2451 = vmatprep.subr.mxu0 %v1927
        %2452 = vmatpush1.msra.mxu0 %v1926
        %2453 = vmatprep.subr.mxu0 %v1929
        %2454 = vmatpush1.msra.mxu0 %v1928
        %2455 = vmatprep.subr.mxu0 %v1931
        %2456 = vmatpush1.msra.mxu0 %v1930
        %2457 = vmatprep.subr.mxu0 %v1933
        %2458 = vmatpush1.msra.mxu0 %v1932
        %2459 = vmatprep.subr.mxu0 %v1935
        %2460 = vmatpush1.msra.mxu0 %v1934
        %2461 = vmatprep.subr.mxu0 %v1937
        %2462 = vmatpush1.msra.mxu0 %v1936
        %2463 = vmatprep.subr.mxu0 %v1939
        %2464 = vmatpush1.msra.mxu0 %v1938
        %2465 = vmatprep.subr.mxu0 %v1941
        %2466 = vmatpush1.msra.mxu0 %v1940
        %2467 = vmatprep.subr.mxu0 %v1943
        %2468 = vmatpush1.msra.mxu0 %v1942
        %2469 = vmatprep.subr.mxu0 %v1945
        %2470 = vmatpush1.msra.mxu0 %v1944
        %2471 = vmatprep.subr.mxu0 %v1947
        %2472 = vmatpush1.msra.mxu0 %v1946
        %2473 = vmatprep.subr.mxu0 %v1949
        %2474 = vmatpush1.msra.mxu0 %v1948
        %2475 = vmatprep.subr.mxu0 %v1951
        %2476 = vmatpush1.msra.mxu0 %v1950
        %2477 = vmatprep.subr.mxu0 %v1953
        %2478 = vmatpush1.msra.mxu0 %v1952
        %2479 = vmatprep.subr.mxu0 %v1955
        %2480 = vmatpush1.msra.mxu0 %v1954
        %2481 = vmatprep.subr.mxu0 %v1957
        %2482 = vmatpush1.msra.mxu0 %v1956
        %2483 = vmatprep.subr.mxu0 %v1959
        %2484 = vmatpush1.msra.mxu0 %v1958
        %2485 = vmatprep.subr.mxu0 %v1961
        %2486 = vmatpush1.msra.mxu0 %v1960
        %2487 = vmatprep.subr.mxu0 %v1963
        %2488 = vmatpush1.msra.mxu0 %v1962
        %2489 = vmatprep.subr.mxu0 %v1965
        %2490 = vmatpush1.msra.mxu0 %v1964
        %2491 = vmatprep.subr.mxu0 %v1967
        %2492 = vmatpush1.msra.mxu0 %v1966
        %2493 = vmatprep.mubr.f32.mxu0 %v1587
        %2494 = vmatmul.mubr.f32.gmra.mrb[0].mxu0 %v1586
        %v2495 = vpop.f32.mrb[0].mxu0
        %v2496 = vadd.f32 %v2047, %v2495
        %v2497 = vpop.f32.mrb[0].mxu0
        %v2498 = vadd.f32 %v2049, %v2497
        %2499 = vmatprep.mubr.f32.mxu0 %v1591
        %2500 = vmatmul.mubr.f32.gmra.mrb[0].mxu0 %v1590
        %v2501 = vpop.f32.mrb[0].mxu0
        %v2502 = vadd.f32 %v2053, %v2501
        %v2503 = vpop.f32.mrb[0].mxu0
        %v2504 = vadd.f32 %v2055, %v2503
        %2505 = vmatprep.mubr.f32.mxu0 %v1595
        %2506 = vmatmul.mubr.f32.gmra.mrb[0].mxu0 %v1594
        %v2507 = vpop.f32.mrb[0].mxu0
        %v2508 = vadd.f32 %v2059, %v2507
        %v2509 = vpop.f32.mrb[0].mxu0
        %v2510 = vadd.f32 %v2061, %v2509
        %2511 = vmatprep.mubr.f32.mxu0 %v1599
        %2512 = vmatmul.mubr.f32.gmra.mrb[0].mxu0 %v1598
        %v2513 = vpop.f32.mrb[0].mxu0
        %v2514 = vadd.f32 %v2065, %v2513
        %v2515 = vpop.f32.mrb[0].mxu0
        %v2516 = vadd.f32 %v2067, %v2515
        %2517 = vmatprep.mubr.f32.mxu0 %v1603
        %2518 = vmatmul.mubr.f32.gmra.mrb[0].mxu0 %v1602
        %v2519 = vpop.f32.mrb[0].mxu0
        %v2520 = vadd.f32 %v2071, %v2519
        %v2521 = vpop.f32.mrb[0].mxu0
        %v2522 = vadd.f32 %v2073, %v2521
        %2523 = vmatprep.mubr.f32.mxu0 %v1607
        %2524 = vmatmul.mubr.f32.gmra.mrb[0].mxu0 %v1606
        %v2525 = vpop.f32.mrb[0].mxu0
        %v2526 = vadd.f32 %v2077, %v2525
        %v2527 = vpop.f32.mrb[0].mxu0
        %v2528 = vadd.f32 %v2079, %v2527
        %2529 = vmatprep.mubr.f32.mxu0 %v1611
        %2530 = vmatmul.mubr.f32.gmra.mrb[0].mxu0 %v1610
        %v2531 = vpop.f32.mrb[0].mxu0
        %v2532 = vadd.f32 %v2083, %v2531
        %v2533 = vpop.f32.mrb[0].mxu0
        %v2534 = vadd.f32 %v2085, %v2533
        %2535 = vmatprep.mubr.f32.mxu0 %v1615
        %2536 = vmatmul.mubr.f32.gmra.mrb[0].mxu0 %v1614
        %v2537 = vpop.f32.mrb[0].mxu0
        %v2538 = vadd.f32 %v2089, %v2537
        %v2539 = vpop.f32.mrb[0].mxu0
        %v2540 = vadd.f32 %v2091, %v2539
        %2541 = vmatprep.mubr.f32.mxu0 %v1619
        %2542 = vmatmul.mubr.f32.gmra.mrb[0].mxu0 %v1618
        %v2543 = vpop.f32.mrb[0].mxu0
        %v2544 = vadd.f32 %v2095, %v2543
        %v2545 = vpop.f32.mrb[0].mxu0
        %v2546 = vadd.f32 %v2097, %v2545
        %2547 = vmatprep.mubr.f32.mxu0 %v1623
        %2548 = vmatmul.mubr.f32.gmra.mrb[0].mxu0 %v1622
        %v2549 = vpop.f32.mrb[0].mxu0
        %v2550 = vadd.f32 %v2101, %v2549
        %v2551 = vpop.f32.mrb[0].mxu0
        %v2552 = vadd.f32 %v2103, %v2551
        %2553 = vmatprep.mubr.f32.mxu0 %v1627
        %2554 = vmatmul.mubr.f32.gmra.mrb[0].mxu0 %v1626
        %v2555 = vpop.f32.mrb[0].mxu0
        %v2556 = vadd.f32 %v2107, %v2555
        %v2557 = vpop.f32.mrb[0].mxu0
        %v2558 = vadd.f32 %v2109, %v2557
        %2559 = vmatprep.mubr.f32.mxu0 %v1631
        %2560 = vmatmul.mubr.f32.gmra.mrb[0].mxu0 %v1630
        %v2561 = vpop.f32.mrb[0].mxu0
        %v2562 = vadd.f32 %v2113, %v2561
        %v2563 = vpop.f32.mrb[0].mxu0
        %v2564 = vadd.f32 %v2115, %v2563
        %2565 = vmatprep.mubr.f32.mxu0 %v1635
        %2566 = vmatmul.mubr.f32.gmra.mrb[0].mxu0 %v1634
        %v2567 = vpop.f32.mrb[0].mxu0
        %v2568 = vadd.f32 %v2119, %v2567
        %v2569 = vpop.f32.mrb[0].mxu0
        %v2570 = vadd.f32 %v2121, %v2569
        %2571 = vmatprep.mubr.f32.mxu0 %v1639
        %2572 = vmatmul.mubr.f32.gmra.mrb[0].mxu0 %v1638
        %v2573 = vpop.f32.mrb[0].mxu0
        %v2574 = vadd.f32 %v2125, %v2573
        %v2575 = vpop.f32.mrb[0].mxu0
        %v2576 = vadd.f32 %v2127, %v2575
        %2577 = vmatprep.mubr.f32.mxu0 %v1643
        %2578 = vmatmul.mubr.f32.gmra.mrb[0].mxu0 %v1642
        %v2579 = vpop.f32.mrb[0].mxu0
        %v2580 = vadd.f32 %v2131, %v2579
        %v2581 = vpop.f32.mrb[0].mxu0
        %v2582 = vadd.f32 %v2133, %v2581
        %2583 = vmatprep.mubr.f32.mxu0 %v1647
        %2584 = vmatmul.mubr.f32.gmra.mrb[0].mxu0 %v1646
        %v2585 = vpop.f32.mrb[0].mxu0
        %v2586 = vadd.f32 %v2137, %v2585
        %v2587 = vpop.f32.mrb[0].mxu0
        %v2588 = vadd.f32 %v2139, %v2587
        %2589 = vmatprep.mubr.f32.mxu0 %v1651
        %2590 = vmatmul.mubr.f32.gmra.mrb[0].mxu0 %v1650
        %v2591 = vpop.f32.mrb[0].mxu0
        %v2592 = vadd.f32 %v2143, %v2591
        %v2593 = vpop.f32.mrb[0].mxu0
        %v2594 = vadd.f32 %v2145, %v2593
        %2595 = vmatprep.mubr.f32.mxu0 %v1655
        %2596 = vmatmul.mubr.f32.gmra.mrb[0].mxu0 %v1654
        %v2597 = vpop.f32.mrb[0].mxu0
        %v2598 = vadd.f32 %v2149, %v2597
        %v2599 = vpop.f32.mrb[0].mxu0
        %v2600 = vadd.f32 %v2151, %v2599
        %2601 = vmatprep.mubr.f32.mxu0 %v1659
        %2602 = vmatmul.mubr.f32.gmra.mrb[0].mxu0 %v1658
        %v2603 = vpop.f32.mrb[0].mxu0
        %v2604 = vadd.f32 %v2155, %v2603
        %v2605 = vpop.f32.mrb[0].mxu0
        %v2606 = vadd.f32 %v2157, %v2605
        %2607 = vmatprep.mubr.f32.mxu0 %v1663
        %2608 = vmatmul.mubr.f32.gmra.mrb[0].mxu0 %v1662
        %v2609 = vpop.f32.mrb[0].mxu0
        %v2610 = vadd.f32 %v2161, %v2609
        %v2611 = vpop.f32.mrb[0].mxu0
        %v2612 = vadd.f32 %v2163, %v2611
        %2613 = vmatprep.mubr.f32.mxu0 %v1667
        %2614 = vmatmul.mubr.f32.gmra.mrb[0].mxu0 %v1666
        %v2615 = vpop.f32.mrb[0].mxu0
        %v2616 = vadd.f32 %v2167, %v2615
        %v2617 = vpop.f32.mrb[0].mxu0
        %v2618 = vadd.f32 %v2169, %v2617
        %2619 = vmatprep.mubr.f32.mxu0 %v1671
        %2620 = vmatmul.mubr.f32.gmra.mrb[0].mxu0 %v1670
        %v2621 = vpop.f32.mrb[0].mxu0
        %v2622 = vadd.f32 %v2173, %v2621
        %v2623 = vpop.f32.mrb[0].mxu0
        %v2624 = vadd.f32 %v2175, %v2623
        %2625 = vmatprep.mubr.f32.mxu0 %v1675
        %2626 = vmatmul.mubr.f32.gmra.mrb[0].mxu0 %v1674
        %v2627 = vpop.f32.mrb[0].mxu0
        %v2628 = vadd.f32 %v2179, %v2627
        %v2629 = vpop.f32.mrb[0].mxu0
        %v2630 = vadd.f32 %v2181, %v2629
        %2631 = vmatprep.mubr.f32.mxu0 %v1679
        %2632 = vmatmul.mubr.f32.gmra.mrb[0].mxu0 %v1678
        %v2633 = vpop.f32.mrb[0].mxu0
        %v2634 = vadd.f32 %v2185, %v2633
        %v2635 = vpop.f32.mrb[0].mxu0
        %v2636 = vadd.f32 %v2187, %v2635
        %2637 = vmatprep.mubr.f32.mxu0 %v1683
        %2638 = vmatmul.mubr.f32.gmra.mrb[0].mxu0 %v1682
        %v2639 = vpop.f32.mrb[0].mxu0
        %v2640 = vadd.f32 %v2191, %v2639
        %v2641 = vpop.f32.mrb[0].mxu0
        %v2642 = vadd.f32 %v2193, %v2641
        %2643 = vmatprep.mubr.f32.mxu0 %v1687
        %2644 = vmatmul.mubr.f32.gmra.mrb[0].mxu0 %v1686
        %v2645 = vpop.f32.mrb[0].mxu0
        %v2646 = vadd.f32 %v2197, %v2645
        %v2647 = vpop.f32.mrb[0].mxu0
        %v2648 = vadd.f32 %v2199, %v2647
        %2649 = vmatprep.mubr.f32.mxu0 %v1691
        %2650 = vmatmul.mubr.f32.gmra.mrb[0].mxu0 %v1690
        %v2651 = vpop.f32.mrb[0].mxu0
        %v2652 = vadd.f32 %v2203, %v2651
        %v2653 = vpop.f32.mrb[0].mxu0
        %v2654 = vadd.f32 %v2205, %v2653
        %2655 = vmatprep.mubr.f32.mxu0 %v1695
        %2656 = vmatmul.mubr.f32.gmra.mrb[0].mxu0 %v1694
        %v2657 = vpop.f32.mrb[0].mxu0
        %v2658 = vadd.f32 %v2209, %v2657
        %v2659 = vpop.f32.mrb[0].mxu0
        %v2660 = vadd.f32 %v2211, %v2659
        %2661 = vmatprep.mubr.f32.mxu0 %v1699
        %2662 = vmatmul.mubr.f32.gmra.mrb[0].mxu0 %v1698
        %v2663 = vpop.f32.mrb[0].mxu0
        %v2664 = vadd.f32 %v2215, %v2663
        %v2665 = vpop.f32.mrb[0].mxu0
        %v2666 = vadd.f32 %v2217, %v2665
        %2667 = vmatprep.mubr.f32.mxu0 %v1703
        %2668 = vmatmul.mubr.f32.gmra.mrb[0].mxu0 %v1702
        %v2669 = vpop.f32.mrb[0].mxu0
        %v2670 = vadd.f32 %v2221, %v2669
        %v2671 = vpop.f32.mrb[0].mxu0
        %v2672 = vadd.f32 %v2223, %v2671
        %2673 = vmatprep.mubr.f32.mxu0 %v1707
        %2674 = vmatmul.mubr.f32.gmra.mrb[0].mxu0 %v1706
        %v2675 = vpop.f32.mrb[0].mxu0
        %v2676 = vadd.f32 %v2227, %v2675
        %v2677 = vpop.f32.mrb[0].mxu0
        %v2678 = vadd.f32 %v2229, %v2677
        %2679 = vmatprep.mubr.f32.mxu0 %v1711
        %2680 = vmatmul.mubr.f32.gmra.mrb[0].mxu0 %v1710
        %v2681 = vpop.f32.mrb[0].mxu0
        %v2682 = vadd.f32 %v2233, %v2681
        %v2683 = vpop.f32.mrb[0].mxu0
        %v2684 = vadd.f32 %v2235, %v2683
        %2685 = vmatprep.mubr.f32.mxu0 %v1715
        %2686 = vmatmul.mubr.f32.gmra.mrb[0].mxu0 %v1714
        %v2687 = vpop.f32.mrb[0].mxu0
        %v2688 = vadd.f32 %v2239, %v2687
        %v2689 = vpop.f32.mrb[0].mxu0
        %v2690 = vadd.f32 %v2241, %v2689
        %2691 = vmatprep.mubr.f32.mxu0 %v1719
        %2692 = vmatmul.mubr.f32.gmra.mrb[0].mxu0 %v1718
        %v2693 = vpop.f32.mrb[0].mxu0
        %v2694 = vadd.f32 %v2245, %v2693
        %v2695 = vpop.f32.mrb[0].mxu0
        %v2696 = vadd.f32 %v2247, %v2695
        %2697 = vmatprep.mubr.f32.mxu0 %v1723
        %2698 = vmatmul.mubr.f32.gmra.mrb[0].mxu0 %v1722
        %v2699 = vpop.f32.mrb[0].mxu0
        %v2700 = vadd.f32 %v2251, %v2699
        %v2701 = vpop.f32.mrb[0].mxu0
        %v2702 = vadd.f32 %v2253, %v2701
        %2703 = vmatprep.mubr.f32.mxu0 %v1727
        %2704 = vmatmul.mubr.f32.gmra.mrb[0].mxu0 %v1726
        %v2705 = vpop.f32.mrb[0].mxu0
        %v2706 = vadd.f32 %v2257, %v2705
        %v2707 = vpop.f32.mrb[0].mxu0
        %v2708 = vadd.f32 %v2259, %v2707
        %2709 = vmatprep.mubr.f32.mxu0 %v1731
        %2710 = vmatmul.mubr.f32.gmra.mrb[0].mxu0 %v1730
        %v2711 = vpop.f32.mrb[0].mxu0
        %v2712 = vadd.f32 %v2263, %v2711
        %v2713 = vpop.f32.mrb[0].mxu0
        %v2714 = vadd.f32 %v2265, %v2713
        %2715 = vmatprep.mubr.f32.mxu0 %v1735
        %2716 = vmatmul.mubr.f32.gmra.mrb[0].mxu0 %v1734
        %v2717 = vpop.f32.mrb[0].mxu0
        %v2718 = vadd.f32 %v2269, %v2717
        %v2719 = vpop.f32.mrb[0].mxu0
        %v2720 = vadd.f32 %v2271, %v2719
        %2721 = vmatprep.mubr.f32.mxu0 %v1739
        %2722 = vmatmul.mubr.f32.gmra.mrb[0].mxu0 %v1738
        %v2723 = vpop.f32.mrb[0].mxu0
        %v2724 = vadd.f32 %v2275, %v2723
        %v2725 = vpop.f32.mrb[0].mxu0
        %v2726 = vadd.f32 %v2277, %v2725
        %2727 = vmatprep.mubr.f32.mxu0 %v1743
        %2728 = vmatmul.mubr.f32.gmra.mrb[0].mxu0 %v1742
        %v2729 = vpop.f32.mrb[0].mxu0
        %v2730 = vadd.f32 %v2281, %v2729
        %v2731 = vpop.f32.mrb[0].mxu0
        %v2732 = vadd.f32 %v2283, %v2731
        %2733 = vmatprep.mubr.f32.mxu0 %v1747
        %2734 = vmatmul.mubr.f32.gmra.mrb[0].mxu0 %v1746
        %v2735 = vpop.f32.mrb[0].mxu0
        %v2736 = vadd.f32 %v2287, %v2735
        %v2737 = vpop.f32.mrb[0].mxu0
        %v2738 = vadd.f32 %v2289, %v2737
        %2739 = vmatprep.mubr.f32.mxu0 %v1751
        %2740 = vmatmul.mubr.f32.gmra.mrb[0].mxu0 %v1750
        %v2741 = vpop.f32.mrb[0].mxu0
        %v2742 = vadd.f32 %v2293, %v2741
        %v2743 = vpop.f32.mrb[0].mxu0
        %v2744 = vadd.f32 %v2295, %v2743
        %2745 = vmatprep.mubr.f32.mxu0 %v1755
        %2746 = vmatmul.mubr.f32.gmra.mrb[0].mxu0 %v1754
        %v2747 = vpop.f32.mrb[0].mxu0
        %v2748 = vadd.f32 %v2299, %v2747
        %v2749 = vpop.f32.mrb[0].mxu0
        %v2750 = vadd.f32 %v2301, %v2749
        %2751 = vmatprep.mubr.f32.mxu0 %v1759
        %2752 = vmatmul.mubr.f32.gmra.mrb[0].mxu0 %v1758
        %v2753 = vpop.f32.mrb[0].mxu0
        %v2754 = vadd.f32 %v2305, %v2753
        %v2755 = vpop.f32.mrb[0].mxu0
        %v2756 = vadd.f32 %v2307, %v2755
        %2757 = vmatprep.mubr.f32.mxu0 %v1763
        %2758 = vmatmul.mubr.f32.gmra.mrb[0].mxu0 %v1762
        %v2759 = vpop.f32.mrb[0].mxu0
        %v2760 = vadd.f32 %v2311, %v2759
        %v2761 = vpop.f32.mrb[0].mxu0
        %v2762 = vadd.f32 %v2313, %v2761
        %2763 = vmatprep.mubr.f32.mxu0 %v1767
        %2764 = vmatmul.mubr.f32.gmra.mrb[0].mxu0 %v1766
        %v2765 = vpop.f32.mrb[0].mxu0
        %v2766 = vadd.f32 %v2317, %v2765
        %v2767 = vpop.f32.mrb[0].mxu0
        %v2768 = vadd.f32 %v2319, %v2767
        %2769 = vmatprep.mubr.f32.mxu0 %v1771
        %2770 = vmatmul.mubr.f32.gmra.mrb[0].mxu0 %v1770
        %v2771 = vpop.f32.mrb[0].mxu0
        %v2772 = vadd.f32 %v2323, %v2771
        %v2773 = vpop.f32.mrb[0].mxu0
        %v2774 = vadd.f32 %v2325, %v2773
        %2775 = vmatprep.mubr.f32.mxu0 %v1775
        %2776 = vmatmul.mubr.f32.gmra.mrb[0].mxu0 %v1774
        %v2777 = vpop.f32.mrb[0].mxu0
        %v2778 = vadd.f32 %v2329, %v2777
        %v2779 = vpop.f32.mrb[0].mxu0
        %v2780 = vadd.f32 %v2331, %v2779
        %2781 = vmatprep.mubr.f32.mxu0 %v1779
        %2782 = vmatmul.mubr.f32.gmra.mrb[0].mxu0 %v1778
        %v2783 = vpop.f32.mrb[0].mxu0
        %v2784 = vadd.f32 %v2335, %v2783
        %v2785 = vpop.f32.mrb[0].mxu0
        %v2786 = vadd.f32 %v2337, %v2785
        %2787 = vmatprep.mubr.f32.mxu0 %v1783
        %2788 = vmatmul.mubr.f32.gmra.mrb[0].mxu0 %v1782
        %v2789 = vpop.f32.mrb[0].mxu0
        %v2790 = vadd.f32 %v2341, %v2789
        %v2791 = vpop.f32.mrb[0].mxu0
        %v2792 = vadd.f32 %v2343, %v2791
        %2793 = vmatprep.mubr.f32.mxu0 %v1787
        %2794 = vmatmul.mubr.f32.gmra.mrb[0].mxu0 %v1786
        %v2795 = vpop.f32.mrb[0].mxu0
        %v2796 = vadd.f32 %v2347, %v2795
        %v2797 = vpop.f32.mrb[0].mxu0
        %v2798 = vadd.f32 %v2349, %v2797
        %2799 = vmatprep.mubr.f32.mxu0 %v1791
        %2800 = vmatmul.mubr.f32.gmra.mrb[0].mxu0 %v1790
        %v2801 = vpop.f32.mrb[0].mxu0
        %v2802 = vadd.f32 %v2353, %v2801
        %v2803 = vpop.f32.mrb[0].mxu0
        %v2804 = vadd.f32 %v2355, %v2803
        %2805 = vmatprep.mubr.f32.mxu0 %v1795
        %2806 = vmatmul.mubr.f32.gmra.mrb[0].mxu0 %v1794
        %v2807 = vpop.f32.mrb[0].mxu0
        %v2808 = vadd.f32 %v2359, %v2807
        %v2809 = vpop.f32.mrb[0].mxu0
        %v2810 = vadd.f32 %v2361, %v2809
        %2811 = vmatprep.mubr.f32.mxu0 %v1799
        %2812 = vmatmul.mubr.f32.gmra.mrb[0].mxu0 %v1798
        %v2813 = vpop.f32.mrb[0].mxu0
        %v2814 = vadd.f32 %v2365, %v2813
        %v2815 = vpop.f32.mrb[0].mxu0
        %v2816 = vadd.f32 %v2367, %v2815
        %2817 = vmatprep.mubr.f32.mxu0 %v1803
        %2818 = vmatmul.mubr.f32.gmra.mrb[0].mxu0 %v1802
        %v2819 = vpop.f32.mrb[0].mxu0
        %v2820 = vadd.f32 %v2371, %v2819
        %v2821 = vpop.f32.mrb[0].mxu0
        %v2822 = vadd.f32 %v2373, %v2821
        %2823 = vmatprep.mubr.f32.mxu0 %v1807
        %2824 = vmatmul.mubr.f32.gmra.mrb[0].mxu0 %v1806
        %v2825 = vpop.f32.mrb[0].mxu0
        %v2826 = vadd.f32 %v2377, %v2825
        %v2827 = vpop.f32.mrb[0].mxu0
        %v2828 = vadd.f32 %v2379, %v2827
        %2829 = vmatprep.mubr.f32.mxu0 %v1811
        %2830 = vmatmul.mubr.f32.gmra.mrb[0].mxu0 %v1810
        %v2831 = vpop.f32.mrb[0].mxu0
        %v2832 = vadd.f32 %v2383, %v2831
        %v2833 = vpop.f32.mrb[0].mxu0
        %v2834 = vadd.f32 %v2385, %v2833
        %2835 = vmatprep.mubr.f32.mxu0 %v1815
        %2836 = vmatmul.mubr.f32.gmra.mrb[0].mxu0 %v1814
        %v2837 = vpop.f32.mrb[0].mxu0
        %v2838 = vadd.f32 %v2389, %v2837
        %v2839 = vpop.f32.mrb[0].mxu0
        %v2840 = vadd.f32 %v2391, %v2839
        %2841 = vmatprep.mubr.f32.mxu0 %v1819
        %2842 = vmatmul.mubr.f32.gmra.mrb[0].mxu0 %v1818
        %v2843 = vpop.f32.mrb[0].mxu0
        %v2844 = vadd.f32 %v2395, %v2843
        %v2845 = vpop.f32.mrb[0].mxu0
        %v2846 = vadd.f32 %v2397, %v2845
        %2847 = vmatprep.mubr.f32.mxu0 %v1823
        %2848 = vmatmul.mubr.f32.gmra.mrb[0].mxu0 %v1822
        %v2849 = vpop.f32.mrb[0].mxu0
        %v2850 = vadd.f32 %v2401, %v2849
        %v2851 = vpop.f32.mrb[0].mxu0
        %v2852 = vadd.f32 %v2403, %v2851
        %2853 = vmatprep.mubr.f32.mxu0 %v1827
        %2854 = vmatmul.mubr.f32.gmra.mrb[0].mxu0 %v1826
        %v2855 = vpop.f32.mrb[0].mxu0
        %v2856 = vadd.f32 %v2407, %v2855
        %v2857 = vpop.f32.mrb[0].mxu0
        %v2858 = vadd.f32 %v2409, %v2857
        %2859 = vmatprep.mubr.f32.mxu0 %v1831
        %2860 = vmatmul.mubr.f32.gmra.mrb[0].mxu0 %v1830
        %v2861 = vpop.f32.mrb[0].mxu0
        %v2862 = vadd.f32 %v2413, %v2861
        %v2863 = vpop.f32.mrb[0].mxu0
        %v2864 = vadd.f32 %v2415, %v2863
        %2865 = vmatprep.mubr.f32.mxu0 %v1835
        %2866 = vmatmul.mubr.f32.gmra.mrb[0].mxu0 %v1834
        %v2867 = vpop.f32.mrb[0].mxu0
        %v2868 = vadd.f32 %v2419, %v2867
        %v2869 = vpop.f32.mrb[0].mxu0
        %v2870 = vadd.f32 %v2421, %v2869
        %2871 = vmatprep.mubr.f32.mxu0 %v1839
        %2872 = vmatmul.mubr.f32.gmra.mrb[0].mxu0 %v1838
        %v2873 = vpop.f32.mrb[0].mxu0
        %v2874 = vadd.f32 %v2425, %v2873
        %v2875 = vpop.f32.mrb[0].mxu0
        %v2876 = vadd.f32 %v2427, %v2875
        %2877 = vdwg.mxu0
        %v2878 = vmax.f32 %v2496, 0.0
        %v2879 = vmax.f32 %v2498, 0.0
        %v2880 = vmax.f32 %v2502, 0.0
        %v2881 = vmax.f32 %v2504, 0.0
        %v2882 = vmax.f32 %v2508, 0.0
        %v2883 = vmax.f32 %v2510, 0.0
        %v2884 = vmax.f32 %v2514, 0.0
        %v2885 = vmax.f32 %v2516, 0.0
        %v2886 = vmax.f32 %v2520, 0.0
        %v2887 = vmax.f32 %v2522, 0.0
        %v2888 = vmax.f32 %v2526, 0.0
        %v2889 = vmax.f32 %v2528, 0.0
        %v2890 = vmax.f32 %v2532, 0.0
        %v2891 = vmax.f32 %v2534, 0.0
        %v2892 = vmax.f32 %v2538, 0.0
        %v2893 = vmax.f32 %v2540, 0.0
        %v2894 = vmax.f32 %v2544, 0.0
        %v2895 = vmax.f32 %v2546, 0.0
        %v2896 = vmax.f32 %v2550, 0.0
        %v2897 = vmax.f32 %v2552, 0.0
        %v2898 = vmax.f32 %v2556, 0.0
        %v2899 = vmax.f32 %v2558, 0.0
        %v2900 = vmax.f32 %v2562, 0.0
        %v2901 = vmax.f32 %v2564, 0.0
        %v2902 = vmax.f32 %v2568, 0.0
        %v2903 = vmax.f32 %v2570, 0.0
        %v2904 = vmax.f32 %v2574, 0.0
        %v2905 = vmax.f32 %v2576, 0.0
        %v2906 = vmax.f32 %v2580, 0.0
        %v2907 = vmax.f32 %v2582, 0.0
        %v2908 = vmax.f32 %v2586, 0.0
        %v2909 = vmax.f32 %v2588, 0.0
        %v2910 = vmax.f32 %v2592, 0.0
        %v2911 = vmax.f32 %v2594, 0.0
        %v2912 = vmax.f32 %v2598, 0.0
        %v2913 = vmax.f32 %v2600, 0.0
        %v2914 = vmax.f32 %v2604, 0.0
        %v2915 = vmax.f32 %v2606, 0.0
        %v2916 = vmax.f32 %v2610, 0.0
        %v2917 = vmax.f32 %v2612, 0.0
        %v2918 = vmax.f32 %v2616, 0.0
        %v2919 = vmax.f32 %v2618, 0.0
        %v2920 = vmax.f32 %v2622, 0.0
        %v2921 = vmax.f32 %v2624, 0.0
        %v2922 = vmax.f32 %v2628, 0.0
        %v2923 = vmax.f32 %v2630, 0.0
        %v2924 = vmax.f32 %v2634, 0.0
        %v2925 = vmax.f32 %v2636, 0.0
        %v2926 = vmax.f32 %v2640, 0.0
        %v2927 = vmax.f32 %v2642, 0.0
        %v2928 = vmax.f32 %v2646, 0.0
        %v2929 = vmax.f32 %v2648, 0.0
        %v2930 = vmax.f32 %v2652, 0.0
        %v2931 = vmax.f32 %v2654, 0.0
        %v2932 = vmax.f32 %v2658, 0.0
        %v2933 = vmax.f32 %v2660, 0.0
        %v2934 = vmax.f32 %v2664, 0.0
        %v2935 = vmax.f32 %v2666, 0.0
        %v2936 = vmax.f32 %v2670, 0.0
        %v2937 = vmax.f32 %v2672, 0.0
        %v2938 = vmax.f32 %v2676, 0.0
        %v2939 = vmax.f32 %v2678, 0.0
        %v2940 = vmax.f32 %v2682, 0.0
        %v2941 = vmax.f32 %v2684, 0.0
        %v2942 = vmax.f32 %v2688, 0.0
        %v2943 = vmax.f32 %v2690, 0.0
        %v2944 = vmax.f32 %v2694, 0.0
        %v2945 = vmax.f32 %v2696, 0.0
        %v2946 = vmax.f32 %v2700, 0.0
        %v2947 = vmax.f32 %v2702, 0.0
        %v2948 = vmax.f32 %v2706, 0.0
        %v2949 = vmax.f32 %v2708, 0.0
        %v2950 = vmax.f32 %v2712, 0.0
        %v2951 = vmax.f32 %v2714, 0.0
        %v2952 = vmax.f32 %v2718, 0.0
        %v2953 = vmax.f32 %v2720, 0.0
        %v2954 = vmax.f32 %v2724, 0.0
        %v2955 = vmax.f32 %v2726, 0.0
        %v2956 = vmax.f32 %v2730, 0.0
        %v2957 = vmax.f32 %v2732, 0.0
        %v2958 = vmax.f32 %v2736, 0.0
        %v2959 = vmax.f32 %v2738, 0.0
        %v2960 = vmax.f32 %v2742, 0.0
        %v2961 = vmax.f32 %v2744, 0.0
        %v2962 = vmax.f32 %v2748, 0.0
        %v2963 = vmax.f32 %v2750, 0.0
        %v2964 = vmax.f32 %v2754, 0.0
        %v2965 = vmax.f32 %v2756, 0.0
        %v2966 = vmax.f32 %v2760, 0.0
        %v2967 = vmax.f32 %v2762, 0.0
        %v2968 = vmax.f32 %v2766, 0.0
        %v2969 = vmax.f32 %v2768, 0.0
        %v2970 = vmax.f32 %v2772, 0.0
        %v2971 = vmax.f32 %v2774, 0.0
        %v2972 = vmax.f32 %v2778, 0.0
        %v2973 = vmax.f32 %v2780, 0.0
        %v2974 = vmax.f32 %v2784, 0.0
        %v2975 = vmax.f32 %v2786, 0.0
        %v2976 = vmax.f32 %v2790, 0.0
        %v2977 = vmax.f32 %v2792, 0.0
        %v2978 = vmax.f32 %v2796, 0.0
        %v2979 = vmax.f32 %v2798, 0.0
        %v2980 = vmax.f32 %v2802, 0.0
        %v2981 = vmax.f32 %v2804, 0.0
        %v2982 = vmax.f32 %v2808, 0.0
        %v2983 = vmax.f32 %v2810, 0.0
        %v2984 = vmax.f32 %v2814, 0.0
        %v2985 = vmax.f32 %v2816, 0.0
        %v2986 = vmax.f32 %v2820, 0.0
        %v2987 = vmax.f32 %v2822, 0.0
        %v2988 = vmax.f32 %v2826, 0.0
        %v2989 = vmax.f32 %v2828, 0.0
        %v2990 = vmax.f32 %v2832, 0.0
        %v2991 = vmax.f32 %v2834, 0.0
        %v2992 = vmax.f32 %v2838, 0.0
        %v2993 = vmax.f32 %v2840, 0.0
        %v2994 = vmax.f32 %v2844, 0.0
        %v2995 = vmax.f32 %v2846, 0.0
        %v2996 = vmax.f32 %v2850, 0.0
        %v2997 = vmax.f32 %v2852, 0.0
        %v2998 = vmax.f32 %v2856, 0.0
        %v2999 = vmax.f32 %v2858, 0.0
        %v3000 = vmax.f32 %v2862, 0.0
        %v3001 = vmax.f32 %v2864, 0.0
        %v3002 = vmax.f32 %v2868, 0.0
        %v3003 = vmax.f32 %v2870, 0.0
        %v3004 = vmax.f32 %v2874, 0.0
        %v3005 = vmax.f32 %v2876, 0.0
        %v3006 = vld [vmem:[%s5] sm:$0xff]
        %v3007 = vld [vmem:[%s5 + $0x8] sm:$0xff]
        %v3008 = vld [vmem:[%s5 + $0x10] sm:$0xff]
        %v3009 = vld [vmem:[%s5 + $0x18] sm:$0xff]
        %v3010 = vld [vmem:[%s5 + $0x20] sm:$0xff]
        %v3011 = vld [vmem:[%s5 + $0x28] sm:$0xff]
        %v3012 = vld [vmem:[%s5 + $0x30] sm:$0xff]
        %v3013 = vld [vmem:[%s5 + $0x38] sm:$0xff]
        %v3014 = vld [vmem:[%s5 + $0x40] sm:$0xff]
        %v3015 = vld [vmem:[%s5 + $0x48] sm:$0xff]
        %v3016 = vld [vmem:[%s5 + $0x50] sm:$0xff]
        %v3017 = vld [vmem:[%s5 + $0x58] sm:$0xff]
        %v3018 = vld [vmem:[%s5 + $0x60] sm:$0xff]
        %v3019 = vld [vmem:[%s5 + $0x68] sm:$0xff]
        %v3020 = vld [vmem:[%s5 + $0x70] sm:$0xff]
        %v3021 = vld [vmem:[%s5 + $0x78] sm:$0xff]
        %v3022 = vld [vmem:[%s5 + $0x80] sm:$0xff]
        %v3023 = vld [vmem:[%s5 + $0x88] sm:$0xff]
        %v3024 = vld [vmem:[%s5 + $0x90] sm:$0xff]
        %v3025 = vld [vmem:[%s5 + $0x98] sm:$0xff]
        %v3026 = vld [vmem:[%s5 + $0xa0] sm:$0xff]
        %v3027 = vld [vmem:[%s5 + $0xa8] sm:$0xff]
        %v3028 = vld [vmem:[%s5 + $0xb0] sm:$0xff]
        %v3029 = vld [vmem:[%s5 + $0xb8] sm:$0xff]
        %v3030 = vld [vmem:[%s5 + $0xc0] sm:$0xff]
        %v3031 = vld [vmem:[%s5 + $0xc8] sm:$0xff]
        %v3032 = vld [vmem:[%s5 + $0xd0] sm:$0xff]
        %v3033 = vld [vmem:[%s5 + $0xd8] sm:$0xff]
        %v3034 = vld [vmem:[%s5 + $0xe0] sm:$0xff]
        %v3035 = vld [vmem:[%s5 + $0xe8] sm:$0xff]
        %v3036 = vld [vmem:[%s5 + $0xf0] sm:$0xff]
        %v3037 = vld [vmem:[%s5 + $0xf8] sm:$0xff]
        %v3038 = vld [vmem:[%s6] sm:$0x1]
        %v3040 = vlaneseq
        %v3041 = vshrl.u32 %v3040, 7
        %v3042 = vsub.s32 0, %v3041
        %v3043 = vrot.slane %v3038, %v3042
        %3045 = vmatprep.subr.mxu0 0.0
        %3046 = vmatpush1.msra.mxu0 %v3006
        %3047 = vmatprep.subr.mxu0 0.0
        %3048 = vmatpush1.msra.mxu0 %v3007
        %3049 = vmatprep.subr.mxu0 0.0
        %3050 = vmatpush1.msra.mxu0 %v3008
        %3051 = vmatprep.subr.mxu0 0.0
        %3052 = vmatpush1.msra.mxu0 %v3009
        %3053 = vmatprep.subr.mxu0 0.0
        %3054 = vmatpush1.msra.mxu0 %v3010
        %3055 = vmatprep.subr.mxu0 0.0
        %3056 = vmatpush1.msra.mxu0 %v3011
        %3057 = vmatprep.subr.mxu0 0.0
        %3058 = vmatpush1.msra.mxu0 %v3012
        %3059 = vmatprep.subr.mxu0 0.0
        %3060 = vmatpush1.msra.mxu0 %v3013
        %3061 = vmatprep.subr.mxu0 0.0
        %3062 = vmatpush1.msra.mxu0 %v3014
        %3063 = vmatprep.subr.mxu0 0.0
        %3064 = vmatpush1.msra.mxu0 %v3015
        %3065 = vmatprep.subr.mxu0 0.0
        %3066 = vmatpush1.msra.mxu0 %v3016
        %3067 = vmatprep.subr.mxu0 0.0
        %3068 = vmatpush1.msra.mxu0 %v3017
        %3069 = vmatprep.subr.mxu0 0.0
        %3070 = vmatpush1.msra.mxu0 %v3018
        %3071 = vmatprep.subr.mxu0 0.0
        %3072 = vmatpush1.msra.mxu0 %v3019
        %3073 = vmatprep.subr.mxu0 0.0
        %3074 = vmatpush1.msra.mxu0 %v3020
        %3075 = vmatprep.subr.mxu0 0.0
        %3076 = vmatpush1.msra.mxu0 %v3021
        %3077 = vmatprep.subr.mxu0 0.0
        %3078 = vmatpush1.msra.mxu0 %v3022
        %3079 = vmatprep.subr.mxu0 0.0
        %3080 = vmatpush1.msra.mxu0 %v3023
        %3081 = vmatprep.subr.mxu0 0.0
        %3082 = vmatpush1.msra.mxu0 %v3024
        %3083 = vmatprep.subr.mxu0 0.0
        %3084 = vmatpush1.msra.mxu0 %v3025
        %3085 = vmatprep.subr.mxu0 0.0
        %3086 = vmatpush1.msra.mxu0 %v3026
        %3087 = vmatprep.subr.mxu0 0.0
        %3088 = vmatpush1.msra.mxu0 %v3027
        %3089 = vmatprep.subr.mxu0 0.0
        %3090 = vmatpush1.msra.mxu0 %v3028
        %3091 = vmatprep.subr.mxu0 0.0
        %3092 = vmatpush1.msra.mxu0 %v3029
        %3093 = vmatprep.subr.mxu0 0.0
        %3094 = vmatpush1.msra.mxu0 %v3030
        %3095 = vmatprep.subr.mxu0 0.0
        %3096 = vmatpush1.msra.mxu0 %v3031
        %3097 = vmatprep.subr.mxu0 0.0
        %3098 = vmatpush1.msra.mxu0 %v3032
        %3099 = vmatprep.subr.mxu0 0.0
        %3100 = vmatpush1.msra.mxu0 %v3033
        %3101 = vmatprep.subr.mxu0 0.0
        %3102 = vmatpush1.msra.mxu0 %v3034
        %3103 = vmatprep.subr.mxu0 0.0
        %3104 = vmatpush1.msra.mxu0 %v3035
        %3105 = vmatprep.subr.mxu0 0.0
        %3106 = vmatpush1.msra.mxu0 %v3036
        %3107 = vmatprep.subr.mxu0 0.0
        %3108 = vmatpush1.msra.mxu0 %v3037
        %3109 = vmatprep.mubr.f32.mxu0 %v2879
        %3110 = vmatmul.mubr.f32.gmra.mrb[0].mxu0 %v2878
        %v3111 = vpop.f32.mrb[0].mxu0
        %v3112 = vadd.f32 %v3043, %v3111
        %v3113 = vpop.f32.mrb[0].mxu0
        %3114 = vmatprep.mubr.f32.mxu0 %v2881
        %3115 = vmatmul.mubr.f32.gmra.mrb[0].mxu0 %v2880
        %v3116 = vpop.f32.mrb[0].mxu0
        %v3117 = vadd.f32 %v3043, %v3116
        %v3118 = vpop.f32.mrb[0].mxu0
        %3119 = vmatprep.mubr.f32.mxu0 %v2883
        %3120 = vmatmul.mubr.f32.gmra.mrb[0].mxu0 %v2882
        %v3121 = vpop.f32.mrb[0].mxu0
        %v3122 = vadd.f32 %v3043, %v3121
        %v3123 = vpop.f32.mrb[0].mxu0
        %3124 = vmatprep.mubr.f32.mxu0 %v2885
        %3125 = vmatmul.mubr.f32.gmra.mrb[0].mxu0 %v2884
        %v3126 = vpop.f32.mrb[0].mxu0
        %v3127 = vadd.f32 %v3043, %v3126
        %v3128 = vpop.f32.mrb[0].mxu0
        %3129 = vmatprep.mubr.f32.mxu0 %v2887
        %3130 = vmatmul.mubr.f32.gmra.mrb[0].mxu0 %v2886
        %v3131 = vpop.f32.mrb[0].mxu0
        %v3132 = vadd.f32 %v3043, %v3131
        %v3133 = vpop.f32.mrb[0].mxu0
        %3134 = vmatprep.mubr.f32.mxu0 %v2889
        %3135 = vmatmul.mubr.f32.gmra.mrb[0].mxu0 %v2888
        %v3136 = vpop.f32.mrb[0].mxu0
        %v3137 = vadd.f32 %v3043, %v3136
        %v3138 = vpop.f32.mrb[0].mxu0
        %3139 = vmatprep.mubr.f32.mxu0 %v2891
        %3140 = vmatmul.mubr.f32.gmra.mrb[0].mxu0 %v2890
        %v3141 = vpop.f32.mrb[0].mxu0
        %v3142 = vadd.f32 %v3043, %v3141
        %v3143 = vpop.f32.mrb[0].mxu0
        %3144 = vmatprep.mubr.f32.mxu0 %v2893
        %3145 = vmatmul.mubr.f32.gmra.mrb[0].mxu0 %v2892
        %v3146 = vpop.f32.mrb[0].mxu0
        %v3147 = vadd.f32 %v3043, %v3146
        %v3148 = vpop.f32.mrb[0].mxu0
        %3149 = vmatprep.mubr.f32.mxu0 %v2895
        %3150 = vmatmul.mubr.f32.gmra.mrb[0].mxu0 %v2894
        %v3151 = vpop.f32.mrb[0].mxu0
        %v3152 = vadd.f32 %v3043, %v3151
        %v3153 = vpop.f32.mrb[0].mxu0
        %3154 = vmatprep.mubr.f32.mxu0 %v2897
        %3155 = vmatmul.mubr.f32.gmra.mrb[0].mxu0 %v2896
        %v3156 = vpop.f32.mrb[0].mxu0
        %v3157 = vadd.f32 %v3043, %v3156
        %v3158 = vpop.f32.mrb[0].mxu0
        %3159 = vmatprep.mubr.f32.mxu0 %v2899
        %3160 = vmatmul.mubr.f32.gmra.mrb[0].mxu0 %v2898
        %v3161 = vpop.f32.mrb[0].mxu0
        %v3162 = vadd.f32 %v3043, %v3161
        %v3163 = vpop.f32.mrb[0].mxu0
        %3164 = vmatprep.mubr.f32.mxu0 %v2901
        %3165 = vmatmul.mubr.f32.gmra.mrb[0].mxu0 %v2900
        %v3166 = vpop.f32.mrb[0].mxu0
        %v3167 = vadd.f32 %v3043, %v3166
        %v3168 = vpop.f32.mrb[0].mxu0
        %3169 = vmatprep.mubr.f32.mxu0 %v2903
        %3170 = vmatmul.mubr.f32.gmra.mrb[0].mxu0 %v2902
        %v3171 = vpop.f32.mrb[0].mxu0
        %v3172 = vadd.f32 %v3043, %v3171
        %v3173 = vpop.f32.mrb[0].mxu0
        %3174 = vmatprep.mubr.f32.mxu0 %v2905
        %3175 = vmatmul.mubr.f32.gmra.mrb[0].mxu0 %v2904
        %v3176 = vpop.f32.mrb[0].mxu0
        %v3177 = vadd.f32 %v3043, %v3176
        %v3178 = vpop.f32.mrb[0].mxu0
        %3179 = vmatprep.mubr.f32.mxu0 %v2907
        %3180 = vmatmul.mubr.f32.gmra.mrb[0].mxu0 %v2906
        %v3181 = vpop.f32.mrb[0].mxu0
        %v3182 = vadd.f32 %v3043, %v3181
        %v3183 = vpop.f32.mrb[0].mxu0
        %3184 = vmatprep.mubr.f32.mxu0 %v2909
        %3185 = vmatmul.mubr.f32.gmra.mrb[0].mxu0 %v2908
        %v3186 = vpop.f32.mrb[0].mxu0
        %v3187 = vadd.f32 %v3043, %v3186
        %v3188 = vpop.f32.mrb[0].mxu0
        %3189 = vmatprep.mubr.f32.mxu0 %v2911
        %3190 = vmatmul.mubr.f32.gmra.mrb[0].mxu0 %v2910
        %v3191 = vpop.f32.mrb[0].mxu0
        %v3192 = vadd.f32 %v3043, %v3191
        %v3193 = vpop.f32.mrb[0].mxu0
        %3194 = vmatprep.mubr.f32.mxu0 %v2913
        %3195 = vmatmul.mubr.f32.gmra.mrb[0].mxu0 %v2912
        %v3196 = vpop.f32.mrb[0].mxu0
        %v3197 = vadd.f32 %v3043, %v3196
        %v3198 = vpop.f32.mrb[0].mxu0
        %3199 = vmatprep.mubr.f32.mxu0 %v2915
        %3200 = vmatmul.mubr.f32.gmra.mrb[0].mxu0 %v2914
        %v3201 = vpop.f32.mrb[0].mxu0
        %v3202 = vadd.f32 %v3043, %v3201
        %v3203 = vpop.f32.mrb[0].mxu0
        %3204 = vmatprep.mubr.f32.mxu0 %v2917
        %3205 = vmatmul.mubr.f32.gmra.mrb[0].mxu0 %v2916
        %v3206 = vpop.f32.mrb[0].mxu0
        %v3207 = vadd.f32 %v3043, %v3206
        %v3208 = vpop.f32.mrb[0].mxu0
        %3209 = vmatprep.mubr.f32.mxu0 %v2919
        %3210 = vmatmul.mubr.f32.gmra.mrb[0].mxu0 %v2918
        %v3211 = vpop.f32.mrb[0].mxu0
        %v3212 = vadd.f32 %v3043, %v3211
        %v3213 = vpop.f32.mrb[0].mxu0
        %3214 = vmatprep.mubr.f32.mxu0 %v2921
        %3215 = vmatmul.mubr.f32.gmra.mrb[0].mxu0 %v2920
        %v3216 = vpop.f32.mrb[0].mxu0
        %v3217 = vadd.f32 %v3043, %v3216
        %v3218 = vpop.f32.mrb[0].mxu0
        %3219 = vmatprep.mubr.f32.mxu0 %v2923
        %3220 = vmatmul.mubr.f32.gmra.mrb[0].mxu0 %v2922
        %v3221 = vpop.f32.mrb[0].mxu0
        %v3222 = vadd.f32 %v3043, %v3221
        %v3223 = vpop.f32.mrb[0].mxu0
        %3224 = vmatprep.mubr.f32.mxu0 %v2925
        %3225 = vmatmul.mubr.f32.gmra.mrb[0].mxu0 %v2924
        %v3226 = vpop.f32.mrb[0].mxu0
        %v3227 = vadd.f32 %v3043, %v3226
        %v3228 = vpop.f32.mrb[0].mxu0
        %3229 = vmatprep.mubr.f32.mxu0 %v2927
        %3230 = vmatmul.mubr.f32.gmra.mrb[0].mxu0 %v2926
        %v3231 = vpop.f32.mrb[0].mxu0
        %v3232 = vadd.f32 %v3043, %v3231
        %v3233 = vpop.f32.mrb[0].mxu0
        %3234 = vmatprep.mubr.f32.mxu0 %v2929
        %3235 = vmatmul.mubr.f32.gmra.mrb[0].mxu0 %v2928
        %v3236 = vpop.f32.mrb[0].mxu0
        %v3237 = vadd.f32 %v3043, %v3236
        %v3238 = vpop.f32.mrb[0].mxu0
        %3239 = vmatprep.mubr.f32.mxu0 %v2931
        %3240 = vmatmul.mubr.f32.gmra.mrb[0].mxu0 %v2930
        %v3241 = vpop.f32.mrb[0].mxu0
        %v3242 = vadd.f32 %v3043, %v3241
        %v3243 = vpop.f32.mrb[0].mxu0
        %3244 = vmatprep.mubr.f32.mxu0 %v2933
        %3245 = vmatmul.mubr.f32.gmra.mrb[0].mxu0 %v2932
        %v3246 = vpop.f32.mrb[0].mxu0
        %v3247 = vadd.f32 %v3043, %v3246
        %v3248 = vpop.f32.mrb[0].mxu0
        %3249 = vmatprep.mubr.f32.mxu0 %v2935
        %3250 = vmatmul.mubr.f32.gmra.mrb[0].mxu0 %v2934
        %v3251 = vpop.f32.mrb[0].mxu0
        %v3252 = vadd.f32 %v3043, %v3251
        %v3253 = vpop.f32.mrb[0].mxu0
        %3254 = vmatprep.mubr.f32.mxu0 %v2937
        %3255 = vmatmul.mubr.f32.gmra.mrb[0].mxu0 %v2936
        %v3256 = vpop.f32.mrb[0].mxu0
        %v3257 = vadd.f32 %v3043, %v3256
        %v3258 = vpop.f32.mrb[0].mxu0
        %3259 = vmatprep.mubr.f32.mxu0 %v2939
        %3260 = vmatmul.mubr.f32.gmra.mrb[0].mxu0 %v2938
        %v3261 = vpop.f32.mrb[0].mxu0
        %v3262 = vadd.f32 %v3043, %v3261
        %v3263 = vpop.f32.mrb[0].mxu0
        %3264 = vmatprep.mubr.f32.mxu0 %v2941
        %3265 = vmatmul.mubr.f32.gmra.mrb[0].mxu0 %v2940
        %v3266 = vpop.f32.mrb[0].mxu0
        %v3267 = vadd.f32 %v3043, %v3266
        %v3268 = vpop.f32.mrb[0].mxu0
        %3269 = vmatprep.mubr.f32.mxu0 %v2943
        %3270 = vmatmul.mubr.f32.gmra.mrb[0].mxu0 %v2942
        %v3271 = vpop.f32.mrb[0].mxu0
        %v3272 = vadd.f32 %v3043, %v3271
        %v3273 = vpop.f32.mrb[0].mxu0
        %3274 = vmatprep.mubr.f32.mxu0 %v2945
        %3275 = vmatmul.mubr.f32.gmra.mrb[0].mxu0 %v2944
        %v3276 = vpop.f32.mrb[0].mxu0
        %v3277 = vadd.f32 %v3043, %v3276
        %v3278 = vpop.f32.mrb[0].mxu0
        %3279 = vmatprep.mubr.f32.mxu0 %v2947
        %3280 = vmatmul.mubr.f32.gmra.mrb[0].mxu0 %v2946
        %v3281 = vpop.f32.mrb[0].mxu0
        %v3282 = vadd.f32 %v3043, %v3281
        %v3283 = vpop.f32.mrb[0].mxu0
        %3284 = vmatprep.mubr.f32.mxu0 %v2949
        %3285 = vmatmul.mubr.f32.gmra.mrb[0].mxu0 %v2948
        %v3286 = vpop.f32.mrb[0].mxu0
        %v3287 = vadd.f32 %v3043, %v3286
        %v3288 = vpop.f32.mrb[0].mxu0
        %3289 = vmatprep.mubr.f32.mxu0 %v2951
        %3290 = vmatmul.mubr.f32.gmra.mrb[0].mxu0 %v2950
        %v3291 = vpop.f32.mrb[0].mxu0
        %v3292 = vadd.f32 %v3043, %v3291
        %v3293 = vpop.f32.mrb[0].mxu0
        %3294 = vmatprep.mubr.f32.mxu0 %v2953
        %3295 = vmatmul.mubr.f32.gmra.mrb[0].mxu0 %v2952
        %v3296 = vpop.f32.mrb[0].mxu0
        %v3297 = vadd.f32 %v3043, %v3296
        %v3298 = vpop.f32.mrb[0].mxu0
        %3299 = vmatprep.mubr.f32.mxu0 %v2955
        %3300 = vmatmul.mubr.f32.gmra.mrb[0].mxu0 %v2954
        %v3301 = vpop.f32.mrb[0].mxu0
        %v3302 = vadd.f32 %v3043, %v3301
        %v3303 = vpop.f32.mrb[0].mxu0
        %3304 = vmatprep.mubr.f32.mxu0 %v2957
        %3305 = vmatmul.mubr.f32.gmra.mrb[0].mxu0 %v2956
        %v3306 = vpop.f32.mrb[0].mxu0
        %v3307 = vadd.f32 %v3043, %v3306
        %v3308 = vpop.f32.mrb[0].mxu0
        %3309 = vmatprep.mubr.f32.mxu0 %v2959
        %3310 = vmatmul.mubr.f32.gmra.mrb[0].mxu0 %v2958
        %v3311 = vpop.f32.mrb[0].mxu0
        %v3312 = vadd.f32 %v3043, %v3311
        %v3313 = vpop.f32.mrb[0].mxu0
        %3314 = vmatprep.mubr.f32.mxu0 %v2961
        %3315 = vmatmul.mubr.f32.gmra.mrb[0].mxu0 %v2960
        %v3316 = vpop.f32.mrb[0].mxu0
        %v3317 = vadd.f32 %v3043, %v3316
        %v3318 = vpop.f32.mrb[0].mxu0
        %3319 = vmatprep.mubr.f32.mxu0 %v2963
        %3320 = vmatmul.mubr.f32.gmra.mrb[0].mxu0 %v2962
        %v3321 = vpop.f32.mrb[0].mxu0
        %v3322 = vadd.f32 %v3043, %v3321
        %v3323 = vpop.f32.mrb[0].mxu0
        %3324 = vmatprep.mubr.f32.mxu0 %v2965
        %3325 = vmatmul.mubr.f32.gmra.mrb[0].mxu0 %v2964
        %v3326 = vpop.f32.mrb[0].mxu0
        %v3327 = vadd.f32 %v3043, %v3326
        %v3328 = vpop.f32.mrb[0].mxu0
        %3329 = vmatprep.mubr.f32.mxu0 %v2967
        %3330 = vmatmul.mubr.f32.gmra.mrb[0].mxu0 %v2966
        %v3331 = vpop.f32.mrb[0].mxu0
        %v3332 = vadd.f32 %v3043, %v3331
        %v3333 = vpop.f32.mrb[0].mxu0
        %3334 = vmatprep.mubr.f32.mxu0 %v2969
        %3335 = vmatmul.mubr.f32.gmra.mrb[0].mxu0 %v2968
        %v3336 = vpop.f32.mrb[0].mxu0
        %v3337 = vadd.f32 %v3043, %v3336
        %v3338 = vpop.f32.mrb[0].mxu0
        %3339 = vmatprep.mubr.f32.mxu0 %v2971
        %3340 = vmatmul.mubr.f32.gmra.mrb[0].mxu0 %v2970
        %v3341 = vpop.f32.mrb[0].mxu0
        %v3342 = vadd.f32 %v3043, %v3341
        %v3343 = vpop.f32.mrb[0].mxu0
        %3344 = vmatprep.mubr.f32.mxu0 %v2973
        %3345 = vmatmul.mubr.f32.gmra.mrb[0].mxu0 %v2972
        %v3346 = vpop.f32.mrb[0].mxu0
        %v3347 = vadd.f32 %v3043, %v3346
        %v3348 = vpop.f32.mrb[0].mxu0
        %3349 = vmatprep.mubr.f32.mxu0 %v2975
        %3350 = vmatmul.mubr.f32.gmra.mrb[0].mxu0 %v2974
        %v3351 = vpop.f32.mrb[0].mxu0
        %v3352 = vadd.f32 %v3043, %v3351
        %v3353 = vpop.f32.mrb[0].mxu0
        %3354 = vmatprep.mubr.f32.mxu0 %v2977
        %3355 = vmatmul.mubr.f32.gmra.mrb[0].mxu0 %v2976
        %v3356 = vpop.f32.mrb[0].mxu0
        %v3357 = vadd.f32 %v3043, %v3356
        %v3358 = vpop.f32.mrb[0].mxu0
        %3359 = vmatprep.mubr.f32.mxu0 %v2979
        %3360 = vmatmul.mubr.f32.gmra.mrb[0].mxu0 %v2978
        %v3361 = vpop.f32.mrb[0].mxu0
        %v3362 = vadd.f32 %v3043, %v3361
        %v3363 = vpop.f32.mrb[0].mxu0
        %3364 = vmatprep.mubr.f32.mxu0 %v2981
        %3365 = vmatmul.mubr.f32.gmra.mrb[0].mxu0 %v2980
        %v3366 = vpop.f32.mrb[0].mxu0
        %v3367 = vadd.f32 %v3043, %v3366
        %v3368 = vpop.f32.mrb[0].mxu0
        %3369 = vmatprep.mubr.f32.mxu0 %v2983
        %3370 = vmatmul.mubr.f32.gmra.mrb[0].mxu0 %v2982
        %v3371 = vpop.f32.mrb[0].mxu0
        %v3372 = vadd.f32 %v3043, %v3371
        %v3373 = vpop.f32.mrb[0].mxu0
        %3374 = vmatprep.mubr.f32.mxu0 %v2985
        %3375 = vmatmul.mubr.f32.gmra.mrb[0].mxu0 %v2984
        %v3376 = vpop.f32.mrb[0].mxu0
        %v3377 = vadd.f32 %v3043, %v3376
        %v3378 = vpop.f32.mrb[0].mxu0
        %3379 = vmatprep.mubr.f32.mxu0 %v2987
        %3380 = vmatmul.mubr.f32.gmra.mrb[0].mxu0 %v2986
        %v3381 = vpop.f32.mrb[0].mxu0
        %v3382 = vadd.f32 %v3043, %v3381
        %v3383 = vpop.f32.mrb[0].mxu0
        %3384 = vmatprep.mubr.f32.mxu0 %v2989
        %3385 = vmatmul.mubr.f32.gmra.mrb[0].mxu0 %v2988
        %v3386 = vpop.f32.mrb[0].mxu0
        %v3387 = vadd.f32 %v3043, %v3386
        %v3388 = vpop.f32.mrb[0].mxu0
        %3389 = vmatprep.mubr.f32.mxu0 %v2991
        %3390 = vmatmul.mubr.f32.gmra.mrb[0].mxu0 %v2990
        %v3391 = vpop.f32.mrb[0].mxu0
        %v3392 = vadd.f32 %v3043, %v3391
        %v3393 = vpop.f32.mrb[0].mxu0
        %3394 = vmatprep.mubr.f32.mxu0 %v2993
        %3395 = vmatmul.mubr.f32.gmra.mrb[0].mxu0 %v2992
        %v3396 = vpop.f32.mrb[0].mxu0
        %v3397 = vadd.f32 %v3043, %v3396
        %v3398 = vpop.f32.mrb[0].mxu0
        %3399 = vmatprep.mubr.f32.mxu0 %v2995
        %3400 = vmatmul.mubr.f32.gmra.mrb[0].mxu0 %v2994
        %v3401 = vpop.f32.mrb[0].mxu0
        %v3402 = vadd.f32 %v3043, %v3401
        %v3403 = vpop.f32.mrb[0].mxu0
        %3404 = vmatprep.mubr.f32.mxu0 %v2997
        %3405 = vmatmul.mubr.f32.gmra.mrb[0].mxu0 %v2996
        %v3406 = vpop.f32.mrb[0].mxu0
        %v3407 = vadd.f32 %v3043, %v3406
        %v3408 = vpop.f32.mrb[0].mxu0
        %3409 = vmatprep.mubr.f32.mxu0 %v2999
        %3410 = vmatmul.mubr.f32.gmra.mrb[0].mxu0 %v2998
        %v3411 = vpop.f32.mrb[0].mxu0
        %v3412 = vadd.f32 %v3043, %v3411
        %v3413 = vpop.f32.mrb[0].mxu0
        %3414 = vmatprep.mubr.f32.mxu0 %v3001
        %3415 = vmatmul.mubr.f32.gmra.mrb[0].mxu0 %v3000
        %v3416 = vpop.f32.mrb[0].mxu0
        %v3417 = vadd.f32 %v3043, %v3416
        %v3418 = vpop.f32.mrb[0].mxu0
        %3419 = vmatprep.mubr.f32.mxu0 %v3003
        %3420 = vmatmul.mubr.f32.gmra.mrb[0].mxu0 %v3002
        %v3421 = vpop.f32.mrb[0].mxu0
        %v3422 = vadd.f32 %v3043, %v3421
        %v3423 = vpop.f32.mrb[0].mxu0
        %3424 = vmatprep.mubr.f32.mxu0 %v3005
        %3425 = vmatmul.mubr.f32.gmra.mrb[0].mxu0 %v3004
        %v3426 = vpop.f32.mrb[0].mxu0
        %v3427 = vadd.f32 %v3043, %v3426
        %v3428 = vpop.f32.mrb[0].mxu0
        %3429 = vdwg.mxu0
        %v3430 = vmax.f32 %v3112, 0.0
        %v3431 = vmax.f32 %v3117, 0.0
        %v3432 = vmax.f32 %v3122, 0.0
        %v3433 = vmax.f32 %v3127, 0.0
        %v3434 = vmax.f32 %v3132, 0.0
        %v3435 = vmax.f32 %v3137, 0.0
        %v3436 = vmax.f32 %v3142, 0.0
        %v3437 = vmax.f32 %v3147, 0.0
        %v3438 = vmax.f32 %v3152, 0.0
        %v3439 = vmax.f32 %v3157, 0.0
        %v3440 = vmax.f32 %v3162, 0.0
        %v3441 = vmax.f32 %v3167, 0.0
        %v3442 = vmax.f32 %v3172, 0.0
        %v3443 = vmax.f32 %v3177, 0.0
        %v3444 = vmax.f32 %v3182, 0.0
        %v3445 = vmax.f32 %v3187, 0.0
        %v3446 = vmax.f32 %v3192, 0.0
        %v3447 = vmax.f32 %v3197, 0.0
        %v3448 = vmax.f32 %v3202, 0.0
        %v3449 = vmax.f32 %v3207, 0.0
        %v3450 = vmax.f32 %v3212, 0.0
        %v3451 = vmax.f32 %v3217, 0.0
        %v3452 = vmax.f32 %v3222, 0.0
        %v3453 = vmax.f32 %v3227, 0.0
        %v3454 = vmax.f32 %v3232, 0.0
        %v3455 = vmax.f32 %v3237, 0.0
        %v3456 = vmax.f32 %v3242, 0.0
        %v3457 = vmax.f32 %v3247, 0.0
        %v3458 = vmax.f32 %v3252, 0.0
        %v3459 = vmax.f32 %v3257, 0.0
        %v3460 = vmax.f32 %v3262, 0.0
        %v3461 = vmax.f32 %v3267, 0.0
        %v3462 = vmax.f32 %v3272, 0.0
        %v3463 = vmax.f32 %v3277, 0.0
        %v3464 = vmax.f32 %v3282, 0.0
        %v3465 = vmax.f32 %v3287, 0.0
        %v3466 = vmax.f32 %v3292, 0.0
        %v3467 = vmax.f32 %v3297, 0.0
        %v3468 = vmax.f32 %v3302, 0.0
        %v3469 = vmax.f32 %v3307, 0.0
        %v3470 = vmax.f32 %v3312, 0.0
        %v3471 = vmax.f32 %v3317, 0.0
        %v3472 = vmax.f32 %v3322, 0.0
        %v3473 = vmax.f32 %v3327, 0.0
        %v3474 = vmax.f32 %v3332, 0.0
        %v3475 = vmax.f32 %v3337, 0.0
        %v3476 = vmax.f32 %v3342, 0.0
        %v3477 = vmax.f32 %v3347, 0.0
        %v3478 = vmax.f32 %v3352, 0.0
        %v3479 = vmax.f32 %v3357, 0.0
        %v3480 = vmax.f32 %v3362, 0.0
        %v3481 = vmax.f32 %v3367, 0.0
        %v3482 = vmax.f32 %v3372, 0.0
        %v3483 = vmax.f32 %v3377, 0.0
        %v3484 = vmax.f32 %v3382, 0.0
        %v3485 = vmax.f32 %v3387, 0.0
        %v3486 = vmax.f32 %v3392, 0.0
        %v3487 = vmax.f32 %v3397, 0.0
        %v3488 = vmax.f32 %v3402, 0.0
        %v3489 = vmax.f32 %v3407, 0.0
        %v3490 = vmax.f32 %v3412, 0.0
        %v3491 = vmax.f32 %v3417, 0.0
        %v3492 = vmax.f32 %v3422, 0.0
        %v3493 = vmax.f32 %v3427, 0.0
        %v3494 = vld [vmem:[%s7] sm:$0xff]
        %v3495 = vld [vmem:[%s7 + $0x8] sm:$0xff]
        %v3496 = vld [vmem:[%s7 + $0x10] sm:$0xff]
        %v3497 = vld [vmem:[%s7 + $0x18] sm:$0xff]
        %v3498 = vld [vmem:[%s7 + $0x20] sm:$0xff]
        %v3499 = vld [vmem:[%s7 + $0x28] sm:$0xff]
        %v3500 = vld [vmem:[%s7 + $0x30] sm:$0xff]
        %v3501 = vld [vmem:[%s7 + $0x38] sm:$0xff]
        %v3502 = vld [vmem:[%s7 + $0x40] sm:$0xff]
        %v3503 = vld [vmem:[%s7 + $0x48] sm:$0xff]
        %v3504 = vld [vmem:[%s7 + $0x50] sm:$0xff]
        %v3505 = vld [vmem:[%s7 + $0x58] sm:$0xff]
        %v3506 = vld [vmem:[%s7 + $0x60] sm:$0xff]
        %v3507 = vld [vmem:[%s7 + $0x68] sm:$0xff]
        %v3508 = vld [vmem:[%s7 + $0x70] sm:$0xff]
        %v3509 = vld [vmem:[%s7 + $0x78] sm:$0xff]
        %v3510 = vld [vmem:[%s8] sm:$0x1]
        %v3512 = vlaneseq
        %v3513 = vshrl.u32 %v3512, 7
        %v3514 = vsub.s32 0, %v3513
        %v3515 = vrot.slane %v3510, %v3514
        %3517 = vmatprep.subr.mxu0 0.0
        %3518 = vmatpush1.msra.mxu0 %v3494
        %3519 = vmatprep.subr.mxu0 0.0
        %3520 = vmatpush1.msra.mxu0 %v3495
        %3521 = vmatprep.subr.mxu0 0.0
        %3522 = vmatpush1.msra.mxu0 %v3496
        %3523 = vmatprep.subr.mxu0 0.0
        %3524 = vmatpush1.msra.mxu0 %v3497
        %3525 = vmatprep.subr.mxu0 0.0
        %3526 = vmatpush1.msra.mxu0 %v3498
        %3527 = vmatprep.subr.mxu0 0.0
        %3528 = vmatpush1.msra.mxu0 %v3499
        %3529 = vmatprep.subr.mxu0 0.0
        %3530 = vmatpush1.msra.mxu0 %v3500
        %3531 = vmatprep.subr.mxu0 0.0
        %3532 = vmatpush1.msra.mxu0 %v3501
        %3533 = vmatprep.subr.mxu0 0.0
        %3534 = vmatpush1.msra.mxu0 %v3502
        %3535 = vmatprep.subr.mxu0 0.0
        %3536 = vmatpush1.msra.mxu0 %v3503
        %3537 = vmatprep.subr.mxu0 0.0
        %3538 = vmatpush1.msra.mxu0 %v3504
        %3539 = vmatprep.subr.mxu0 0.0
        %3540 = vmatpush1.msra.mxu0 %v3505
        %3541 = vmatprep.subr.mxu0 0.0
        %3542 = vmatpush1.msra.mxu0 %v3506
        %3543 = vmatprep.subr.mxu0 0.0
        %3544 = vmatpush1.msra.mxu0 %v3507
        %3545 = vmatprep.subr.mxu0 0.0
        %3546 = vmatpush1.msra.mxu0 %v3508
        %3547 = vmatprep.subr.mxu0 0.0
        %3548 = vmatpush1.msra.mxu0 %v3509
        %3549 = vmatprep.subr.mxu0 0.0
        %3550 = vmatpush1.msra.mxu0 0.0
        %3551 = vmatprep.subr.mxu0 0.0
        %3552 = vmatpush1.msra.mxu0 0.0
        %3553 = vmatprep.subr.mxu0 0.0
        %3554 = vmatpush1.msra.mxu0 0.0
        %3555 = vmatprep.subr.mxu0 0.0
        %3556 = vmatpush1.msra.mxu0 0.0
        %3557 = vmatprep.subr.mxu0 0.0
        %3558 = vmatpush1.msra.mxu0 0.0
        %3559 = vmatprep.subr.mxu0 0.0
        %3560 = vmatpush1.msra.mxu0 0.0
        %3561 = vmatprep.subr.mxu0 0.0
        %3562 = vmatpush1.msra.mxu0 0.0
        %3563 = vmatprep.subr.mxu0 0.0
        %3564 = vmatpush1.msra.mxu0 0.0
        %3565 = vmatprep.subr.mxu0 0.0
        %3566 = vmatpush1.msra.mxu0 0.0
        %3567 = vmatprep.subr.mxu0 0.0
        %3568 = vmatpush1.msra.mxu0 0.0
        %3569 = vmatprep.subr.mxu0 0.0
        %3570 = vmatpush1.msra.mxu0 0.0
        %3571 = vmatprep.subr.mxu0 0.0
        %3572 = vmatpush1.msra.mxu0 0.0
        %3573 = vmatprep.subr.mxu0 0.0
        %3574 = vmatpush1.msra.mxu0 0.0
        %3575 = vmatprep.subr.mxu0 0.0
        %3576 = vmatpush1.msra.mxu0 0.0
        %3577 = vmatprep.subr.mxu0 0.0
        %3578 = vmatpush1.msra.mxu0 0.0
        %3579 = vmatprep.subr.mxu0 0.0
        %3580 = vmatpush1.msra.mxu0 0.0
        %3581 = vmatprep.mubr.f32.mxu0 0.0
        %3582 = vmatmul.mubr.f32.gmra.mrb[0].mxu0 %v3430
        %v3583 = vpop.f32.mrb[0].mxu0
        %v3584 = vadd.f32 %v3515, %v3583
        %v3585 = vpop.f32.mrb[0].mxu0
        %3586 = vmatprep.mubr.f32.mxu0 0.0
        %3587 = vmatmul.mubr.f32.gmra.mrb[0].mxu0 %v3431
        %v3588 = vpop.f32.mrb[0].mxu0
        %v3589 = vadd.f32 %v3515, %v3588
        %v3590 = vpop.f32.mrb[0].mxu0
        %3591 = vmatprep.mubr.f32.mxu0 0.0
        %3592 = vmatmul.mubr.f32.gmra.mrb[0].mxu0 %v3432
        %v3593 = vpop.f32.mrb[0].mxu0
        %v3594 = vadd.f32 %v3515, %v3593
        %v3595 = vpop.f32.mrb[0].mxu0
        %3596 = vmatprep.mubr.f32.mxu0 0.0
        %3597 = vmatmul.mubr.f32.gmra.mrb[0].mxu0 %v3433
        %v3598 = vpop.f32.mrb[0].mxu0
        %v3599 = vadd.f32 %v3515, %v3598
        %v3600 = vpop.f32.mrb[0].mxu0
        %3601 = vmatprep.mubr.f32.mxu0 0.0
        %3602 = vmatmul.mubr.f32.gmra.mrb[0].mxu0 %v3434
        %v3603 = vpop.f32.mrb[0].mxu0
        %v3604 = vadd.f32 %v3515, %v3603
        %v3605 = vpop.f32.mrb[0].mxu0
        %3606 = vmatprep.mubr.f32.mxu0 0.0
        %3607 = vmatmul.mubr.f32.gmra.mrb[0].mxu0 %v3435
        %v3608 = vpop.f32.mrb[0].mxu0
        %v3609 = vadd.f32 %v3515, %v3608
        %v3610 = vpop.f32.mrb[0].mxu0
        %3611 = vmatprep.mubr.f32.mxu0 0.0
        %3612 = vmatmul.mubr.f32.gmra.mrb[0].mxu0 %v3436
        %v3613 = vpop.f32.mrb[0].mxu0
        %v3614 = vadd.f32 %v3515, %v3613
        %v3615 = vpop.f32.mrb[0].mxu0
        %3616 = vmatprep.mubr.f32.mxu0 0.0
        %3617 = vmatmul.mubr.f32.gmra.mrb[0].mxu0 %v3437
        %v3618 = vpop.f32.mrb[0].mxu0
        %v3619 = vadd.f32 %v3515, %v3618
        %v3620 = vpop.f32.mrb[0].mxu0
        %3621 = vmatprep.mubr.f32.mxu0 0.0
        %3622 = vmatmul.mubr.f32.gmra.mrb[0].mxu0 %v3438
        %v3623 = vpop.f32.mrb[0].mxu0
        %v3624 = vadd.f32 %v3515, %v3623
        %v3625 = vpop.f32.mrb[0].mxu0
        %3626 = vmatprep.mubr.f32.mxu0 0.0
        %3627 = vmatmul.mubr.f32.gmra.mrb[0].mxu0 %v3439
        %v3628 = vpop.f32.mrb[0].mxu0
        %v3629 = vadd.f32 %v3515, %v3628
        %v3630 = vpop.f32.mrb[0].mxu0
        %3631 = vmatprep.mubr.f32.mxu0 0.0
        %3632 = vmatmul.mubr.f32.gmra.mrb[0].mxu0 %v3440
        %v3633 = vpop.f32.mrb[0].mxu0
        %v3634 = vadd.f32 %v3515, %v3633
        %v3635 = vpop.f32.mrb[0].mxu0
        %3636 = vmatprep.mubr.f32.mxu0 0.0
        %3637 = vmatmul.mubr.f32.gmra.mrb[0].mxu0 %v3441
        %v3638 = vpop.f32.mrb[0].mxu0
        %v3639 = vadd.f32 %v3515, %v3638
        %v3640 = vpop.f32.mrb[0].mxu0
        %3641 = vmatprep.mubr.f32.mxu0 0.0
        %3642 = vmatmul.mubr.f32.gmra.mrb[0].mxu0 %v3442
        %v3643 = vpop.f32.mrb[0].mxu0
        %v3644 = vadd.f32 %v3515, %v3643
        %v3645 = vpop.f32.mrb[0].mxu0
        %3646 = vmatprep.mubr.f32.mxu0 0.0
        %3647 = vmatmul.mubr.f32.gmra.mrb[0].mxu0 %v3443
        %v3648 = vpop.f32.mrb[0].mxu0
        %v3649 = vadd.f32 %v3515, %v3648
        %v3650 = vpop.f32.mrb[0].mxu0
        %3651 = vmatprep.mubr.f32.mxu0 0.0
        %3652 = vmatmul.mubr.f32.gmra.mrb[0].mxu0 %v3444
        %v3653 = vpop.f32.mrb[0].mxu0
        %v3654 = vadd.f32 %v3515, %v3653
        %v3655 = vpop.f32.mrb[0].mxu0
        %3656 = vmatprep.mubr.f32.mxu0 0.0
        %3657 = vmatmul.mubr.f32.gmra.mrb[0].mxu0 %v3445
        %v3658 = vpop.f32.mrb[0].mxu0
        %v3659 = vadd.f32 %v3515, %v3658
        %v3660 = vpop.f32.mrb[0].mxu0
        %3661 = vmatprep.mubr.f32.mxu0 0.0
        %3662 = vmatmul.mubr.f32.gmra.mrb[0].mxu0 %v3446
        %v3663 = vpop.f32.mrb[0].mxu0
        %v3664 = vadd.f32 %v3515, %v3663
        %v3665 = vpop.f32.mrb[0].mxu0
        %3666 = vmatprep.mubr.f32.mxu0 0.0
        %3667 = vmatmul.mubr.f32.gmra.mrb[0].mxu0 %v3447
        %v3668 = vpop.f32.mrb[0].mxu0
        %v3669 = vadd.f32 %v3515, %v3668
        %v3670 = vpop.f32.mrb[0].mxu0
        %3671 = vmatprep.mubr.f32.mxu0 0.0
        %3672 = vmatmul.mubr.f32.gmra.mrb[0].mxu0 %v3448
        %v3673 = vpop.f32.mrb[0].mxu0
        %v3674 = vadd.f32 %v3515, %v3673
        %v3675 = vpop.f32.mrb[0].mxu0
        %3676 = vmatprep.mubr.f32.mxu0 0.0
        %3677 = vmatmul.mubr.f32.gmra.mrb[0].mxu0 %v3449
        %v3678 = vpop.f32.mrb[0].mxu0
        %v3679 = vadd.f32 %v3515, %v3678
        %v3680 = vpop.f32.mrb[0].mxu0
        %3681 = vmatprep.mubr.f32.mxu0 0.0
        %3682 = vmatmul.mubr.f32.gmra.mrb[0].mxu0 %v3450
        %v3683 = vpop.f32.mrb[0].mxu0
        %v3684 = vadd.f32 %v3515, %v3683
        %v3685 = vpop.f32.mrb[0].mxu0
        %3686 = vmatprep.mubr.f32.mxu0 0.0
        %3687 = vmatmul.mubr.f32.gmra.mrb[0].mxu0 %v3451
        %v3688 = vpop.f32.mrb[0].mxu0
        %v3689 = vadd.f32 %v3515, %v3688
        %v3690 = vpop.f32.mrb[0].mxu0
        %3691 = vmatprep.mubr.f32.mxu0 0.0
        %3692 = vmatmul.mubr.f32.gmra.mrb[0].mxu0 %v3452
        %v3693 = vpop.f32.mrb[0].mxu0
        %v3694 = vadd.f32 %v3515, %v3693
        %v3695 = vpop.f32.mrb[0].mxu0
        %3696 = vmatprep.mubr.f32.mxu0 0.0
        %3697 = vmatmul.mubr.f32.gmra.mrb[0].mxu0 %v3453
        %v3698 = vpop.f32.mrb[0].mxu0
        %v3699 = vadd.f32 %v3515, %v3698
        %v3700 = vpop.f32.mrb[0].mxu0
        %3701 = vmatprep.mubr.f32.mxu0 0.0
        %3702 = vmatmul.mubr.f32.gmra.mrb[0].mxu0 %v3454
        %v3703 = vpop.f32.mrb[0].mxu0
        %v3704 = vadd.f32 %v3515, %v3703
        %v3705 = vpop.f32.mrb[0].mxu0
        %3706 = vmatprep.mubr.f32.mxu0 0.0
        %3707 = vmatmul.mubr.f32.gmra.mrb[0].mxu0 %v3455
        %v3708 = vpop.f32.mrb[0].mxu0
        %v3709 = vadd.f32 %v3515, %v3708
        %v3710 = vpop.f32.mrb[0].mxu0
        %3711 = vmatprep.mubr.f32.mxu0 0.0
        %3712 = vmatmul.mubr.f32.gmra.mrb[0].mxu0 %v3456
        %v3713 = vpop.f32.mrb[0].mxu0
        %v3714 = vadd.f32 %v3515, %v3713
        %v3715 = vpop.f32.mrb[0].mxu0
        %3716 = vmatprep.mubr.f32.mxu0 0.0
        %3717 = vmatmul.mubr.f32.gmra.mrb[0].mxu0 %v3457
        %v3718 = vpop.f32.mrb[0].mxu0
        %v3719 = vadd.f32 %v3515, %v3718
        %v3720 = vpop.f32.mrb[0].mxu0
        %3721 = vmatprep.mubr.f32.mxu0 0.0
        %3722 = vmatmul.mubr.f32.gmra.mrb[0].mxu0 %v3458
        %v3723 = vpop.f32.mrb[0].mxu0
        %v3724 = vadd.f32 %v3515, %v3723
        %v3725 = vpop.f32.mrb[0].mxu0
        %3726 = vmatprep.mubr.f32.mxu0 0.0
        %3727 = vmatmul.mubr.f32.gmra.mrb[0].mxu0 %v3459
        %v3728 = vpop.f32.mrb[0].mxu0
        %v3729 = vadd.f32 %v3515, %v3728
        %v3730 = vpop.f32.mrb[0].mxu0
        %3731 = vmatprep.mubr.f32.mxu0 0.0
        %3732 = vmatmul.mubr.f32.gmra.mrb[0].mxu0 %v3460
        %v3733 = vpop.f32.mrb[0].mxu0
        %v3734 = vadd.f32 %v3515, %v3733
        %v3735 = vpop.f32.mrb[0].mxu0
        %3736 = vmatprep.mubr.f32.mxu0 0.0
        %3737 = vmatmul.mubr.f32.gmra.mrb[0].mxu0 %v3461
        %v3738 = vpop.f32.mrb[0].mxu0
        %v3739 = vadd.f32 %v3515, %v3738
        %v3740 = vpop.f32.mrb[0].mxu0
        %3741 = vmatprep.mubr.f32.mxu0 0.0
        %3742 = vmatmul.mubr.f32.gmra.mrb[0].mxu0 %v3462
        %v3743 = vpop.f32.mrb[0].mxu0
        %v3744 = vadd.f32 %v3515, %v3743
        %v3745 = vpop.f32.mrb[0].mxu0
        %3746 = vmatprep.mubr.f32.mxu0 0.0
        %3747 = vmatmul.mubr.f32.gmra.mrb[0].mxu0 %v3463
        %v3748 = vpop.f32.mrb[0].mxu0
        %v3749 = vadd.f32 %v3515, %v3748
        %v3750 = vpop.f32.mrb[0].mxu0
        %3751 = vmatprep.mubr.f32.mxu0 0.0
        %3752 = vmatmul.mubr.f32.gmra.mrb[0].mxu0 %v3464
        %v3753 = vpop.f32.mrb[0].mxu0
        %v3754 = vadd.f32 %v3515, %v3753
        %v3755 = vpop.f32.mrb[0].mxu0
        %3756 = vmatprep.mubr.f32.mxu0 0.0
        %3757 = vmatmul.mubr.f32.gmra.mrb[0].mxu0 %v3465
        %v3758 = vpop.f32.mrb[0].mxu0
        %v3759 = vadd.f32 %v3515, %v3758
        %v3760 = vpop.f32.mrb[0].mxu0
        %3761 = vmatprep.mubr.f32.mxu0 0.0
        %3762 = vmatmul.mubr.f32.gmra.mrb[0].mxu0 %v3466
        %v3763 = vpop.f32.mrb[0].mxu0
        %v3764 = vadd.f32 %v3515, %v3763
        %v3765 = vpop.f32.mrb[0].mxu0
        %3766 = vmatprep.mubr.f32.mxu0 0.0
        %3767 = vmatmul.mubr.f32.gmra.mrb[0].mxu0 %v3467
        %v3768 = vpop.f32.mrb[0].mxu0
        %v3769 = vadd.f32 %v3515, %v3768
        %v3770 = vpop.f32.mrb[0].mxu0
        %3771 = vmatprep.mubr.f32.mxu0 0.0
        %3772 = vmatmul.mubr.f32.gmra.mrb[0].mxu0 %v3468
        %v3773 = vpop.f32.mrb[0].mxu0
        %v3774 = vadd.f32 %v3515, %v3773
        %v3775 = vpop.f32.mrb[0].mxu0
        %3776 = vmatprep.mubr.f32.mxu0 0.0
        %3777 = vmatmul.mubr.f32.gmra.mrb[0].mxu0 %v3469
        %v3778 = vpop.f32.mrb[0].mxu0
        %v3779 = vadd.f32 %v3515, %v3778
        %v3780 = vpop.f32.mrb[0].mxu0
        %3781 = vmatprep.mubr.f32.mxu0 0.0
        %3782 = vmatmul.mubr.f32.gmra.mrb[0].mxu0 %v3470
        %v3783 = vpop.f32.mrb[0].mxu0
        %v3784 = vadd.f32 %v3515, %v3783
        %v3785 = vpop.f32.mrb[0].mxu0
        %3786 = vmatprep.mubr.f32.mxu0 0.0
        %3787 = vmatmul.mubr.f32.gmra.mrb[0].mxu0 %v3471
        %v3788 = vpop.f32.mrb[0].mxu0
        %v3789 = vadd.f32 %v3515, %v3788
        %v3790 = vpop.f32.mrb[0].mxu0
        %3791 = vmatprep.mubr.f32.mxu0 0.0
        %3792 = vmatmul.mubr.f32.gmra.mrb[0].mxu0 %v3472
        %v3793 = vpop.f32.mrb[0].mxu0
        %v3794 = vadd.f32 %v3515, %v3793
        %v3795 = vpop.f32.mrb[0].mxu0
        %3796 = vmatprep.mubr.f32.mxu0 0.0
        %3797 = vmatmul.mubr.f32.gmra.mrb[0].mxu0 %v3473
        %v3798 = vpop.f32.mrb[0].mxu0
        %v3799 = vadd.f32 %v3515, %v3798
        %v3800 = vpop.f32.mrb[0].mxu0
        %3801 = vmatprep.mubr.f32.mxu0 0.0
        %3802 = vmatmul.mubr.f32.gmra.mrb[0].mxu0 %v3474
        %v3803 = vpop.f32.mrb[0].mxu0
        %v3804 = vadd.f32 %v3515, %v3803
        %v3805 = vpop.f32.mrb[0].mxu0
        %3806 = vmatprep.mubr.f32.mxu0 0.0
        %3807 = vmatmul.mubr.f32.gmra.mrb[0].mxu0 %v3475
        %v3808 = vpop.f32.mrb[0].mxu0
        %v3809 = vadd.f32 %v3515, %v3808
        %v3810 = vpop.f32.mrb[0].mxu0
        %3811 = vmatprep.mubr.f32.mxu0 0.0
        %3812 = vmatmul.mubr.f32.gmra.mrb[0].mxu0 %v3476
        %v3813 = vpop.f32.mrb[0].mxu0
        %v3814 = vadd.f32 %v3515, %v3813
        %v3815 = vpop.f32.mrb[0].mxu0
        %3816 = vmatprep.mubr.f32.mxu0 0.0
        %3817 = vmatmul.mubr.f32.gmra.mrb[0].mxu0 %v3477
        %v3818 = vpop.f32.mrb[0].mxu0
        %v3819 = vadd.f32 %v3515, %v3818
        %v3820 = vpop.f32.mrb[0].mxu0
        %3821 = vmatprep.mubr.f32.mxu0 0.0
        %3822 = vmatmul.mubr.f32.gmra.mrb[0].mxu0 %v3478
        %v3823 = vpop.f32.mrb[0].mxu0
        %v3824 = vadd.f32 %v3515, %v3823
        %v3825 = vpop.f32.mrb[0].mxu0
        %3826 = vmatprep.mubr.f32.mxu0 0.0
        %3827 = vmatmul.mubr.f32.gmra.mrb[0].mxu0 %v3479
        %v3828 = vpop.f32.mrb[0].mxu0
        %v3829 = vadd.f32 %v3515, %v3828
        %v3830 = vpop.f32.mrb[0].mxu0
        %3831 = vmatprep.mubr.f32.mxu0 0.0
        %3832 = vmatmul.mubr.f32.gmra.mrb[0].mxu0 %v3480
        %v3833 = vpop.f32.mrb[0].mxu0
        %v3834 = vadd.f32 %v3515, %v3833
        %v3835 = vpop.f32.mrb[0].mxu0
        %3836 = vmatprep.mubr.f32.mxu0 0.0
        %3837 = vmatmul.mubr.f32.gmra.mrb[0].mxu0 %v3481
        %v3838 = vpop.f32.mrb[0].mxu0
        %v3839 = vadd.f32 %v3515, %v3838
        %v3840 = vpop.f32.mrb[0].mxu0
        %3841 = vmatprep.mubr.f32.mxu0 0.0
        %3842 = vmatmul.mubr.f32.gmra.mrb[0].mxu0 %v3482
        %v3843 = vpop.f32.mrb[0].mxu0
        %v3844 = vadd.f32 %v3515, %v3843
        %v3845 = vpop.f32.mrb[0].mxu0
        %3846 = vmatprep.mubr.f32.mxu0 0.0
        %3847 = vmatmul.mubr.f32.gmra.mrb[0].mxu0 %v3483
        %v3848 = vpop.f32.mrb[0].mxu0
        %v3849 = vadd.f32 %v3515, %v3848
        %v3850 = vpop.f32.mrb[0].mxu0
        %3851 = vmatprep.mubr.f32.mxu0 0.0
        %3852 = vmatmul.mubr.f32.gmra.mrb[0].mxu0 %v3484
        %v3853 = vpop.f32.mrb[0].mxu0
        %v3854 = vadd.f32 %v3515, %v3853
        %v3855 = vpop.f32.mrb[0].mxu0
        %3856 = vmatprep.mubr.f32.mxu0 0.0
        %3857 = vmatmul.mubr.f32.gmra.mrb[0].mxu0 %v3485
        %v3858 = vpop.f32.mrb[0].mxu0
        %v3859 = vadd.f32 %v3515, %v3858
        %v3860 = vpop.f32.mrb[0].mxu0
        %3861 = vmatprep.mubr.f32.mxu0 0.0
        %3862 = vmatmul.mubr.f32.gmra.mrb[0].mxu0 %v3486
        %v3863 = vpop.f32.mrb[0].mxu0
        %v3864 = vadd.f32 %v3515, %v3863
        %v3865 = vpop.f32.mrb[0].mxu0
        %3866 = vmatprep.mubr.f32.mxu0 0.0
        %3867 = vmatmul.mubr.f32.gmra.mrb[0].mxu0 %v3487
        %v3868 = vpop.f32.mrb[0].mxu0
        %v3869 = vadd.f32 %v3515, %v3868
        %v3870 = vpop.f32.mrb[0].mxu0
        %3871 = vmatprep.mubr.f32.mxu0 0.0
        %3872 = vmatmul.mubr.f32.gmra.mrb[0].mxu0 %v3488
        %v3873 = vpop.f32.mrb[0].mxu0
        %v3874 = vadd.f32 %v3515, %v3873
        %v3875 = vpop.f32.mrb[0].mxu0
        %3876 = vmatprep.mubr.f32.mxu0 0.0
        %3877 = vmatmul.mubr.f32.gmra.mrb[0].mxu0 %v3489
        %v3878 = vpop.f32.mrb[0].mxu0
        %v3879 = vadd.f32 %v3515, %v3878
        %v3880 = vpop.f32.mrb[0].mxu0
        %3881 = vmatprep.mubr.f32.mxu0 0.0
        %3882 = vmatmul.mubr.f32.gmra.mrb[0].mxu0 %v3490
        %v3883 = vpop.f32.mrb[0].mxu0
        %v3884 = vadd.f32 %v3515, %v3883
        %v3885 = vpop.f32.mrb[0].mxu0
        %3886 = vmatprep.mubr.f32.mxu0 0.0
        %3887 = vmatmul.mubr.f32.gmra.mrb[0].mxu0 %v3491
        %v3888 = vpop.f32.mrb[0].mxu0
        %v3889 = vadd.f32 %v3515, %v3888
        %v3890 = vpop.f32.mrb[0].mxu0
        %3891 = vmatprep.mubr.f32.mxu0 0.0
        %3892 = vmatmul.mubr.f32.gmra.mrb[0].mxu0 %v3492
        %v3893 = vpop.f32.mrb[0].mxu0
        %v3894 = vadd.f32 %v3515, %v3893
        %v3895 = vpop.f32.mrb[0].mxu0
        %3896 = vmatprep.mubr.f32.mxu0 0.0
        %3897 = vmatmul.mubr.f32.gmra.mrb[0].mxu0 %v3493
        %v3898 = vpop.f32.mrb[0].mxu0
        %v3899 = vadd.f32 %v3515, %v3898
        %v3900 = vpop.f32.mrb[0].mxu0
        %3901 = vdwg.mxu0
        %v3902 = vmax.f32 %v3584, 0.0
        %v3903 = vmax.f32 %v3589, 0.0
        %v3904 = vmax.f32 %v3594, 0.0
        %v3905 = vmax.f32 %v3599, 0.0
        %v3906 = vmax.f32 %v3604, 0.0
        %v3907 = vmax.f32 %v3609, 0.0
        %v3908 = vmax.f32 %v3614, 0.0
        %v3909 = vmax.f32 %v3619, 0.0
        %v3910 = vmax.f32 %v3624, 0.0
        %v3911 = vmax.f32 %v3629, 0.0
        %v3912 = vmax.f32 %v3634, 0.0
        %v3913 = vmax.f32 %v3639, 0.0
        %v3914 = vmax.f32 %v3644, 0.0
        %v3915 = vmax.f32 %v3649, 0.0
        %v3916 = vmax.f32 %v3654, 0.0
        %v3917 = vmax.f32 %v3659, 0.0
        %v3918 = vmax.f32 %v3664, 0.0
        %v3919 = vmax.f32 %v3669, 0.0
        %v3920 = vmax.f32 %v3674, 0.0
        %v3921 = vmax.f32 %v3679, 0.0
        %v3922 = vmax.f32 %v3684, 0.0
        %v3923 = vmax.f32 %v3689, 0.0
        %v3924 = vmax.f32 %v3694, 0.0
        %v3925 = vmax.f32 %v3699, 0.0
        %v3926 = vmax.f32 %v3704, 0.0
        %v3927 = vmax.f32 %v3709, 0.0
        %v3928 = vmax.f32 %v3714, 0.0
        %v3929 = vmax.f32 %v3719, 0.0
        %v3930 = vmax.f32 %v3724, 0.0
        %v3931 = vmax.f32 %v3729, 0.0
        %v3932 = vmax.f32 %v3734, 0.0
        %v3933 = vmax.f32 %v3739, 0.0
        %v3934 = vmax.f32 %v3744, 0.0
        %v3935 = vmax.f32 %v3749, 0.0
        %v3936 = vmax.f32 %v3754, 0.0
        %v3937 = vmax.f32 %v3759, 0.0
        %v3938 = vmax.f32 %v3764, 0.0
        %v3939 = vmax.f32 %v3769, 0.0
        %v3940 = vmax.f32 %v3774, 0.0
        %v3941 = vmax.f32 %v3779, 0.0
        %v3942 = vmax.f32 %v3784, 0.0
        %v3943 = vmax.f32 %v3789, 0.0
        %v3944 = vmax.f32 %v3794, 0.0
        %v3945 = vmax.f32 %v3799, 0.0
        %v3946 = vmax.f32 %v3804, 0.0
        %v3947 = vmax.f32 %v3809, 0.0
        %v3948 = vmax.f32 %v3814, 0.0
        %v3949 = vmax.f32 %v3819, 0.0
        %v3950 = vmax.f32 %v3824, 0.0
        %v3951 = vmax.f32 %v3829, 0.0
        %v3952 = vmax.f32 %v3834, 0.0
        %v3953 = vmax.f32 %v3839, 0.0
        %v3954 = vmax.f32 %v3844, 0.0
        %v3955 = vmax.f32 %v3849, 0.0
        %v3956 = vmax.f32 %v3854, 0.0
        %v3957 = vmax.f32 %v3859, 0.0
        %v3958 = vmax.f32 %v3864, 0.0
        %v3959 = vmax.f32 %v3869, 0.0
        %v3960 = vmax.f32 %v3874, 0.0
        %v3961 = vmax.f32 %v3879, 0.0
        %v3962 = vmax.f32 %v3884, 0.0
        %v3963 = vmax.f32 %v3889, 0.0
        %v3964 = vmax.f32 %v3894, 0.0
        %v3965 = vmax.f32 %v3899, 0.0
        %v3966 = vld [vmem:[%s9] sm:$0x1]
        %v3967 = vld [vmem:[#allocation2] sm:$0x1]
        %3969 = vset.pattern.permute.xlu0 0
        %3970 = vperm.xlu0 %3969, %v3967
        %v3971 = vpop.permute.xlu0 %3970
        %v3973 = vlaneseq
        %v3974 = vshrl.u32 %v3973, 7
        %v3975 = vsub.s32 0, %v3974
        %v3976 = vrot.slane %v3971, %v3975
        %vm3977 = vcmask 523264
        %v3979 = vsel %vm3977, %v3966, 0
        %v3982 = vsel %vm3977, %v3902, 0
        %v3985 = vsel %vm3977, %v3903, 0
        %v3988 = vsel %vm3977, %v3904, 0
        %v3991 = vsel %vm3977, %v3905, 0
        %v3994 = vsel %vm3977, %v3906, 0
        %v3997 = vsel %vm3977, %v3907, 0
        %v4000 = vsel %vm3977, %v3908, 0
        %v4003 = vsel %vm3977, %v3909, 0
        %v4006 = vsel %vm3977, %v3910, 0
        %v4009 = vsel %vm3977, %v3911, 0
        %v4012 = vsel %vm3977, %v3912, 0
        %v4015 = vsel %vm3977, %v3913, 0
        %v4018 = vsel %vm3977, %v3914, 0
        %v4021 = vsel %vm3977, %v3915, 0
        %v4024 = vsel %vm3977, %v3916, 0
        %v4027 = vsel %vm3977, %v3917, 0
        %v4030 = vsel %vm3977, %v3918, 0
        %v4033 = vsel %vm3977, %v3919, 0
        %v4036 = vsel %vm3977, %v3920, 0
        %v4039 = vsel %vm3977, %v3921, 0
        %v4042 = vsel %vm3977, %v3922, 0
        %v4045 = vsel %vm3977, %v3923, 0
        %v4048 = vsel %vm3977, %v3924, 0
        %v4051 = vsel %vm3977, %v3925, 0
        %v4054 = vsel %vm3977, %v3926, 0
        %v4057 = vsel %vm3977, %v3927, 0
        %v4060 = vsel %vm3977, %v3928, 0
        %v4063 = vsel %vm3977, %v3929, 0
        %v4066 = vsel %vm3977, %v3930, 0
        %v4069 = vsel %vm3977, %v3931, 0
        %v4072 = vsel %vm3977, %v3932, 0
        %v4075 = vsel %vm3977, %v3933, 0
        %v4078 = vsel %vm3977, %v3934, 0
        %v4081 = vsel %vm3977, %v3935, 0
        %v4084 = vsel %vm3977, %v3936, 0
        %v4087 = vsel %vm3977, %v3937, 0
        %v4090 = vsel %vm3977, %v3938, 0
        %v4093 = vsel %vm3977, %v3939, 0
        %v4096 = vsel %vm3977, %v3940, 0
        %v4099 = vsel %vm3977, %v3941, 0
        %v4102 = vsel %vm3977, %v3942, 0
        %v4105 = vsel %vm3977, %v3943, 0
        %v4108 = vsel %vm3977, %v3944, 0
        %v4111 = vsel %vm3977, %v3945, 0
        %v4114 = vsel %vm3977, %v3946, 0
        %v4117 = vsel %vm3977, %v3947, 0
        %v4120 = vsel %vm3977, %v3948, 0
        %v4123 = vsel %vm3977, %v3949, 0
        %v4126 = vsel %vm3977, %v3950, 0
        %v4129 = vsel %vm3977, %v3951, 0
        %v4132 = vsel %vm3977, %v3952, 0
        %v4135 = vsel %vm3977, %v3953, 0
        %v4138 = vsel %vm3977, %v3954, 0
        %v4141 = vsel %vm3977, %v3955, 0
        %v4144 = vsel %vm3977, %v3956, 0
        %v4147 = vsel %vm3977, %v3957, 0
        %v4150 = vsel %vm3977, %v3958, 0
        %v4153 = vsel %vm3977, %v3959, 0
        %v4156 = vsel %vm3977, %v3960, 0
        %v4159 = vsel %vm3977, %v3961, 0
        %v4162 = vsel %vm3977, %v3962, 0
        %v4165 = vsel %vm3977, %v3963, 0
        %v4168 = vsel %vm3977, %v3964, 0
        %v4171 = vsel %vm3977, %v3965, 0
        %4173 = vmatprep.subr.mxu0 0.0
        %4174 = vmatpush1.xpose.msra.mxu0 %v3982
        %4175 = vmatprep.subr.mxu0 0.0
        %4176 = vmatpush1.xpose.msra.mxu0 %v3985
        %4177 = vmatprep.subr.mxu0 0.0
        %4178 = vmatpush1.xpose.msra.mxu0 %v3988
        %4179 = vmatprep.subr.mxu0 0.0
        %4180 = vmatpush1.xpose.msra.mxu0 %v3991
        %4181 = vmatprep.subr.mxu0 0.0
        %4182 = vmatpush1.xpose.msra.mxu0 %v3994
        %4183 = vmatprep.subr.mxu0 0.0
        %4184 = vmatpush1.xpose.msra.mxu0 %v3997
        %4185 = vmatprep.subr.mxu0 0.0
        %4186 = vmatpush1.xpose.msra.mxu0 %v4000
        %4187 = vmatprep.subr.mxu0 0.0
        %4188 = vmatpush1.xpose.msra.mxu0 %v4003
        %4189 = vmatprep.subr.mxu0 0.0
        %4190 = vmatpush1.xpose.msra.mxu0 %v4006
        %4191 = vmatprep.subr.mxu0 0.0
        %4192 = vmatpush1.xpose.msra.mxu0 %v4009
        %4193 = vmatprep.subr.mxu0 0.0
        %4194 = vmatpush1.xpose.msra.mxu0 %v4012
        %4195 = vmatprep.subr.mxu0 0.0
        %4196 = vmatpush1.xpose.msra.mxu0 %v4015
        %4197 = vmatprep.subr.mxu0 0.0
        %4198 = vmatpush1.xpose.msra.mxu0 %v4018
        %4199 = vmatprep.subr.mxu0 0.0
        %4200 = vmatpush1.xpose.msra.mxu0 %v4021
        %4201 = vmatprep.subr.mxu0 0.0
        %4202 = vmatpush1.xpose.msra.mxu0 %v4024
        %4203 = vmatprep.subr.mxu0 0.0
        %4204 = vmatpush1.xpose.msra.mxu0 %v4027
        %4205 = vmatprep.subr.mxu0 0.0
        %4206 = vmatpush1.xpose.msra.mxu0 %v4030
        %4207 = vmatprep.subr.mxu0 0.0
        %4208 = vmatpush1.xpose.msra.mxu0 %v4033
        %4209 = vmatprep.subr.mxu0 0.0
        %4210 = vmatpush1.xpose.msra.mxu0 %v4036
        %4211 = vmatprep.subr.mxu0 0.0
        %4212 = vmatpush1.xpose.msra.mxu0 %v4039
        %4213 = vmatprep.subr.mxu0 0.0
        %4214 = vmatpush1.xpose.msra.mxu0 %v4042
        %4215 = vmatprep.subr.mxu0 0.0
        %4216 = vmatpush1.xpose.msra.mxu0 %v4045
        %4217 = vmatprep.subr.mxu0 0.0
        %4218 = vmatpush1.xpose.msra.mxu0 %v4048
        %4219 = vmatprep.subr.mxu0 0.0
        %4220 = vmatpush1.xpose.msra.mxu0 %v4051
        %4221 = vmatprep.subr.mxu0 0.0
        %4222 = vmatpush1.xpose.msra.mxu0 %v4054
        %4223 = vmatprep.subr.mxu0 0.0
        %4224 = vmatpush1.xpose.msra.mxu0 %v4057
        %4225 = vmatprep.subr.mxu0 0.0
        %4226 = vmatpush1.xpose.msra.mxu0 %v4060
        %4227 = vmatprep.subr.mxu0 0.0
        %4228 = vmatpush1.xpose.msra.mxu0 %v4063
        %4229 = vmatprep.subr.mxu0 0.0
        %4230 = vmatpush1.xpose.msra.mxu0 %v4066
        %4231 = vmatprep.subr.mxu0 0.0
        %4232 = vmatpush1.xpose.msra.mxu0 %v4069
        %4233 = vmatprep.subr.mxu0 0.0
        %4234 = vmatpush1.xpose.msra.mxu0 %v4072
        %4235 = vmatprep.subr.mxu0 0.0
        %4236 = vmatpush1.xpose.msra.mxu0 %v4075
        %4237 = vmatprep.mubr.f32.mxu0 0.0
        %4238 = vmatmul.mubr.f32.gmra.mrb[0].mxu0 %v3979
        %v4239 = vpop.f32.mrb[0].mxu0
        %v4240 = vadd.f32 %v3976, %v4239
        %v4241 = vpop.f32.mrb[0].mxu0
        %v4242 = vadd.f32 %v3976, %v4241
        %4243 = vdwg.mxu0
        %4244 = vmatprep.subr.mxu0 0.0
        %4245 = vmatpush1.xpose.msra.mxu0 %v4078
        %4246 = vmatprep.subr.mxu0 0.0
        %4247 = vmatpush1.xpose.msra.mxu0 %v4081
        %4248 = vmatprep.subr.mxu0 0.0
        %4249 = vmatpush1.xpose.msra.mxu0 %v4084
        %4250 = vmatprep.subr.mxu0 0.0
        %4251 = vmatpush1.xpose.msra.mxu0 %v4087
        %4252 = vmatprep.subr.mxu0 0.0
        %4253 = vmatpush1.xpose.msra.mxu0 %v4090
        %4254 = vmatprep.subr.mxu0 0.0
        %4255 = vmatpush1.xpose.msra.mxu0 %v4093
        %4256 = vmatprep.subr.mxu0 0.0
        %4257 = vmatpush1.xpose.msra.mxu0 %v4096
        %4258 = vmatprep.subr.mxu0 0.0
        %4259 = vmatpush1.xpose.msra.mxu0 %v4099
        %4260 = vmatprep.subr.mxu0 0.0
        %4261 = vmatpush1.xpose.msra.mxu0 %v4102
        %4262 = vmatprep.subr.mxu0 0.0
        %4263 = vmatpush1.xpose.msra.mxu0 %v4105
        %4264 = vmatprep.subr.mxu0 0.0
        %4265 = vmatpush1.xpose.msra.mxu0 %v4108
        %4266 = vmatprep.subr.mxu0 0.0
        %4267 = vmatpush1.xpose.msra.mxu0 %v4111
        %4268 = vmatprep.subr.mxu0 0.0
        %4269 = vmatpush1.xpose.msra.mxu0 %v4114
        %4270 = vmatprep.subr.mxu0 0.0
        %4271 = vmatpush1.xpose.msra.mxu0 %v4117
        %4272 = vmatprep.subr.mxu0 0.0
        %4273 = vmatpush1.xpose.msra.mxu0 %v4120
        %4274 = vmatprep.subr.mxu0 0.0
        %4275 = vmatpush1.xpose.msra.mxu0 %v4123
        %4276 = vmatprep.subr.mxu0 0.0
        %4277 = vmatpush1.xpose.msra.mxu0 %v4126
        %4278 = vmatprep.subr.mxu0 0.0
        %4279 = vmatpush1.xpose.msra.mxu0 %v4129
        %4280 = vmatprep.subr.mxu0 0.0
        %4281 = vmatpush1.xpose.msra.mxu0 %v4132
        %4282 = vmatprep.subr.mxu0 0.0
        %4283 = vmatpush1.xpose.msra.mxu0 %v4135
        %4284 = vmatprep.subr.mxu0 0.0
        %4285 = vmatpush1.xpose.msra.mxu0 %v4138
        %4286 = vmatprep.subr.mxu0 0.0
        %4287 = vmatpush1.xpose.msra.mxu0 %v4141
        %4288 = vmatprep.subr.mxu0 0.0
        %4289 = vmatpush1.xpose.msra.mxu0 %v4144
        %4290 = vmatprep.subr.mxu0 0.0
        %4291 = vmatpush1.xpose.msra.mxu0 %v4147
        %4292 = vmatprep.subr.mxu0 0.0
        %4293 = vmatpush1.xpose.msra.mxu0 %v4150
        %4294 = vmatprep.subr.mxu0 0.0
        %4295 = vmatpush1.xpose.msra.mxu0 %v4153
        %4296 = vmatprep.subr.mxu0 0.0
        %4297 = vmatpush1.xpose.msra.mxu0 %v4156
        %4298 = vmatprep.subr.mxu0 0.0
        %4299 = vmatpush1.xpose.msra.mxu0 %v4159
        %4300 = vmatprep.subr.mxu0 0.0
        %4301 = vmatpush1.xpose.msra.mxu0 %v4162
        %4302 = vmatprep.subr.mxu0 0.0
        %4303 = vmatpush1.xpose.msra.mxu0 %v4165
        %4304 = vmatprep.subr.mxu0 0.0
        %4305 = vmatpush1.xpose.msra.mxu0 %v4168
        %4306 = vmatprep.subr.mxu0 0.0
        %4307 = vmatpush1.xpose.msra.mxu0 %v4171
        %4308 = vmatprep.mubr.f32.mxu0 0.0
        %4309 = vmatmul.mubr.f32.gmra.mrb[0].mxu0 %v3979
        %v4310 = vpop.f32.mrb[0].mxu0
        %v4311 = vadd.f32 %v3976, %v4310
        %v4312 = vpop.f32.mrb[0].mxu0
        %v4313 = vadd.f32 %v3976, %v4312
        %4314 = vdwg.mxu0
        %v4319 = vcombine.low %v4240, %v4242
        %v4320 = vcombine.low %v4311, %v4313
        %v4322 = vunpack.c.l.s4 1966171168
        %v4323 = vunpack.c.0.s8 %v4322
        %v4324 = vlaneseq
        %v4325 = vshrl.u32 %v4324, 7
        %v4326 = vsub.s32 %v4323, %v4325
        %v4327 = vrot.slane %v4319, %v4326
        %v4329 = vunpack.c.l.s4 1966171168
        %v4330 = vunpack.c.0.s8 %v4329
        %v4331 = vlaneseq
        %v4332 = vshrl.u32 %v4331, 7
        %v4333 = vsub.s32 %v4330, %v4332
        %v4334 = vrot.slane %v4320, %v4333
        %v4335 = vcombine.low %v4327, %v4334
        %v4337 = vunpack.c.l.s4 1966171168
        %v4338 = vunpack.c.0.s8 %v4337
        %v4339 = vlaneseq
        %v4340 = vshrl.u32 %v4339, 7
        %v4341 = vsub.s32 %v4338, %v4340
        %v4342 = vrot.slane %v4335, %v4341
        %v4344 = vlaneseq
        %vm4345 = vcmp.ge.s32.totalorder %v4344, 0
        %vm4346 = vcmp.lt.s32.totalorder %v4344, 512
        %vm4347 = vmand %vm4345, %vm4346
        %4348 = vst.msk [vmem:[%s382] sm:$0xf] %vm4347, %v4342
        %s4349 = sand.u32 %s271, 1
        %s4350 = scalar_lea.sflag [#allocation4], %s4349
        %s4351 = sand.u32 %s271, 1
        %s4352 = smul.addr %s4351, 4
        %s4353 = scalar_lea.vmem [#allocation3], %s4352
        // Predicated region
        $region65: #{ann_model_forward.1} parent=63 // pred_check
          %p4354 = pneg %p281
        $region66: #{ann_model_forward.1} parent=63 // pred_check_branch
          %4356 = sbr.rel (%p4354) target = $region68
        $region67: #{ann_model_forward.1} parent=63 // pred_region
          %s4357 = smul.u32 4, %s27
          %s4359 = ssub.s32 64, 64
          %4360 = vsyncadd %s4350, %s4359
          %s4361 = smul.addr %s4357, 16
          %s4362 = scalar_lea.hbm %s11, %s4361
          %s4364 = sshll.u32 %s4353, 4
          %s4365 = int_to_ptr.vmem [resolvable:$true] %s4364
          %4367 = dma.vmem_to_hbm [thread:$0]  %s4365, 64, %s4362, %s4350
        $region68: #{ann_model_forward.1} parent=63 // pred_fallthru
          _
      $region64: #{ann_model_forward.1} parent=5 // pred_fallthru
        _
      %p4368 = scmp.le.s32.totalorder 2, %s22
      // Predicated region
      $region69: #{ann_model_forward.1} parent=5 // pred_check
        %p4369 = pneg %p4368
      $region70: #{ann_model_forward.1} parent=5 // pred_check_branch
        %4371 = sbr.rel (%p4369) target = $region72
      $region71: #{ann_model_forward.1} parent=5 // pred_region
        %s4372 = ssub.s32 %s22, 2
        // Predicated region
        $region73: #{ann_model_forward.1} parent=71 // pred_check
          %p4373 = pneg %p287
        $region74: #{ann_model_forward.1} parent=71 // pred_check_branch
          %4375 = sbr.rel (%p4373) target = $region76
        $region75: #{ann_model_forward.1} parent=71 // pred_region
          %s4376 = sand.u32 %s272, 1
          %s4377 = scalar_lea.sflag [#allocation4], %s4376
          %s4378 = sand.u32 %s272, 1
          %s4379 = smul.addr %s4378, 4
          %s4380 = scalar_lea.vmem [#allocation3], %s4379
          %4381 = dma.done %s4377, 64
        $region76: #{ann_model_forward.1} parent=71 // pred_fallthru
          _
      $region72: #{ann_model_forward.1} parent=5 // pred_fallthru
        _
    $region6: #{ann_model_forward.1} parent=1 // loop_footer
      %s26 = sadd.s32 1, %s22
    $region7: #{ann_model_forward.1} parent=1 // loop_footer_branch
      %21 = sbr.rel target = $region3
    $region8: #{ann_model_forward.1} parent=1 // loop_exit
      _
    %4382 = vsyncpa [#allocation4], 1
    %s4383 = scalar_lea.sflag [#allocation4], 1
    %4384 = vsyncpa %s4383, 1

</llo_original>
